<compile_context>
chip_gen: v7x
topology: tpu7x:2x2x1
jax: 0.10.0
libtpu: 0.0.40
codegen_flags: <defaults>
</compile_context>

<pallas_src>
import jax
import jax.numpy as jnp
from jax.experimental import pallas as pl
from jax.experimental.pallas import tpu as pltpu

# ----------------------------- configuration --------------------------------
B = 2                     # batch
IMG_C, IMG_H, IMG_W = 3, 28, 28
PATCH = 4
GRID = IMG_H // PATCH     # 7
L_IMG = GRID * GRID       # 49 spatial positions (== 7x7 of ResNet)
L_PAD = 56                # 49 padded up to a multiple of 8 (tile-aligned reshapes)
PATCH_DIM = PATCH * PATCH * IMG_C   # 48
CNN_DIM = 64              # stand-in for cnn.fc.in_features
EMBED = 32                # opt.embed_size
N_EMBEDS = 2              # opt.num_embeds  (mil = True)
WORD_DIM = 32             # opt.word_dim
VOCAB = 50
SEQ = 8                   # max sentence length
HID = EMBED // 2          # GRU hidden per direction (16)
D_H_IMG = CNN_DIM // 2    # PIENet hidden (image)
D_H_TXT = WORD_DIM // 2   # PIENet hidden (text)
LN_EPS = 1e-5
NEG_INF = -1e30           # finite mask value (avoids NaN from exp(-inf)/0)
SLAB_W = 128              # packed output lane width (one full vreg row)


def _mm_bf16(a, b):
    """2-D matmul with bf16 operands, f32 accumulation (native MXU rate)."""
    return jnp.dot(a.astype(jnp.bfloat16), b.astype(jnp.bfloat16),
                   preferred_element_type=jnp.float32)


# --------------------------- shared PIE + l2norm ------------------------------
def _pie_l2norm(x2d, x3d, out_in, w1_t, w2, pfc_w, pfc_b, gamma, beta, pad_mask):
    """PIENet (MultiHeadSelfAttention + fc + residual + LayerNorm) fused with l2norm.

    x2d: (b*l, d_in) flattened rows, x3d: (b, l, d_in) tile-aligned view of the same data.
    Attention is kept in lane-dense (b, n_head, l) layout; the wrapper transposes back to
    the PyTorch (b, l, n_head) shape.
    """
    b, l, _ = x3d.shape
    n_head, d_h = w2.shape
    # attn_logits = w_2(tanh(w_1(x)))   — w_1 as one 2-D matmul over b*l rows
    h2d = jnp.tanh(_mm_bf16(x2d, w1_t))                          # (b*l, d_h)
    h3d = h2d.reshape(b, l, d_h)
    w2b = jnp.broadcast_to(w2[None], (b, n_head, d_h))
    logits = jnp.einsum('bnh,blh->bnl', w2b, h3d,
                        preferred_element_type=jnp.float32)      # (b, n, l) lane-dense
    logits = jnp.where(pad_mask, NEG_INF, logits)                # (b, 1, l) mask
    # softmax over the sequence axis (== lane axis in this layout)
    m = jnp.max(logits, axis=-1, keepdims=True)
    e = jnp.exp(logits - m)
    attn = e * pl.reciprocal(jnp.sum(e, axis=-1, keepdims=True), approx=True)
    # pooled = attn @ x  -> (b, n, d_in)
    pooled = jnp.einsum('bnl,bld->bnd', attn, x3d,
                        preferred_element_type=jnp.float32)
    # residual = sigmoid(fc(pooled))   (dropout = identity in eval)
    resid = jax.nn.sigmoid(
        jnp.einsum('bnd,od->bno', pooled, pfc_w,
                   preferred_element_type=jnp.float32) + pfc_b[None])
    # out = LayerNorm(out.unsqueeze(1).repeat(1, n_head, 1) + residual)
    out = out_in[:, None, :] + resid                             # (b, n, d_out)
    mu = jnp.mean(out, axis=-1, keepdims=True)
    var = jnp.mean((out - mu) ** 2, axis=-1, keepdims=True)
    ln = (out - mu) * jax.lax.rsqrt(var + LN_EPS)
    ln = ln * gamma[None] + beta[None]
    # l2norm (applied right after pie_net in the encoders); tiny eps for robustness
    emb = ln * jax.lax.rsqrt(jnp.sum(ln * ln, axis=-1, keepdims=True) + 1e-12)
    return emb, attn, resid


# ------------------------------ fused kernel ---------------------------------
def pvse_kernel(
        # data
        patches_ref,          # (B*L_PAD, PATCH_DIM) f32
        ids_ref,              # (2*B*SEQ, 1) i32: [original | time-reversed] token ids
        len_ref,              # (B, 1) i32
        # image-branch weights
        wp_t_ref, wfc_t_ref, bfc_ref,
        iw1_t_ref, iw2_ref, ifc_w_ref, ifc_b_ref, ig_ref, ib_ref,
        # text-branch weights
        embed_ref, wih_ref, bih_ref, whh_ref, bhh_ref,
        tw1_t_ref, tw2_ref, tfc_w_ref, tfc_b_ref, tg_ref, tb_ref,
        # packed output
        out_ref):             # (2, B, N_EMBEDS, SLAB_W) f32
    H = HID

    # ============================= image branch ==============================
    # Stand-in CNN: one 2-D matmul over B*L_PAD patch rows (pad rows are all-zero).
    feat2d = _mm_bf16(patches_ref[...], wp_t_ref[...])           # (B*L_PAD, CNN_DIM)
    feat3d = feat2d.reshape(B, L_PAD, CNN_DIM)                   # tile-aligned split
    # AdaptiveAvgPool2d(1): padded rows are exactly zero (patch embed has no bias),
    # so sum over 56 rows / 49 equals the mean over the 49 real positions.
    pooled = jnp.sum(feat3d, axis=1) * (1.0 / L_IMG)             # (B, CNN_DIM)
    out_fc = jnp.dot(pooled, wfc_t_ref[...],
                     preferred_element_type=jnp.float32) + bfc_ref[...]
    pos_i = jax.lax.broadcasted_iota(jnp.int32, (B, 1, L_PAD), 2)
    img_mask = pos_i >= L_IMG                                    # mask the 7 pad lanes
    i_emb, i_attn, i_res = _pie_l2norm(
        feat2d, feat3d, out_fc, iw1_t_ref[...], iw2_ref[...],
        ifc_w_ref[...], ifc_b_ref[...], ig_ref[...], ib_ref[...], img_mask)

    # ============================== text branch ==============================
    # Word-embedding gather (original + time-reversed order) via one one-hot matmul
    # against the VMEM-resident table.
    ids = ids_ref[...]                                           # (2*B*SEQ, 1)
    vpos = jax.lax.broadcasted_iota(jnp.int32, (2 * B * SEQ, VOCAB), 1)
    onehot = (vpos == ids).astype(jnp.float32)                   # (2*B*SEQ, VOCAB)
    wemb_all = jnp.dot(onehot, embed_ref[...],
                       preferred_element_type=jnp.float32)       # (2*B*SEQ, WORD_DIM)
    wemb2d = wemb_all[0:B * SEQ, :]                              # original time order
    wemb_rev = wemb_all[B * SEQ:2 * B * SEQ, :]                  # reversed time order
    wemb3d = wemb2d.reshape(B, SEQ, WORD_DIM)

    # Input-side gates for BOTH directions in one matmul; columns are pre-interleaved
    # [r_f | r_b | z_f | z_b | n_f | n_b] and the backward columns already read the
    # time-reversed embeddings, so the per-step loop needs no shuffles at all.
    x_cat = jnp.concatenate([wemb2d, wemb_rev], axis=-1)         # (B*SEQ, 2*WORD_DIM)
    gi = jnp.dot(x_cat, wih_ref[...],
                 preferred_element_type=jnp.float32) + bih_ref[...]   # (B*SEQ, 6H) f32
    gi3 = gi.reshape(B, SEQ, 6 * H)

    lengths = len_ref[...]                                       # (B, 1)
    # validity mask per step for the packed (B, 2H) state:
    # cols [0:H] are forward (valid while t < len), cols [H:2H] backward (SEQ-1-t < len).
    tt = jax.lax.broadcasted_iota(jnp.int32, (B, SEQ, 2 * H), 1)
    cc = jax.lax.broadcasted_iota(jnp.int32, (B, SEQ, 2 * H), 2)
    eff_t = jnp.where(cc < H, tt, SEQ - 1 - tt)
    vmask = eff_t < lengths[:, :, None]                          # (B, SEQ, 2H) bool

    whh = whh_ref[...]                                           # (2H, 6H) interleaved
    bhh = bhh_ref[...]                                           # (1, 6H)
    h = jnp.zeros((B, 2 * H), jnp.float32)                       # [h_fwd | h_bwd]
    for t in range(SEQ):                                         # static unroll (SEQ small)
        g = gi3[:, t, :]                                         # (B, 6H)
        gh = jnp.dot(h, whh, preferred_element_type=jnp.float32) + bhh
        rz = jax.nn.sigmoid(g[:, 0:4 * H] + gh[:, 0:4 * H])      # r,z both dirs, one pass
        r = rz[:, 0:2 * H]
        z = rz[:, 2 * H:4 * H]
        n = jnp.tanh(g[:, 4 * H:6 * H] + r * gh[:, 4 * H:6 * H])
        h = jnp.where(vmask[:, t, :], (1.0 - z) * n + z * h, h)  # packed-seq freeze
    rnn_out = h                                                  # == h_n.permute(1,0,2).view(B, 2H)

    pos_t = jax.lax.broadcasted_iota(jnp.int32, (B, 1, SEQ), 2)
    txt_mask = pos_t >= lengths[:, :, None]                      # (B, 1, SEQ)
    t_emb, t_attn, t_res = _pie_l2norm(
        wemb2d, wemb3d, rnn_out, tw1_t_ref[...], tw2_ref[...],
        tfc_w_ref[...], tfc_b_ref[...], tg_ref[...], tb_ref[...], txt_mask)

    # ===================== packed lane-dense output stores ====================
    # Each branch writes one full-128-lane slab: [emb(32) | resid(32) | attn | zero pad].
    img_slab = jnp.concatenate(
        [i_emb, i_res, i_attn,
         jnp.zeros((B, N_EMBEDS, SLAB_W - 2 * EMBED - L_PAD), jnp.float32)], axis=-1)
    txt_slab = jnp.concatenate(
        [t_emb, t_res, t_attn,
         jnp.zeros((B, N_EMBEDS, SLAB_W - 2 * EMBED - SEQ), jnp.float32)], axis=-1)
    out_ref[0] = img_slab
    out_ref[1] = txt_slab


# ----------------------------- pallas_call wrapper ----------------------------
def _vmem_specs(n):
    return [pl.BlockSpec(memory_space=pltpu.MemorySpace.VMEM) for _ in range(n)]


def run_pvse(patches2d, ids_cat, len2d, weights):
    return pl.pallas_call(
        pvse_kernel,
        out_shape=jax.ShapeDtypeStruct((2, B, N_EMBEDS, SLAB_W), jnp.float32),
        in_specs=_vmem_specs(3 + len(weights)),
        out_specs=pl.BlockSpec(memory_space=pltpu.MemorySpace.VMEM),
    )(patches2d, ids_cat, len2d, *weights)


# ----------------------------- parameter init --------------------------------
def xavier(key, shape):
    fan_out, fan_in = shape[0], shape[1]
    a = (6.0 / (fan_in + fan_out)) ** 0.5
    return jax.random.uniform(key, shape, jnp.float32, -a, a)


def init_params(key):
    ks = jax.random.split(key, 16)
    p = {}
    # stand-in CNN (patch embed) + image fc
    p['wp'] = xavier(ks[0], (CNN_DIM, PATCH_DIM))
    p['img_fc_w'] = xavier(ks[1], (EMBED, CNN_DIM))
    p['img_fc_b'] = jnp.zeros((1, EMBED), jnp.float32)
    # image PIENet
    p['img_pie_w1'] = xavier(ks[2], (D_H_IMG, CNN_DIM))
    p['img_pie_w2'] = xavier(ks[3], (N_EMBEDS, D_H_IMG))
    p['img_pie_fc_w'] = xavier(ks[4], (EMBED, CNN_DIM))
    p['img_pie_fc_b'] = jnp.zeros((1, EMBED), jnp.float32)
    p['img_pie_g'] = jnp.ones((1, EMBED), jnp.float32)
    p['img_pie_b'] = jnp.zeros((1, EMBED), jnp.float32)
    # word embedding
    p['embed'] = xavier(ks[5], (VOCAB, WORD_DIM))
    # bidirectional GRU  (gate order r, z, n — PyTorch convention)
    p['gru_wih_f'] = xavier(ks[6], (3 * HID, WORD_DIM))
    p['gru_whh_f'] = xavier(ks[7], (3 * HID, HID))
    p['gru_bih_f'] = jnp.zeros((1, 3 * HID), jnp.float32)
    p['gru_bhh_f'] = jnp.zeros((1, 3 * HID), jnp.float32)
    p['gru_wih_b'] = xavier(ks[8], (3 * HID, WORD_DIM))
    p['gru_whh_b'] = xavier(ks[9], (3 * HID, HID))
    p['gru_bih_b'] = jnp.zeros((1, 3 * HID), jnp.float32)
    p['gru_bhh_b'] = jnp.zeros((1, 3 * HID), jnp.float32)
    # text PIENet
    p['txt_pie_w1'] = xavier(ks[10], (D_H_TXT, WORD_DIM))
    p['txt_pie_w2'] = xavier(ks[11], (N_EMBEDS, D_H_TXT))
    p['txt_pie_fc_w'] = xavier(ks[12], (EMBED, WORD_DIM))
    p['txt_pie_fc_b'] = jnp.zeros((1, EMBED), jnp.float32)
    p['txt_pie_g'] = jnp.ones((1, EMBED), jnp.float32)
    p['txt_pie_b'] = jnp.zeros((1, EMBED), jnp.float32)
    return p


def prepare_params(P):
    """One-time fusion of PyTorch-layout parameters into kernel-ready operands.
    Hoisted out of the per-call forward path (run once, not per forward)."""
    H, D = HID, WORD_DIM
    # Bidirectional GRU with interleaved gate columns [r_f | r_b | z_f | z_b | n_f | n_b].
    # Input weights act on the concatenated [wemb(t) | wemb(SEQ-1-t)] row, so forward gates
    # only read the first D columns and backward gates only the second D.
    wih_big = jnp.zeros((2 * D, 6 * H), jnp.float32)
    whh_big = jnp.zeros((2 * H, 6 * H), jnp.float32)
    for g in range(3):                                    # r, z, n
        c_f = slice((2 * g) * H, (2 * g + 1) * H)
        c_b = slice((2 * g + 1) * H, (2 * g + 2) * H)
        rsl = slice(g * H, (g + 1) * H)
        wih_big = wih_big.at[0:D, c_f].set(P['gru_wih_f'][rsl].T)
        wih_big = wih_big.at[D:2 * D, c_b].set(P['gru_wih_b'][rsl].T)
        whh_big = whh_big.at[0:H, c_f].set(P['gru_whh_f'][rsl].T)
        whh_big = whh_big.at[H:2 * H, c_b].set(P['gru_whh_b'][rsl].T)

    def ilv_bias(b_f, b_b):
        parts = []
        for g in range(3):
            parts.append(b_f[:, g * H:(g + 1) * H])
            parts.append(b_b[:, g * H:(g + 1) * H])
        return jnp.concatenate(parts, axis=1)

    bih_big = ilv_bias(P['gru_bih_f'], P['gru_bih_b'])
    bhh_big = ilv_bias(P['gru_bhh_f'], P['gru_bhh_b'])

    weights = (
        # image branch
        P['wp'].T, P['img_fc_w'].T, P['img_fc_b'],
        P['img_pie_w1'].T, P['img_pie_w2'], P['img_pie_fc_w'], P['img_pie_fc_b'],
        P['img_pie_g'], P['img_pie_b'],
        # text branch
        P['embed'], wih_big, bih_big, whh_big, bhh_big,
        P['txt_pie_w1'].T, P['txt_pie_w2'], P['txt_pie_fc_w'], P['txt_pie_fc_b'],
        P['txt_pie_g'], P['txt_pie_b'],
    )
    return tuple(jnp.asarray(w) for w in weights)


# ----------------------------- PVSE forward ----------------------------------
def pvse_forward(images, sentences, lengths, weights):
    # ------------------- EncoderImage input plumbing -------------------
    # NCHW -> (B, 49, patch*patch*C) patch rows, padded to 56 rows, flattened to 2-D.
    x = jnp.transpose(images, (0, 2, 3, 1))                      # NHWC
    x = x.reshape(B, GRID, PATCH, GRID, PATCH, IMG_C)
    x = jnp.transpose(x, (0, 1, 3, 2, 4, 5)).reshape(B, L_IMG, PATCH_DIM)
    x = jnp.pad(x, ((0, 0), (0, L_PAD - L_IMG), (0, 0)))
    patches2d = x.reshape(B * L_PAD, PATCH_DIM)

    # ------------------- EncoderText input plumbing --------------------
    ids = sentences.astype(jnp.int32)
    ids_cat = jnp.concatenate([ids, ids[:, ::-1]], axis=0).reshape(2 * B * SEQ, 1)
    len2d = lengths.reshape(B, 1).astype(jnp.int32)

    # ------------------- single fused kernel ---------------------------
    slab = run_pvse(patches2d, ids_cat, len2d, weights)          # (2, B, N_EMBEDS, 128)

    img = slab[0]
    txt = slab[1]
    img_emb = img[..., 0:EMBED]
    img_res = img[..., EMBED:2 * EMBED]
    img_attn = jnp.transpose(img[..., 2 * EMBED:2 * EMBED + L_IMG], (0, 2, 1))
    txt_emb = txt[..., 0:EMBED]
    txt_res = txt[..., EMBED:2 * EMBED]
    txt_attn = jnp.transpose(txt[..., 2 * EMBED:2 * EMBED + SEQ], (0, 2, 1))
    return img_emb, txt_emb, img_attn, txt_attn, img_res, txt_res


# --------------------------------- main ---------------------------------------
if __name__ == "__main__":
    key = jax.random.PRNGKey(0)
    k_img, k_txt, k_par = jax.random.split(key, 3)

    images = jax.random.normal(k_img, (B, IMG_C, IMG_H, IMG_W), jnp.float32)
    sentences = jax.random.randint(k_txt, (B, SEQ), 1, VOCAB, jnp.int32)
    lengths = jnp.array([SEQ, 5], jnp.int32)        # sorted descending (packed seq)

    params = init_params(k_par)
    weights = prepare_params(params)                # one-time weight fusion (hoisted)

    fwd = jax.jit(pvse_forward)
    outs = jax.block_until_ready(fwd(images, sentences, lengths, weights))

    img_emb, txt_emb, img_attn, txt_attn, img_res, txt_res = outs
    assert img_emb.shape == (B, N_EMBEDS, EMBED)
    assert txt_emb.shape == (B, N_EMBEDS, EMBED)
    assert img_attn.shape == (B, L_IMG, N_EMBEDS)
    assert txt_attn.shape == (B, SEQ, N_EMBEDS)
    assert img_res.shape == (B, N_EMBEDS, EMBED)
    assert txt_res.shape == (B, N_EMBEDS, EMBED)
    assert bool(jnp.all(jnp.isfinite(img_emb))) and bool(jnp.all(jnp.isfinite(txt_emb)))
    assert bool(jnp.all(jnp.isfinite(img_attn))) and bool(jnp.all(jnp.isfinite(txt_attn)))
    print("KERNEL_OK")
</pallas_src>

<mosaic_0001>
module attributes {stable_mosaic.version = 11 : i64} {
  func.func @pvse_kernel(%arg0: memref<112x48xf32, #tpu.memory_space<vmem>>, %arg1: memref<32x1xi32, #tpu.memory_space<vmem>>, %arg2: memref<2x1xi32, #tpu.memory_space<vmem>>, %arg3: memref<48x64xf32, #tpu.memory_space<vmem>>, %arg4: memref<64x32xf32, #tpu.memory_space<vmem>>, %arg5: memref<1x32xf32, #tpu.memory_space<vmem>>, %arg6: memref<64x32xf32, #tpu.memory_space<vmem>>, %arg7: memref<2x32xf32, #tpu.memory_space<vmem>>, %arg8: memref<32x64xf32, #tpu.memory_space<vmem>>, %arg9: memref<1x32xf32, #tpu.memory_space<vmem>>, %arg10: memref<1x32xf32, #tpu.memory_space<vmem>>, %arg11: memref<1x32xf32, #tpu.memory_space<vmem>>, %arg12: memref<50x32xf32, #tpu.memory_space<vmem>>, %arg13: memref<64x96xf32, #tpu.memory_space<vmem>>, %arg14: memref<1x96xf32, #tpu.memory_space<vmem>>, %arg15: memref<32x96xf32, #tpu.memory_space<vmem>>, %arg16: memref<1x96xf32, #tpu.memory_space<vmem>>, %arg17: memref<32x16xf32, #tpu.memory_space<vmem>>, %arg18: memref<2x16xf32, #tpu.memory_space<vmem>>, %arg19: memref<32x32xf32, #tpu.memory_space<vmem>>, %arg20: memref<1x32xf32, #tpu.memory_space<vmem>>, %arg21: memref<1x32xf32, #tpu.memory_space<vmem>>, %arg22: memref<1x32xf32, #tpu.memory_space<vmem>>, %arg23: memref<2x2x2x128xf32, #tpu.memory_space<vmem>>) attributes {dimension_semantics = [], scalar_prefetch = 0 : i64, scratch_operands = 0 : i64, tpu.core_type = #tpu.core_type<tc>} {
    %c0 = arith.constant 0 : index
    %c0_0 = arith.constant 0 : index
    %0 = vector.load %arg0[%c0, %c0_0] : memref<112x48xf32, #tpu.memory_space<vmem>>, vector<112x48xf32>
    %c0_1 = arith.constant 0 : index
    %c0_2 = arith.constant 0 : index
    %1 = vector.load %arg3[%c0_1, %c0_2] : memref<48x64xf32, #tpu.memory_space<vmem>>, vector<48x64xf32>
    %2 = arith.truncf %0 : vector<112x48xf32> to vector<112x48xbf16>
    %3 = arith.truncf %1 : vector<48x64xf32> to vector<48x64xbf16>
    %cst = arith.constant dense<0.000000e+00> : vector<112x64xf32>
    %4 = tpu.matmul %2, %3, %cst {dimension_numbers = #tpu.dot_dimension_numbers<[1], [0], [0], [1], [0, 0, 1, 1], [], []>} : vector<112x48xbf16>, vector<48x64xbf16>, vector<112x64xf32> -> vector<112x64xf32>
    %5 = vector.shape_cast %4 : vector<112x64xf32> to vector<2x56x64xf32>
    %cst_3 = arith.constant dense<0.000000e+00> : vector<2x64xf32>
    %6 = vector.multi_reduction <add>, %5, %cst_3 [1] : vector<2x56x64xf32> to vector<2x64xf32>
    %cst_4 = arith.constant 0.0204081628 : f32
    %7 = vector.broadcast %cst_4 : f32 to vector<2x64xf32>
    %8 = arith.mulf %6, %7 : vector<2x64xf32>
    %c0_5 = arith.constant 0 : index
    %c0_6 = arith.constant 0 : index
    %9 = vector.load %arg4[%c0_5, %c0_6] : memref<64x32xf32, #tpu.memory_space<vmem>>, vector<64x32xf32>
    %cst_7 = arith.constant dense<0.000000e+00> : vector<2x32xf32>
    %10 = tpu.matmul %8, %9, %cst_7 {dimension_numbers = #tpu.dot_dimension_numbers<[1], [0], [0], [1], [0, 0, 1, 1], [], []>} : vector<2x64xf32>, vector<64x32xf32>, vector<2x32xf32> -> vector<2x32xf32>
    %c0_8 = arith.constant 0 : index
    %c0_9 = arith.constant 0 : index
    %11 = vector.load %arg5[%c0_8, %c0_9] : memref<1x32xf32, #tpu.memory_space<vmem>>, vector<1x32xf32>
    %12 = vector.broadcast %11 : vector<1x32xf32> to vector<2x32xf32>
    %13 = arith.addf %10, %12 : vector<2x32xf32>
    %14 = tpu.iota {dimensions = array<i32: 2>} : vector<2x1x56xi32>
    %c49_i32 = arith.constant 49 : i32
    %15 = vector.broadcast %c49_i32 : i32 to vector<2x1x56xi32>
    %16 = arith.cmpi sge, %14, %15 : vector<2x1x56xi32>
    %c0_10 = arith.constant 0 : index
    %c0_11 = arith.constant 0 : index
    %17 = vector.load %arg6[%c0_10, %c0_11] : memref<64x32xf32, #tpu.memory_space<vmem>>, vector<64x32xf32>
    %c0_12 = arith.constant 0 : index
    %c0_13 = arith.constant 0 : index
    %18 = vector.load %arg7[%c0_12, %c0_13] : memref<2x32xf32, #tpu.memory_space<vmem>>, vector<2x32xf32>
    %c0_14 = arith.constant 0 : index
    %c0_15 = arith.constant 0 : index
    %19 = vector.load %arg8[%c0_14, %c0_15] : memref<32x64xf32, #tpu.memory_space<vmem>>, vector<32x64xf32>
    %c0_16 = arith.constant 0 : index
    %c0_17 = arith.constant 0 : index
    %20 = vector.load %arg9[%c0_16, %c0_17] : memref<1x32xf32, #tpu.memory_space<vmem>>, vector<1x32xf32>
    %c0_18 = arith.constant 0 : index
    %c0_19 = arith.constant 0 : index
    %21 = vector.load %arg10[%c0_18, %c0_19] : memref<1x32xf32, #tpu.memory_space<vmem>>, vector<1x32xf32>
    %c0_20 = arith.constant 0 : index
    %c0_21 = arith.constant 0 : index
    %22 = vector.load %arg11[%c0_20, %c0_21] : memref<1x32xf32, #tpu.memory_space<vmem>>, vector<1x32xf32>
    %23 = arith.truncf %4 : vector<112x64xf32> to vector<112x64xbf16>
    %24 = arith.truncf %17 : vector<64x32xf32> to vector<64x32xbf16>
    %cst_22 = arith.constant dense<0.000000e+00> : vector<112x32xf32>
    %25 = tpu.matmul %23, %24, %cst_22 {dimension_numbers = #tpu.dot_dimension_numbers<[1], [0], [0], [1], [0, 0, 1, 1], [], []>} : vector<112x64xbf16>, vector<64x32xbf16>, vector<112x32xf32> -> vector<112x32xf32>
    %26 = math.tanh %25 : vector<112x32xf32>
    %27 = vector.shape_cast %26 : vector<112x32xf32> to vector<2x56x32xf32>
    %28 = vector.shape_cast %18 : vector<2x32xf32> to vector<1x2x32xf32>
    %29 = vector.shape_cast %28 : vector<1x2x32xf32> to vector<1x2x32xf32>
    %30 = vector.broadcast %29 : vector<1x2x32xf32> to vector<2x2x32xf32>
    "tpu.trace_start"() <{level = 10 : i32, message = "bnh,blh->bnl"}> : () -> ()
    %cst_23 = arith.constant dense<0.000000e+00> : vector<2x2x56xf32>
    %31 = tpu.matmul %30, %27, %cst_23 {dimension_numbers = #tpu.dot_dimension_numbers<[2], [2], [1], [1], [0, 0, 0, 1, 1, 1], [0], [0]>} : vector<2x2x32xf32>, vector<2x56x32xf32>, vector<2x2x56xf32> -> vector<2x2x56xf32>
    %cst_24 = arith.constant -1.000000e+30 : f32
    "tpu.trace_stop"() : () -> ()
    %32 = vector.shape_cast %16 : vector<2x1x56xi1> to vector<2x1x56xi1>
    %33 = vector.broadcast %32 : vector<2x1x56xi1> to vector<2x2x56xi1>
    %34 = vector.broadcast %cst_24 : f32 to vector<2x2x56xf32>
    %35 = arith.select %33, %34, %31 : vector<2x2x56xi1>, vector<2x2x56xf32>
    %cst_25 = arith.constant dense<0xFF800000> : vector<2x2xf32>
    %36 = vector.multi_reduction <maximumf>, %35, %cst_25 [2] : vector<2x2x56xf32> to vector<2x2xf32>
    %37 = vector.shape_cast %36 : vector<2x2xf32> to vector<2x2x1xf32>
    %38 = vector.broadcast %37 : vector<2x2x1xf32> to vector<2x2x56xf32>
    %39 = arith.subf %35, %38 : vector<2x2x56xf32>
    %40 = math.exp %39 : vector<2x2x56xf32>
    %cst_26 = arith.constant dense<0.000000e+00> : vector<2x2xf32>
    %41 = vector.multi_reduction <add>, %40, %cst_26 [2] : vector<2x2x56xf32> to vector<2x2xf32>
    %42 = vector.shape_cast %41 : vector<2x2xf32> to vector<2x2x1xf32>
    %43 = tpu.reciprocal %42 {approx = true} : vector<2x2x1xf32> -> vector<2x2x1xf32>
    %44 = vector.broadcast %43 : vector<2x2x1xf32> to vector<2x2x56xf32>
    %45 = arith.mulf %40, %44 : vector<2x2x56xf32>
    "tpu.trace_start"() <{level = 10 : i32, message = "bnl,bld->bnd"}> : () -> ()
    %cst_27 = arith.constant dense<0.000000e+00> : vector<2x2x64xf32>
    %46 = tpu.matmul %45, %5, %cst_27 {dimension_numbers = #tpu.dot_dimension_numbers<[2], [1], [1], [2], [0, 0, 0, 1, 1, 2], [0], [0]>} : vector<2x2x56xf32>, vector<2x56x64xf32>, vector<2x2x64xf32> -> vector<2x2x64xf32>
    "tpu.trace_stop"() : () -> ()
    "tpu.trace_start"() <{level = 10 : i32, message = "bnd,od->bno"}> : () -> ()
    %cst_28 = arith.constant dense<0.000000e+00> : vector<2x2x32xf32>
    %47 = tpu.matmul %46, %19, %cst_28 {dimension_numbers = #tpu.dot_dimension_numbers<[2], [1], [0, 1], [0], [0, 0, 0, 1, 1, 0], [], []>} : vector<2x2x64xf32>, vector<32x64xf32>, vector<2x2x32xf32> -> vector<2x2x32xf32>
    "tpu.trace_stop"() : () -> ()
    %48 = vector.shape_cast %20 : vector<1x32xf32> to vector<1x1x32xf32>
    %49 = vector.broadcast %48 : vector<1x1x32xf32> to vector<2x2x32xf32>
    %50 = arith.addf %47, %49 : vector<2x2x32xf32>
    %51 = arith.negf %50 : vector<2x2x32xf32>
    %52 = math.exp %51 : vector<2x2x32xf32>
    %cst_29 = arith.constant 1.000000e+00 : f32
    %53 = vector.broadcast %cst_29 : f32 to vector<2x2x32xf32>
    %54 = arith.addf %53, %52 : vector<2x2x32xf32>
    %55 = arith.divf %53, %54 : vector<2x2x32xf32>
    %56 = vector.shape_cast %13 : vector<2x32xf32> to vector<2x1x32xf32>
    %57 = vector.broadcast %56 : vector<2x1x32xf32> to vector<2x2x32xf32>
    %58 = arith.addf %57, %55 : vector<2x2x32xf32>
    %cst_30 = arith.constant dense<0.000000e+00> : vector<2x2xf32>
    %59 = vector.multi_reduction <add>, %58, %cst_30 [2] : vector<2x2x32xf32> to vector<2x2xf32>
    %60 = vector.shape_cast %59 : vector<2x2xf32> to vector<2x2x1xf32>
    %cst_31 = arith.constant 3.200000e+01 : f32
    %61 = vector.broadcast %cst_31 : f32 to vector<2x2x1xf32>
    %62 = arith.divf %60, %61 : vector<2x2x1xf32>
    %63 = vector.broadcast %62 : vector<2x2x1xf32> to vector<2x2x32xf32>
    %64 = arith.subf %58, %63 : vector<2x2x32xf32>
    %65 = arith.mulf %64, %64 : vector<2x2x32xf32>
    %cst_32 = arith.constant dense<0.000000e+00> : vector<2x2xf32>
    %66 = vector.multi_reduction <add>, %65, %cst_32 [2] : vector<2x2x32xf32> to vector<2x2xf32>
    %67 = vector.shape_cast %66 : vector<2x2xf32> to vector<2x2x1xf32>
    %cst_33 = arith.constant 3.200000e+01 : f32
    %68 = vector.broadcast %cst_33 : f32 to vector<2x2x1xf32>
    %69 = arith.divf %67, %68 : vector<2x2x1xf32>
    %70 = vector.broadcast %62 : vector<2x2x1xf32> to vector<2x2x32xf32>
    %71 = arith.subf %58, %70 : vector<2x2x32xf32>
    %cst_34 = arith.constant 9.99999974E-6 : f32
    %72 = vector.broadcast %cst_34 : f32 to vector<2x2x1xf32>
    %73 = arith.addf %69, %72 : vector<2x2x1xf32>
    %74 = math.rsqrt %73 : vector<2x2x1xf32>
    %75 = vector.broadcast %74 : vector<2x2x1xf32> to vector<2x2x32xf32>
    %76 = arith.mulf %71, %75 : vector<2x2x32xf32>
    %77 = vector.shape_cast %21 : vector<1x32xf32> to vector<1x1x32xf32>
    %78 = vector.broadcast %77 : vector<1x1x32xf32> to vector<2x2x32xf32>
    %79 = arith.mulf %76, %78 : vector<2x2x32xf32>
    %80 = vector.shape_cast %22 : vector<1x32xf32> to vector<1x1x32xf32>
    %81 = vector.broadcast %80 : vector<1x1x32xf32> to vector<2x2x32xf32>
    %82 = arith.addf %79, %81 : vector<2x2x32xf32>
    %83 = arith.mulf %82, %82 : vector<2x2x32xf32>
    %cst_35 = arith.constant dense<0.000000e+00> : vector<2x2xf32>
    %84 = vector.multi_reduction <add>, %83, %cst_35 [2] : vector<2x2x32xf32> to vector<2x2xf32>
    %85 = vector.shape_cast %84 : vector<2x2xf32> to vector<2x2x1xf32>
    %cst_36 = arith.constant 9.99999996E-13 : f32
    %86 = vector.broadcast %cst_36 : f32 to vector<2x2x1xf32>
    %87 = arith.addf %85, %86 : vector<2x2x1xf32>
    %88 = math.rsqrt %87 : vector<2x2x1xf32>
    %89 = vector.broadcast %88 : vector<2x2x1xf32> to vector<2x2x32xf32>
    %90 = arith.mulf %82, %89 : vector<2x2x32xf32>
    %c0_37 = arith.constant 0 : index
    %c0_38 = arith.constant 0 : index
    %91 = vector.load %arg1[%c0_37, %c0_38] : memref<32x1xi32, #tpu.memory_space<vmem>>, vector<32x1xi32>
    %92 = tpu.iota {dimensions = array<i32: 1>} : vector<32x50xi32>
    %93 = vector.broadcast %91 : vector<32x1xi32> to vector<32x50xi32>
    %94 = arith.cmpi eq, %92, %93 : vector<32x50xi32>
    %95 = arith.extui %94 : vector<32x50xi1> to vector<32x50xi32>
    %96 = arith.sitofp %95 : vector<32x50xi32> to vector<32x50xf32>
    %c0_39 = arith.constant 0 : index
    %c0_40 = arith.constant 0 : index
    %97 = vector.load %arg12[%c0_39, %c0_40] : memref<50x32xf32, #tpu.memory_space<vmem>>, vector<50x32xf32>
    %cst_41 = arith.constant dense<0.000000e+00> : vector<32x32xf32>
    %98 = tpu.matmul %96, %97, %cst_41 {dimension_numbers = #tpu.dot_dimension_numbers<[1], [0], [0], [1], [0, 0, 1, 1], [], []>} : vector<32x50xf32>, vector<50x32xf32>, vector<32x32xf32> -> vector<32x32xf32>
    %99 = vector.extract_strided_slice %98 {offsets = [0, 0], sizes = [16, 32], strides = [1, 1]} : vector<32x32xf32> to vector<16x32xf32>
    %100 = vector.extract_strided_slice %98 {offsets = [16, 0], sizes = [16, 32], strides = [1, 1]} : vector<32x32xf32> to vector<16x32xf32>
    %101 = vector.shape_cast %99 : vector<16x32xf32> to vector<2x8x32xf32>
    %102 = tpu.concatenate %99, %100 in 1 : vector<16x32xf32>, vector<16x32xf32> -> vector<16x64xf32>
    %c0_42 = arith.constant 0 : index
    %c0_43 = arith.constant 0 : index
    %103 = vector.load %arg13[%c0_42, %c0_43] : memref<64x96xf32, #tpu.memory_space<vmem>>, vector<64x96xf32>
    %cst_44 = arith.constant dense<0.000000e+00> : vector<16x96xf32>
    %104 = tpu.matmul %102, %103, %cst_44 {dimension_numbers = #tpu.dot_dimension_numbers<[1], [0], [0], [1], [0, 0, 1, 1], [], []>} : vector<16x64xf32>, vector<64x96xf32>, vector<16x96xf32> -> vector<16x96xf32>
    %c0_45 = arith.constant 0 : index
    %c0_46 = arith.constant 0 : index
    %105 = vector.load %arg14[%c0_45, %c0_46] : memref<1x96xf32, #tpu.memory_space<vmem>>, vector<1x96xf32>
    %106 = vector.broadcast %105 : vector<1x96xf32> to vector<16x96xf32>
    %107 = arith.addf %104, %106 : vector<16x96xf32>
    %108 = vector.shape_cast %107 : vector<16x96xf32> to vector<2x8x96xf32>
    %c0_47 = arith.constant 0 : index
    %c0_48 = arith.constant 0 : index
    %109 = vector.load %arg2[%c0_47, %c0_48] : memref<2x1xi32, #tpu.memory_space<vmem>>, vector<2x1xi32>
    %110 = tpu.iota {dimensions = array<i32: 1>} : vector<2x8x32xi32>
    %111 = tpu.iota {dimensions = array<i32: 2>} : vector<2x8x32xi32>
    %c16_i32 = arith.constant 16 : i32
    %112 = vector.broadcast %c16_i32 : i32 to vector<2x8x32xi32>
    %113 = arith.cmpi slt, %111, %112 : vector<2x8x32xi32>
    %c7_i32 = arith.constant 7 : i32
    %114 = vector.broadcast %c7_i32 : i32 to vector<2x8x32xi32>
    %115 = arith.subi %114, %110 : vector<2x8x32xi32>
    %116 = arith.select %113, %110, %115 : vector<2x8x32xi1>, vector<2x8x32xi32>
    %117 = vector.shape_cast %109 : vector<2x1xi32> to vector<2x1x1xi32>
    %118 = vector.broadcast %117 : vector<2x1x1xi32> to vector<2x8x32xi32>
    %119 = arith.cmpi slt, %116, %118 : vector<2x8x32xi32>
    %c0_49 = arith.constant 0 : index
    %c0_50 = arith.constant 0 : index
    %120 = vector.load %arg15[%c0_49, %c0_50] : memref<32x96xf32, #tpu.memory_space<vmem>>, vector<32x96xf32>
    %c0_51 = arith.constant 0 : index
    %c0_52 = arith.constant 0 : index
    %121 = vector.load %arg16[%c0_51, %c0_52] : memref<1x96xf32, #tpu.memory_space<vmem>>, vector<1x96xf32>
    %cst_53 = arith.constant 0.000000e+00 : f32
    %122 = vector.broadcast %cst_53 : f32 to vector<2x32xf32>
    %123 = vector.extract_strided_slice %108 {offsets = [0, 0, 0], sizes = [2, 1, 96], strides = [1, 1, 1]} : vector<2x8x96xf32> to vector<2x1x96xf32>
    %124 = vector.shape_cast %123 : vector<2x1x96xf32> to vector<2x96xf32>
    %cst_54 = arith.constant dense<0.000000e+00> : vector<2x96xf32>
    %125 = tpu.matmul %122, %120, %cst_54 {dimension_numbers = #tpu.dot_dimension_numbers<[1], [0], [0], [1], [0, 0, 1, 1], [], []>} : vector<2x32xf32>, vector<32x96xf32>, vector<2x96xf32> -> vector<2x96xf32>
    %126 = vector.broadcast %121 : vector<1x96xf32> to vector<2x96xf32>
    %127 = arith.addf %125, %126 : vector<2x96xf32>
    %128 = vector.extract_strided_slice %124 {offsets = [0, 0], sizes = [2, 64], strides = [1, 1]} : vector<2x96xf32> to vector<2x64xf32>
    %129 = vector.extract_strided_slice %127 {offsets = [0, 0], sizes = [2, 64], strides = [1, 1]} : vector<2x96xf32> to vector<2x64xf32>
    %130 = arith.addf %128, %129 : vector<2x64xf32>
    %131 = arith.negf %130 : vector<2x64xf32>
    %132 = math.exp %131 : vector<2x64xf32>
    %cst_55 = arith.constant 1.000000e+00 : f32
    %133 = vector.broadcast %cst_55 : f32 to vector<2x64xf32>
    %134 = arith.addf %133, %132 : vector<2x64xf32>
    %135 = arith.divf %133, %134 : vector<2x64xf32>
    %136 = vector.extract_strided_slice %135 {offsets = [0, 0], sizes = [2, 32], strides = [1, 1]} : vector<2x64xf32> to vector<2x32xf32>
    %137 = vector.extract_strided_slice %135 {offsets = [0, 32], sizes = [2, 32], strides = [1, 1]} : vector<2x64xf32> to vector<2x32xf32>
    %138 = vector.extract_strided_slice %124 {offsets = [0, 64], sizes = [2, 32], strides = [1, 1]} : vector<2x96xf32> to vector<2x32xf32>
    %139 = vector.extract_strided_slice %127 {offsets = [0, 64], sizes = [2, 32], strides = [1, 1]} : vector<2x96xf32> to vector<2x32xf32>
    %140 = arith.mulf %136, %139 : vector<2x32xf32>
    %141 = arith.addf %138, %140 : vector<2x32xf32>
    %142 = math.tanh %141 : vector<2x32xf32>
    %143 = vector.extract_strided_slice %119 {offsets = [0, 0, 0], sizes = [2, 1, 32], strides = [1, 1, 1]} : vector<2x8x32xi1> to vector<2x1x32xi1>
    %144 = vector.shape_cast %143 : vector<2x1x32xi1> to vector<2x32xi1>
    %cst_56 = arith.constant 1.000000e+00 : f32
    %145 = vector.broadcast %cst_56 : f32 to vector<2x32xf32>
    %146 = arith.subf %145, %137 : vector<2x32xf32>
    %147 = arith.mulf %146, %142 : vector<2x32xf32>
    %148 = arith.mulf %137, %122 : vector<2x32xf32>
    %149 = arith.addf %147, %148 : vector<2x32xf32>
    %150 = arith.select %144, %149, %122 : vector<2x32xi1>, vector<2x32xf32>
    %151 = vector.extract_strided_slice %108 {offsets = [0, 1, 0], sizes = [2, 1, 96], strides = [1, 1, 1]} : vector<2x8x96xf32> to vector<2x1x96xf32>
    %152 = vector.shape_cast %151 : vector<2x1x96xf32> to vector<2x96xf32>
    %cst_57 = arith.constant dense<0.000000e+00> : vector<2x96xf32>
    %153 = tpu.matmul %150, %120, %cst_57 {dimension_numbers = #tpu.dot_dimension_numbers<[1], [0], [0], [1], [0, 0, 1, 1], [], []>} : vector<2x32xf32>, vector<32x96xf32>, vector<2x96xf32> -> vector<2x96xf32>
    %154 = vector.broadcast %121 : vector<1x96xf32> to vector<2x96xf32>
    %155 = arith.addf %153, %154 : vector<2x96xf32>
    %156 = vector.extract_strided_slice %152 {offsets = [0, 0], sizes = [2, 64], strides = [1, 1]} : vector<2x96xf32> to vector<2x64xf32>
    %157 = vector.extract_strided_slice %155 {offsets = [0, 0], sizes = [2, 64], strides = [1, 1]} : vector<2x96xf32> to vector<2x64xf32>
    %158 = arith.addf %156, %157 : vector<2x64xf32>
    %159 = arith.negf %158 : vector<2x64xf32>
    %160 = math.exp %159 : vector<2x64xf32>
    %cst_58 = arith.constant 1.000000e+00 : f32
    %161 = vector.broadcast %cst_58 : f32 to vector<2x64xf32>
    %162 = arith.addf %161, %160 : vector<2x64xf32>
    %163 = arith.divf %161, %162 : vector<2x64xf32>
    %164 = vector.extract_strided_slice %163 {offsets = [0, 0], sizes = [2, 32], strides = [1, 1]} : vector<2x64xf32> to vector<2x32xf32>
    %165 = vector.extract_strided_slice %163 {offsets = [0, 32], sizes = [2, 32], strides = [1, 1]} : vector<2x64xf32> to vector<2x32xf32>
    %166 = vector.extract_strided_slice %152 {offsets = [0, 64], sizes = [2, 32], strides = [1, 1]} : vector<2x96xf32> to vector<2x32xf32>
    %167 = vector.extract_strided_slice %155 {offsets = [0, 64], sizes = [2, 32], strides = [1, 1]} : vector<2x96xf32> to vector<2x32xf32>
    %168 = arith.mulf %164, %167 : vector<2x32xf32>
    %169 = arith.addf %166, %168 : vector<2x32xf32>
    %170 = math.tanh %169 : vector<2x32xf32>
    %171 = vector.extract_strided_slice %119 {offsets = [0, 1, 0], sizes = [2, 1, 32], strides = [1, 1, 1]} : vector<2x8x32xi1> to vector<2x1x32xi1>
    %172 = vector.shape_cast %171 : vector<2x1x32xi1> to vector<2x32xi1>
    %cst_59 = arith.constant 1.000000e+00 : f32
    %173 = vector.broadcast %cst_59 : f32 to vector<2x32xf32>
    %174 = arith.subf %173, %165 : vector<2x32xf32>
    %175 = arith.mulf %174, %170 : vector<2x32xf32>
    %176 = arith.mulf %165, %150 : vector<2x32xf32>
    %177 = arith.addf %175, %176 : vector<2x32xf32>
    %178 = arith.select %172, %177, %150 : vector<2x32xi1>, vector<2x32xf32>
    %179 = vector.extract_strided_slice %108 {offsets = [0, 2, 0], sizes = [2, 1, 96], strides = [1, 1, 1]} : vector<2x8x96xf32> to vector<2x1x96xf32>
    %180 = vector.shape_cast %179 : vector<2x1x96xf32> to vector<2x96xf32>
    %cst_60 = arith.constant dense<0.000000e+00> : vector<2x96xf32>
    %181 = tpu.matmul %178, %120, %cst_60 {dimension_numbers = #tpu.dot_dimension_numbers<[1], [0], [0], [1], [0, 0, 1, 1], [], []>} : vector<2x32xf32>, vector<32x96xf32>, vector<2x96xf32> -> vector<2x96xf32>
    %182 = vector.broadcast %121 : vector<1x96xf32> to vector<2x96xf32>
    %183 = arith.addf %181, %182 : vector<2x96xf32>
    %184 = vector.extract_strided_slice %180 {offsets = [0, 0], sizes = [2, 64], strides = [1, 1]} : vector<2x96xf32> to vector<2x64xf32>
    %185 = vector.extract_strided_slice %183 {offsets = [0, 0], sizes = [2, 64], strides = [1, 1]} : vector<2x96xf32> to vector<2x64xf32>
    %186 = arith.addf %184, %185 : vector<2x64xf32>
    %187 = arith.negf %186 : vector<2x64xf32>
    %188 = math.exp %187 : vector<2x64xf32>
    %cst_61 = arith.constant 1.000000e+00 : f32
    %189 = vector.broadcast %cst_61 : f32 to vector<2x64xf32>
    %190 = arith.addf %189, %188 : vector<2x64xf32>
    %191 = arith.divf %189, %190 : vector<2x64xf32>
    %192 = vector.extract_strided_slice %191 {offsets = [0, 0], sizes = [2, 32], strides = [1, 1]} : vector<2x64xf32> to vector<2x32xf32>
    %193 = vector.extract_strided_slice %191 {offsets = [0, 32], sizes = [2, 32], strides = [1, 1]} : vector<2x64xf32> to vector<2x32xf32>
    %194 = vector.extract_strided_slice %180 {offsets = [0, 64], sizes = [2, 32], strides = [1, 1]} : vector<2x96xf32> to vector<2x32xf32>
    %195 = vector.extract_strided_slice %183 {offsets = [0, 64], sizes = [2, 32], strides = [1, 1]} : vector<2x96xf32> to vector<2x32xf32>
    %196 = arith.mulf %192, %195 : vector<2x32xf32>
    %197 = arith.addf %194, %196 : vector<2x32xf32>
    %198 = math.tanh %197 : vector<2x32xf32>
    %199 = vector.extract_strided_slice %119 {offsets = [0, 2, 0], sizes = [2, 1, 32], strides = [1, 1, 1]} : vector<2x8x32xi1> to vector<2x1x32xi1>
    %200 = vector.shape_cast %199 : vector<2x1x32xi1> to vector<2x32xi1>
    %cst_62 = arith.constant 1.000000e+00 : f32
    %201 = vector.broadcast %cst_62 : f32 to vector<2x32xf32>
    %202 = arith.subf %201, %193 : vector<2x32xf32>
    %203 = arith.mulf %202, %198 : vector<2x32xf32>
    %204 = arith.mulf %193, %178 : vector<2x32xf32>
    %205 = arith.addf %203, %204 : vector<2x32xf32>
    %206 = arith.select %200, %205, %178 : vector<2x32xi1>, vector<2x32xf32>
    %207 = vector.extract_strided_slice %108 {offsets = [0, 3, 0], sizes = [2, 1, 96], strides = [1, 1, 1]} : vector<2x8x96xf32> to vector<2x1x96xf32>
    %208 = vector.shape_cast %207 : vector<2x1x96xf32> to vector<2x96xf32>
    %cst_63 = arith.constant dense<0.000000e+00> : vector<2x96xf32>
    %209 = tpu.matmul %206, %120, %cst_63 {dimension_numbers = #tpu.dot_dimension_numbers<[1], [0], [0], [1], [0, 0, 1, 1], [], []>} : vector<2x32xf32>, vector<32x96xf32>, vector<2x96xf32> -> vector<2x96xf32>
    %210 = vector.broadcast %121 : vector<1x96xf32> to vector<2x96xf32>
    %211 = arith.addf %209, %210 : vector<2x96xf32>
    %212 = vector.extract_strided_slice %208 {offsets = [0, 0], sizes = [2, 64], strides = [1, 1]} : vector<2x96xf32> to vector<2x64xf32>
    %213 = vector.extract_strided_slice %211 {offsets = [0, 0], sizes = [2, 64], strides = [1, 1]} : vector<2x96xf32> to vector<2x64xf32>
    %214 = arith.addf %212, %213 : vector<2x64xf32>
    %215 = arith.negf %214 : vector<2x64xf32>
    %216 = math.exp %215 : vector<2x64xf32>
    %cst_64 = arith.constant 1.000000e+00 : f32
    %217 = vector.broadcast %cst_64 : f32 to vector<2x64xf32>
    %218 = arith.addf %217, %216 : vector<2x64xf32>
    %219 = arith.divf %217, %218 : vector<2x64xf32>
    %220 = vector.extract_strided_slice %219 {offsets = [0, 0], sizes = [2, 32], strides = [1, 1]} : vector<2x64xf32> to vector<2x32xf32>
    %221 = vector.extract_strided_slice %219 {offsets = [0, 32], sizes = [2, 32], strides = [1, 1]} : vector<2x64xf32> to vector<2x32xf32>
    %222 = vector.extract_strided_slice %208 {offsets = [0, 64], sizes = [2, 32], strides = [1, 1]} : vector<2x96xf32> to vector<2x32xf32>
    %223 = vector.extract_strided_slice %211 {offsets = [0, 64], sizes = [2, 32], strides = [1, 1]} : vector<2x96xf32> to vector<2x32xf32>
    %224 = arith.mulf %220, %223 : vector<2x32xf32>
    %225 = arith.addf %222, %224 : vector<2x32xf32>
    %226 = math.tanh %225 : vector<2x32xf32>
    %227 = vector.extract_strided_slice %119 {offsets = [0, 3, 0], sizes = [2, 1, 32], strides = [1, 1, 1]} : vector<2x8x32xi1> to vector<2x1x32xi1>
    %228 = vector.shape_cast %227 : vector<2x1x32xi1> to vector<2x32xi1>
    %cst_65 = arith.constant 1.000000e+00 : f32
    %229 = vector.broadcast %cst_65 : f32 to vector<2x32xf32>
    %230 = arith.subf %229, %221 : vector<2x32xf32>
    %231 = arith.mulf %230, %226 : vector<2x32xf32>
    %232 = arith.mulf %221, %206 : vector<2x32xf32>
    %233 = arith.addf %231, %232 : vector<2x32xf32>
    %234 = arith.select %228, %233, %206 : vector<2x32xi1>, vector<2x32xf32>
    %235 = vector.extract_strided_slice %108 {offsets = [0, 4, 0], sizes = [2, 1, 96], strides = [1, 1, 1]} : vector<2x8x96xf32> to vector<2x1x96xf32>
    %236 = vector.shape_cast %235 : vector<2x1x96xf32> to vector<2x96xf32>
    %cst_66 = arith.constant dense<0.000000e+00> : vector<2x96xf32>
    %237 = tpu.matmul %234, %120, %cst_66 {dimension_numbers = #tpu.dot_dimension_numbers<[1], [0], [0], [1], [0, 0, 1, 1], [], []>} : vector<2x32xf32>, vector<32x96xf32>, vector<2x96xf32> -> vector<2x96xf32>
    %238 = vector.broadcast %121 : vector<1x96xf32> to vector<2x96xf32>
    %239 = arith.addf %237, %238 : vector<2x96xf32>
    %240 = vector.extract_strided_slice %236 {offsets = [0, 0], sizes = [2, 64], strides = [1, 1]} : vector<2x96xf32> to vector<2x64xf32>
    %241 = vector.extract_strided_slice %239 {offsets = [0, 0], sizes = [2, 64], strides = [1, 1]} : vector<2x96xf32> to vector<2x64xf32>
    %242 = arith.addf %240, %241 : vector<2x64xf32>
    %243 = arith.negf %242 : vector<2x64xf32>
    %244 = math.exp %243 : vector<2x64xf32>
    %cst_67 = arith.constant 1.000000e+00 : f32
    %245 = vector.broadcast %cst_67 : f32 to vector<2x64xf32>
    %246 = arith.addf %245, %244 : vector<2x64xf32>
    %247 = arith.divf %245, %246 : vector<2x64xf32>
    %248 = vector.extract_strided_slice %247 {offsets = [0, 0], sizes = [2, 32], strides = [1, 1]} : vector<2x64xf32> to vector<2x32xf32>
    %249 = vector.extract_strided_slice %247 {offsets = [0, 32], sizes = [2, 32], strides = [1, 1]} : vector<2x64xf32> to vector<2x32xf32>
    %250 = vector.extract_strided_slice %236 {offsets = [0, 64], sizes = [2, 32], strides = [1, 1]} : vector<2x96xf32> to vector<2x32xf32>
    %251 = vector.extract_strided_slice %239 {offsets = [0, 64], sizes = [2, 32], strides = [1, 1]} : vector<2x96xf32> to vector<2x32xf32>
    %252 = arith.mulf %248, %251 : vector<2x32xf32>
    %253 = arith.addf %250, %252 : vector<2x32xf32>
    %254 = math.tanh %253 : vector<2x32xf32>
    %255 = vector.extract_strided_slice %119 {offsets = [0, 4, 0], sizes = [2, 1, 32], strides = [1, 1, 1]} : vector<2x8x32xi1> to vector<2x1x32xi1>
    %256 = vector.shape_cast %255 : vector<2x1x32xi1> to vector<2x32xi1>
    %cst_68 = arith.constant 1.000000e+00 : f32
    %257 = vector.broadcast %cst_68 : f32 to vector<2x32xf32>
    %258 = arith.subf %257, %249 : vector<2x32xf32>
    %259 = arith.mulf %258, %254 : vector<2x32xf32>
    %260 = arith.mulf %249, %234 : vector<2x32xf32>
    %261 = arith.addf %259, %260 : vector<2x32xf32>
    %262 = arith.select %256, %261, %234 : vector<2x32xi1>, vector<2x32xf32>
    %263 = vector.extract_strided_slice %108 {offsets = [0, 5, 0], sizes = [2, 1, 96], strides = [1, 1, 1]} : vector<2x8x96xf32> to vector<2x1x96xf32>
    %264 = vector.shape_cast %263 : vector<2x1x96xf32> to vector<2x96xf32>
    %cst_69 = arith.constant dense<0.000000e+00> : vector<2x96xf32>
    %265 = tpu.matmul %262, %120, %cst_69 {dimension_numbers = #tpu.dot_dimension_numbers<[1], [0], [0], [1], [0, 0, 1, 1], [], []>} : vector<2x32xf32>, vector<32x96xf32>, vector<2x96xf32> -> vector<2x96xf32>
    %266 = vector.broadcast %121 : vector<1x96xf32> to vector<2x96xf32>
    %267 = arith.addf %265, %266 : vector<2x96xf32>
    %268 = vector.extract_strided_slice %264 {offsets = [0, 0], sizes = [2, 64], strides = [1, 1]} : vector<2x96xf32> to vector<2x64xf32>
    %269 = vector.extract_strided_slice %267 {offsets = [0, 0], sizes = [2, 64], strides = [1, 1]} : vector<2x96xf32> to vector<2x64xf32>
    %270 = arith.addf %268, %269 : vector<2x64xf32>
    %271 = arith.negf %270 : vector<2x64xf32>
    %272 = math.exp %271 : vector<2x64xf32>
    %cst_70 = arith.constant 1.000000e+00 : f32
    %273 = vector.broadcast %cst_70 : f32 to vector<2x64xf32>
    %274 = arith.addf %273, %272 : vector<2x64xf32>
    %275 = arith.divf %273, %274 : vector<2x64xf32>
    %276 = vector.extract_strided_slice %275 {offsets = [0, 0], sizes = [2, 32], strides = [1, 1]} : vector<2x64xf32> to vector<2x32xf32>
    %277 = vector.extract_strided_slice %275 {offsets = [0, 32], sizes = [2, 32], strides = [1, 1]} : vector<2x64xf32> to vector<2x32xf32>
    %278 = vector.extract_strided_slice %264 {offsets = [0, 64], sizes = [2, 32], strides = [1, 1]} : vector<2x96xf32> to vector<2x32xf32>
    %279 = vector.extract_strided_slice %267 {offsets = [0, 64], sizes = [2, 32], strides = [1, 1]} : vector<2x96xf32> to vector<2x32xf32>
    %280 = arith.mulf %276, %279 : vector<2x32xf32>
    %281 = arith.addf %278, %280 : vector<2x32xf32>
    %282 = math.tanh %281 : vector<2x32xf32>
    %283 = vector.extract_strided_slice %119 {offsets = [0, 5, 0], sizes = [2, 1, 32], strides = [1, 1, 1]} : vector<2x8x32xi1> to vector<2x1x32xi1>
    %284 = vector.shape_cast %283 : vector<2x1x32xi1> to vector<2x32xi1>
    %cst_71 = arith.constant 1.000000e+00 : f32
    %285 = vector.broadcast %cst_71 : f32 to vector<2x32xf32>
    %286 = arith.subf %285, %277 : vector<2x32xf32>
    %287 = arith.mulf %286, %282 : vector<2x32xf32>
    %288 = arith.mulf %277, %262 : vector<2x32xf32>
    %289 = arith.addf %287, %288 : vector<2x32xf32>
    %290 = arith.select %284, %289, %262 : vector<2x32xi1>, vector<2x32xf32>
    %291 = vector.extract_strided_slice %108 {offsets = [0, 6, 0], sizes = [2, 1, 96], strides = [1, 1, 1]} : vector<2x8x96xf32> to vector<2x1x96xf32>
    %292 = vector.shape_cast %291 : vector<2x1x96xf32> to vector<2x96xf32>
    %cst_72 = arith.constant dense<0.000000e+00> : vector<2x96xf32>
    %293 = tpu.matmul %290, %120, %cst_72 {dimension_numbers = #tpu.dot_dimension_numbers<[1], [0], [0], [1], [0, 0, 1, 1], [], []>} : vector<2x32xf32>, vector<32x96xf32>, vector<2x96xf32> -> vector<2x96xf32>
    %294 = vector.broadcast %121 : vector<1x96xf32> to vector<2x96xf32>
    %295 = arith.addf %293, %294 : vector<2x96xf32>
    %296 = vector.extract_strided_slice %292 {offsets = [0, 0], sizes = [2, 64], strides = [1, 1]} : vector<2x96xf32> to vector<2x64xf32>
    %297 = vector.extract_strided_slice %295 {offsets = [0, 0], sizes = [2, 64], strides = [1, 1]} : vector<2x96xf32> to vector<2x64xf32>
    %298 = arith.addf %296, %297 : vector<2x64xf32>
    %299 = arith.negf %298 : vector<2x64xf32>
    %300 = math.exp %299 : vector<2x64xf32>
    %cst_73 = arith.constant 1.000000e+00 : f32
    %301 = vector.broadcast %cst_73 : f32 to vector<2x64xf32>
    %302 = arith.addf %301, %300 : vector<2x64xf32>
    %303 = arith.divf %301, %302 : vector<2x64xf32>
    %304 = vector.extract_strided_slice %303 {offsets = [0, 0], sizes = [2, 32], strides = [1, 1]} : vector<2x64xf32> to vector<2x32xf32>
    %305 = vector.extract_strided_slice %303 {offsets = [0, 32], sizes = [2, 32], strides = [1, 1]} : vector<2x64xf32> to vector<2x32xf32>
    %306 = vector.extract_strided_slice %292 {offsets = [0, 64], sizes = [2, 32], strides = [1, 1]} : vector<2x96xf32> to vector<2x32xf32>
    %307 = vector.extract_strided_slice %295 {offsets = [0, 64], sizes = [2, 32], strides = [1, 1]} : vector<2x96xf32> to vector<2x32xf32>
    %308 = arith.mulf %304, %307 : vector<2x32xf32>
    %309 = arith.addf %306, %308 : vector<2x32xf32>
    %310 = math.tanh %309 : vector<2x32xf32>
    %311 = vector.extract_strided_slice %119 {offsets = [0, 6, 0], sizes = [2, 1, 32], strides = [1, 1, 1]} : vector<2x8x32xi1> to vector<2x1x32xi1>
    %312 = vector.shape_cast %311 : vector<2x1x32xi1> to vector<2x32xi1>
    %cst_74 = arith.constant 1.000000e+00 : f32
    %313 = vector.broadcast %cst_74 : f32 to vector<2x32xf32>
    %314 = arith.subf %313, %305 : vector<2x32xf32>
    %315 = arith.mulf %314, %310 : vector<2x32xf32>
    %316 = arith.mulf %305, %290 : vector<2x32xf32>
    %317 = arith.addf %315, %316 : vector<2x32xf32>
    %318 = arith.select %312, %317, %290 : vector<2x32xi1>, vector<2x32xf32>
    %319 = vector.extract_strided_slice %108 {offsets = [0, 7, 0], sizes = [2, 1, 96], strides = [1, 1, 1]} : vector<2x8x96xf32> to vector<2x1x96xf32>
    %320 = vector.shape_cast %319 : vector<2x1x96xf32> to vector<2x96xf32>
    %cst_75 = arith.constant dense<0.000000e+00> : vector<2x96xf32>
    %321 = tpu.matmul %318, %120, %cst_75 {dimension_numbers = #tpu.dot_dimension_numbers<[1], [0], [0], [1], [0, 0, 1, 1], [], []>} : vector<2x32xf32>, vector<32x96xf32>, vector<2x96xf32> -> vector<2x96xf32>
    %322 = vector.broadcast %121 : vector<1x96xf32> to vector<2x96xf32>
    %323 = arith.addf %321, %322 : vector<2x96xf32>
    %324 = vector.extract_strided_slice %320 {offsets = [0, 0], sizes = [2, 64], strides = [1, 1]} : vector<2x96xf32> to vector<2x64xf32>
    %325 = vector.extract_strided_slice %323 {offsets = [0, 0], sizes = [2, 64], strides = [1, 1]} : vector<2x96xf32> to vector<2x64xf32>
    %326 = arith.addf %324, %325 : vector<2x64xf32>
    %327 = arith.negf %326 : vector<2x64xf32>
    %328 = math.exp %327 : vector<2x64xf32>
    %cst_76 = arith.constant 1.000000e+00 : f32
    %329 = vector.broadcast %cst_76 : f32 to vector<2x64xf32>
    %330 = arith.addf %329, %328 : vector<2x64xf32>
    %331 = arith.divf %329, %330 : vector<2x64xf32>
    %332 = vector.extract_strided_slice %331 {offsets = [0, 0], sizes = [2, 32], strides = [1, 1]} : vector<2x64xf32> to vector<2x32xf32>
    %333 = vector.extract_strided_slice %331 {offsets = [0, 32], sizes = [2, 32], strides = [1, 1]} : vector<2x64xf32> to vector<2x32xf32>
    %334 = vector.extract_strided_slice %320 {offsets = [0, 64], sizes = [2, 32], strides = [1, 1]} : vector<2x96xf32> to vector<2x32xf32>
    %335 = vector.extract_strided_slice %323 {offsets = [0, 64], sizes = [2, 32], strides = [1, 1]} : vector<2x96xf32> to vector<2x32xf32>
    %336 = arith.mulf %332, %335 : vector<2x32xf32>
    %337 = arith.addf %334, %336 : vector<2x32xf32>
    %338 = math.tanh %337 : vector<2x32xf32>
    %339 = vector.extract_strided_slice %119 {offsets = [0, 7, 0], sizes = [2, 1, 32], strides = [1, 1, 1]} : vector<2x8x32xi1> to vector<2x1x32xi1>
    %340 = vector.shape_cast %339 : vector<2x1x32xi1> to vector<2x32xi1>
    %cst_77 = arith.constant 1.000000e+00 : f32
    %341 = vector.broadcast %cst_77 : f32 to vector<2x32xf32>
    %342 = arith.subf %341, %333 : vector<2x32xf32>
    %343 = arith.mulf %342, %338 : vector<2x32xf32>
    %344 = arith.mulf %333, %318 : vector<2x32xf32>
    %345 = arith.addf %343, %344 : vector<2x32xf32>
    %346 = arith.select %340, %345, %318 : vector<2x32xi1>, vector<2x32xf32>
    %347 = tpu.iota {dimensions = array<i32: 2>} : vector<2x1x8xi32>
    %348 = vector.shape_cast %109 : vector<2x1xi32> to vector<2x1x1xi32>
    %349 = vector.broadcast %348 : vector<2x1x1xi32> to vector<2x1x8xi32>
    %350 = arith.cmpi sge, %347, %349 : vector<2x1x8xi32>
    %c0_78 = arith.constant 0 : index
    %c0_79 = arith.constant 0 : index
    %351 = vector.load %arg17[%c0_78, %c0_79] : memref<32x16xf32, #tpu.memory_space<vmem>>, vector<32x16xf32>
    %c0_80 = arith.constant 0 : index
    %c0_81 = arith.constant 0 : index
    %352 = vector.load %arg18[%c0_80, %c0_81] : memref<2x16xf32, #tpu.memory_space<vmem>>, vector<2x16xf32>
    %c0_82 = arith.constant 0 : index
    %c0_83 = arith.constant 0 : index
    %353 = vector.load %arg19[%c0_82, %c0_83] : memref<32x32xf32, #tpu.memory_space<vmem>>, vector<32x32xf32>
    %c0_84 = arith.constant 0 : index
    %c0_85 = arith.constant 0 : index
    %354 = vector.load %arg20[%c0_84, %c0_85] : memref<1x32xf32, #tpu.memory_space<vmem>>, vector<1x32xf32>
    %c0_86 = arith.constant 0 : index
    %c0_87 = arith.constant 0 : index
    %355 = vector.load %arg21[%c0_86, %c0_87] : memref<1x32xf32, #tpu.memory_space<vmem>>, vector<1x32xf32>
    %c0_88 = arith.constant 0 : index
    %c0_89 = arith.constant 0 : index
    %356 = vector.load %arg22[%c0_88, %c0_89] : memref<1x32xf32, #tpu.memory_space<vmem>>, vector<1x32xf32>
    %357 = arith.truncf %99 : vector<16x32xf32> to vector<16x32xbf16>
    %358 = arith.truncf %351 : vector<32x16xf32> to vector<32x16xbf16>
    %cst_90 = arith.constant dense<0.000000e+00> : vector<16x16xf32>
    %359 = tpu.matmul %357, %358, %cst_90 {dimension_numbers = #tpu.dot_dimension_numbers<[1], [0], [0], [1], [0, 0, 1, 1], [], []>} : vector<16x32xbf16>, vector<32x16xbf16>, vector<16x16xf32> -> vector<16x16xf32>
    %360 = math.tanh %359 : vector<16x16xf32>
    %361 = vector.shape_cast %360 : vector<16x16xf32> to vector<2x8x16xf32>
    %362 = vector.shape_cast %352 : vector<2x16xf32> to vector<1x2x16xf32>
    %363 = vector.shape_cast %362 : vector<1x2x16xf32> to vector<1x2x16xf32>
    %364 = vector.broadcast %363 : vector<1x2x16xf32> to vector<2x2x16xf32>
    "tpu.trace_start"() <{level = 10 : i32, message = "bnh,blh->bnl"}> : () -> ()
    %cst_91 = arith.constant dense<0.000000e+00> : vector<2x2x8xf32>
    %365 = tpu.matmul %364, %361, %cst_91 {dimension_numbers = #tpu.dot_dimension_numbers<[2], [2], [1], [1], [0, 0, 0, 1, 1, 1], [0], [0]>} : vector<2x2x16xf32>, vector<2x8x16xf32>, vector<2x2x8xf32> -> vector<2x2x8xf32>
    %cst_92 = arith.constant -1.000000e+30 : f32
    "tpu.trace_stop"() : () -> ()
    %366 = vector.shape_cast %350 : vector<2x1x8xi1> to vector<2x1x8xi1>
    %367 = vector.broadcast %366 : vector<2x1x8xi1> to vector<2x2x8xi1>
    %368 = vector.broadcast %cst_92 : f32 to vector<2x2x8xf32>
    %369 = arith.select %367, %368, %365 : vector<2x2x8xi1>, vector<2x2x8xf32>
    %cst_93 = arith.constant dense<0xFF800000> : vector<2x2xf32>
    %370 = vector.multi_reduction <maximumf>, %369, %cst_93 [2] : vector<2x2x8xf32> to vector<2x2xf32>
    %371 = vector.shape_cast %370 : vector<2x2xf32> to vector<2x2x1xf32>
    %372 = vector.broadcast %371 : vector<2x2x1xf32> to vector<2x2x8xf32>
    %373 = arith.subf %369, %372 : vector<2x2x8xf32>
    %374 = math.exp %373 : vector<2x2x8xf32>
    %cst_94 = arith.constant dense<0.000000e+00> : vector<2x2xf32>
    %375 = vector.multi_reduction <add>, %374, %cst_94 [2] : vector<2x2x8xf32> to vector<2x2xf32>
    %376 = vector.shape_cast %375 : vector<2x2xf32> to vector<2x2x1xf32>
    %377 = tpu.reciprocal %376 {approx = true} : vector<2x2x1xf32> -> vector<2x2x1xf32>
    %378 = vector.broadcast %377 : vector<2x2x1xf32> to vector<2x2x8xf32>
    %379 = arith.mulf %374, %378 : vector<2x2x8xf32>
    "tpu.trace_start"() <{level = 10 : i32, message = "bnl,bld->bnd"}> : () -> ()
    %cst_95 = arith.constant dense<0.000000e+00> : vector<2x2x32xf32>
    %380 = tpu.matmul %379, %101, %cst_95 {dimension_numbers = #tpu.dot_dimension_numbers<[2], [1], [1], [2], [0, 0, 0, 1, 1, 2], [0], [0]>} : vector<2x2x8xf32>, vector<2x8x32xf32>, vector<2x2x32xf32> -> vector<2x2x32xf32>
    "tpu.trace_stop"() : () -> ()
    "tpu.trace_start"() <{level = 10 : i32, message = "bnd,od->bno"}> : () -> ()
    %cst_96 = arith.constant dense<0.000000e+00> : vector<2x2x32xf32>
    %381 = tpu.matmul %380, %353, %cst_96 {dimension_numbers = #tpu.dot_dimension_numbers<[2], [1], [0, 1], [0], [0, 0, 0, 1, 1, 0], [], []>} : vector<2x2x32xf32>, vector<32x32xf32>, vector<2x2x32xf32> -> vector<2x2x32xf32>
    "tpu.trace_stop"() : () -> ()
    %382 = vector.shape_cast %354 : vector<1x32xf32> to vector<1x1x32xf32>
    %383 = vector.broadcast %382 : vector<1x1x32xf32> to vector<2x2x32xf32>
    %384 = arith.addf %381, %383 : vector<2x2x32xf32>
    %385 = arith.negf %384 : vector<2x2x32xf32>
    %386 = math.exp %385 : vector<2x2x32xf32>
    %cst_97 = arith.constant 1.000000e+00 : f32
    %387 = vector.broadcast %cst_97 : f32 to vector<2x2x32xf32>
    %388 = arith.addf %387, %386 : vector<2x2x32xf32>
    %389 = arith.divf %387, %388 : vector<2x2x32xf32>
    %390 = vector.shape_cast %346 : vector<2x32xf32> to vector<2x1x32xf32>
    %391 = vector.broadcast %390 : vector<2x1x32xf32> to vector<2x2x32xf32>
    %392 = arith.addf %391, %389 : vector<2x2x32xf32>
    %cst_98 = arith.constant dense<0.000000e+00> : vector<2x2xf32>
    %393 = vector.multi_reduction <add>, %392, %cst_98 [2] : vector<2x2x32xf32> to vector<2x2xf32>
    %394 = vector.shape_cast %393 : vector<2x2xf32> to vector<2x2x1xf32>
    %cst_99 = arith.constant 3.200000e+01 : f32
    %395 = vector.broadcast %cst_99 : f32 to vector<2x2x1xf32>
    %396 = arith.divf %394, %395 : vector<2x2x1xf32>
    %397 = vector.broadcast %396 : vector<2x2x1xf32> to vector<2x2x32xf32>
    %398 = arith.subf %392, %397 : vector<2x2x32xf32>
    %399 = arith.mulf %398, %398 : vector<2x2x32xf32>
    %cst_100 = arith.constant dense<0.000000e+00> : vector<2x2xf32>
    %400 = vector.multi_reduction <add>, %399, %cst_100 [2] : vector<2x2x32xf32> to vector<2x2xf32>
    %401 = vector.shape_cast %400 : vector<2x2xf32> to vector<2x2x1xf32>
    %cst_101 = arith.constant 3.200000e+01 : f32
    %402 = vector.broadcast %cst_101 : f32 to vector<2x2x1xf32>
    %403 = arith.divf %401, %402 : vector<2x2x1xf32>
    %404 = vector.broadcast %396 : vector<2x2x1xf32> to vector<2x2x32xf32>
    %405 = arith.subf %392, %404 : vector<2x2x32xf32>
    %cst_102 = arith.constant 9.99999974E-6 : f32
    %406 = vector.broadcast %cst_102 : f32 to vector<2x2x1xf32>
    %407 = arith.addf %403, %406 : vector<2x2x1xf32>
    %408 = math.rsqrt %407 : vector<2x2x1xf32>
    %409 = vector.broadcast %408 : vector<2x2x1xf32> to vector<2x2x32xf32>
    %410 = arith.mulf %405, %409 : vector<2x2x32xf32>
    %411 = vector.shape_cast %355 : vector<1x32xf32> to vector<1x1x32xf32>
    %412 = vector.broadcast %411 : vector<1x1x32xf32> to vector<2x2x32xf32>
    %413 = arith.mulf %410, %412 : vector<2x2x32xf32>
    %414 = vector.shape_cast %356 : vector<1x32xf32> to vector<1x1x32xf32>
    %415 = vector.broadcast %414 : vector<1x1x32xf32> to vector<2x2x32xf32>
    %416 = arith.addf %413, %415 : vector<2x2x32xf32>
    %417 = arith.mulf %416, %416 : vector<2x2x32xf32>
    %cst_103 = arith.constant dense<0.000000e+00> : vector<2x2xf32>
    %418 = vector.multi_reduction <add>, %417, %cst_103 [2] : vector<2x2x32xf32> to vector<2x2xf32>
    %419 = vector.shape_cast %418 : vector<2x2xf32> to vector<2x2x1xf32>
    %cst_104 = arith.constant 9.99999996E-13 : f32
    %420 = vector.broadcast %cst_104 : f32 to vector<2x2x1xf32>
    %421 = arith.addf %419, %420 : vector<2x2x1xf32>
    %422 = math.rsqrt %421 : vector<2x2x1xf32>
    %423 = vector.broadcast %422 : vector<2x2x1xf32> to vector<2x2x32xf32>
    %424 = arith.mulf %416, %423 : vector<2x2x32xf32>
    %cst_105 = arith.constant 0.000000e+00 : f32
    %425 = vector.broadcast %cst_105 : f32 to vector<2x2x8xf32>
    %426 = tpu.concatenate %90, %55, %45, %425 in 2 : vector<2x2x32xf32>, vector<2x2x32xf32>, vector<2x2x56xf32>, vector<2x2x8xf32> -> vector<2x2x128xf32>
    %cst_106 = arith.constant 0.000000e+00 : f32
    %427 = vector.broadcast %cst_106 : f32 to vector<2x2x56xf32>
    %428 = tpu.concatenate %424, %389, %379, %427 in 2 : vector<2x2x32xf32>, vector<2x2x32xf32>, vector<2x2x8xf32>, vector<2x2x56xf32> -> vector<2x2x128xf32>
    %c0_107 = arith.constant 0 : index
    %c0_108 = arith.constant 0 : index
    %c0_109 = arith.constant 0 : index
    %c0_110 = arith.constant 0 : index
    %429 = vector.load %arg23[%c0_107, %c0_108, %c0_109, %c0_110] : memref<2x2x2x128xf32, #tpu.memory_space<vmem>>, vector<1x2x2x128xf32>
    %430 = vector.shape_cast %429 : vector<1x2x2x128xf32> to vector<2x2x128xf32>
    %431 = vector.shape_cast %426 : vector<2x2x128xf32> to vector<1x2x2x128xf32>
    tpu.vector_store %arg23[%c0_107, %c0_108, %c0_109, %c0_110], %431 {strides = array<i32>} : memref<2x2x2x128xf32, #tpu.memory_space<vmem>>, vector<1x2x2x128xf32>,
    %c1 = arith.constant 1 : index
    %c0_111 = arith.constant 0 : index
    %c0_112 = arith.constant 0 : index
    %c0_113 = arith.constant 0 : index
    %432 = vector.load %arg23[%c1, %c0_111, %c0_112, %c0_113] : memref<2x2x2x128xf32, #tpu.memory_space<vmem>>, vector<1x2x2x128xf32>
    %433 = vector.shape_cast %432 : vector<1x2x2x128xf32> to vector<2x2x128xf32>
    %434 = vector.shape_cast %428 : vector<2x2x128xf32> to vector<1x2x2x128xf32>
    tpu.vector_store %arg23[%c1, %c0_111, %c0_112, %c0_113], %434 {strides = array<i32>} : memref<2x2x2x128xf32, #tpu.memory_space<vmem>>, vector<1x2x2x128xf32>,
    return
  }
}

</mosaic_0001>

<llo_original>
// kernel: pvse_forward.1
$region0: #{pvse_forward.1}
  #allocation0 [shape = 'u32[]', space=smem, size = 0x4, offset = 0x4, fixed_abs, tag = 'smem constant byte address 0x4 - core index']
  #allocation1 [shape = 'u32[144,128]{1,0:T(1,128)}', space=vmem, size = 0x12000, scoped, tag = 'internal scratch']
  %s0 = inlined_call_operand.vmem [shape: f32[112,48], index: 0, kind: input, shape index: {}]
  %s1 = inlined_call_operand.vmem [shape: s32[32,1], index: 1, kind: input, shape index: {}]
  %s2 = inlined_call_operand.vmem [shape: s32[2,1], index: 2, kind: input, shape index: {}]
  %s3 = inlined_call_operand.vmem [shape: f32[48,64], index: 3, kind: input, shape index: {}]
  %s4 = inlined_call_operand.vmem [shape: f32[64,32], index: 4, kind: input, shape index: {}]
  %s5 = inlined_call_operand.vmem [shape: f32[1,32], index: 5, kind: input, shape index: {}]
  %s6 = inlined_call_operand.vmem [shape: f32[64,32], index: 6, kind: input, shape index: {}]
  %s7 = inlined_call_operand.vmem [shape: f32[2,32], index: 7, kind: input, shape index: {}]
  %s8 = inlined_call_operand.vmem [shape: f32[32,64], index: 8, kind: input, shape index: {}]
  %s9 = inlined_call_operand.vmem [shape: f32[1,32], index: 9, kind: input, shape index: {}]
  %s10 = inlined_call_operand.vmem [shape: f32[1,32], index: 10, kind: input, shape index: {}]
  %s11 = inlined_call_operand.vmem [shape: f32[1,32], index: 11, kind: input, shape index: {}]
  %s12 = inlined_call_operand.vmem [shape: f32[50,32], index: 12, kind: input, shape index: {}]
  %s13 = inlined_call_operand.vmem [shape: f32[64,96], index: 13, kind: input, shape index: {}]
  %s14 = inlined_call_operand.vmem [shape: f32[1,96], index: 14, kind: input, shape index: {}]
  %s15 = inlined_call_operand.vmem [shape: f32[32,96], index: 15, kind: input, shape index: {}]
  %s16 = inlined_call_operand.vmem [shape: f32[1,96], index: 16, kind: input, shape index: {}]
  %s17 = inlined_call_operand.vmem [shape: f32[32,16], index: 17, kind: input, shape index: {}]
  %s18 = inlined_call_operand.vmem [shape: f32[2,16], index: 18, kind: input, shape index: {}]
  %s19 = inlined_call_operand.vmem [shape: f32[32,32], index: 19, kind: input, shape index: {}]
  %s20 = inlined_call_operand.vmem [shape: f32[1,32], index: 20, kind: input, shape index: {}]
  %s21 = inlined_call_operand.vmem [shape: f32[1,32], index: 21, kind: input, shape index: {}]
  %s22 = inlined_call_operand.vmem [shape: f32[1,32], index: 22, kind: input, shape index: {}]
  %s23 = inlined_call_operand.vmem [shape: f32[2,2,2,128], index: 23, kind: output, shape index: {}]
  %s24 = sld [smem:[#allocation0]]
  $region102: #{pvse_forward.1} parent=0
    _
  %s26 = ssub.s32 1, %s24
  %s27 = scalar_select 0, %s26, %s24
  // Predicated region
  $region2: #{pvse_forward.1} parent=0 // pred_check
    _
  $region3: #{pvse_forward.1} parent=0 // pred_check_branch
    %29 = sbr.rel (0) target = $region5
  $region4: #{pvse_forward.1} parent=0 // pred_region
    _
  $region5: #{pvse_forward.1} parent=0 // pred_fallthru
    _
  // Predicated region
  $region6: #{pvse_forward.1} parent=0 // pred_check
    _
  $region7: #{pvse_forward.1} parent=0 // pred_check_branch
    %31 = sbr.rel (0) target = $region9
  $region8: #{pvse_forward.1} parent=0 // pred_region
    _
  $region9: #{pvse_forward.1} parent=0 // pred_fallthru
    _
  // Predicated region
  $region10: #{pvse_forward.1} parent=0 // pred_check
    _
  $region11: #{pvse_forward.1} parent=0 // pred_check_branch
    %33 = sbr.rel (0) target = $region13
  $region12: #{pvse_forward.1} parent=0 // pred_region
    _
  $region13: #{pvse_forward.1} parent=0 // pred_fallthru
    _
  // Predicated region
  $region14: #{pvse_forward.1} parent=0 // pred_check
    _
  $region15: #{pvse_forward.1} parent=0 // pred_check_branch
    %35 = sbr.rel (0) target = $region17
  $region16: #{pvse_forward.1} parent=0 // pred_region
    _
  $region17: #{pvse_forward.1} parent=0 // pred_fallthru
    _
  // Predicated region
  $region18: #{pvse_forward.1} parent=0 // pred_check
    _
  $region19: #{pvse_forward.1} parent=0 // pred_check_branch
    %37 = sbr.rel (0) target = $region21
  $region20: #{pvse_forward.1} parent=0 // pred_region
    _
  $region21: #{pvse_forward.1} parent=0 // pred_fallthru
    _
  // Predicated region
  $region22: #{pvse_forward.1} parent=0 // pred_check
    _
  $region23: #{pvse_forward.1} parent=0 // pred_check_branch
    %39 = sbr.rel (0) target = $region25
  $region24: #{pvse_forward.1} parent=0 // pred_region
    _
  $region25: #{pvse_forward.1} parent=0 // pred_fallthru
    _
  // Predicated region
  $region26: #{pvse_forward.1} parent=0 // pred_check
    _
  $region27: #{pvse_forward.1} parent=0 // pred_check_branch
    %41 = sbr.rel (0) target = $region29
  $region28: #{pvse_forward.1} parent=0 // pred_region
    _
  $region29: #{pvse_forward.1} parent=0 // pred_fallthru
    _
  // Predicated region
  $region30: #{pvse_forward.1} parent=0 // pred_check
    _
  $region31: #{pvse_forward.1} parent=0 // pred_check_branch
    %43 = sbr.rel (0) target = $region33
  $region32: #{pvse_forward.1} parent=0 // pred_region
    _
  $region33: #{pvse_forward.1} parent=0 // pred_fallthru
    _
  // Predicated region
  $region34: #{pvse_forward.1} parent=0 // pred_check
    _
  $region35: #{pvse_forward.1} parent=0 // pred_check_branch
    %45 = sbr.rel (0) target = $region37
  $region36: #{pvse_forward.1} parent=0 // pred_region
    _
  $region37: #{pvse_forward.1} parent=0 // pred_fallthru
    _
  // Predicated region
  $region38: #{pvse_forward.1} parent=0 // pred_check
    _
  $region39: #{pvse_forward.1} parent=0 // pred_check_branch
    %47 = sbr.rel (0) target = $region41
  $region40: #{pvse_forward.1} parent=0 // pred_region
    _
  $region41: #{pvse_forward.1} parent=0 // pred_fallthru
    _
  // Predicated region
  $region42: #{pvse_forward.1} parent=0 // pred_check
    _
  $region43: #{pvse_forward.1} parent=0 // pred_check_branch
    %49 = sbr.rel (0) target = $region45
  $region44: #{pvse_forward.1} parent=0 // pred_region
    _
  $region45: #{pvse_forward.1} parent=0 // pred_fallthru
    _
  // Predicated region
  $region46: #{pvse_forward.1} parent=0 // pred_check
    _
  $region47: #{pvse_forward.1} parent=0 // pred_check_branch
    %51 = sbr.rel (0) target = $region49
  $region48: #{pvse_forward.1} parent=0 // pred_region
    _
  $region49: #{pvse_forward.1} parent=0 // pred_fallthru
    _
  // Predicated region
  $region50: #{pvse_forward.1} parent=0 // pred_check
    _
  $region51: #{pvse_forward.1} parent=0 // pred_check_branch
    %53 = sbr.rel (0) target = $region53
  $region52: #{pvse_forward.1} parent=0 // pred_region
    _
  $region53: #{pvse_forward.1} parent=0 // pred_fallthru
    _
  // Predicated region
  $region54: #{pvse_forward.1} parent=0 // pred_check
    _
  $region55: #{pvse_forward.1} parent=0 // pred_check_branch
    %55 = sbr.rel (0) target = $region57
  $region56: #{pvse_forward.1} parent=0 // pred_region
    _
  $region57: #{pvse_forward.1} parent=0 // pred_fallthru
    _
  // Predicated region
  $region58: #{pvse_forward.1} parent=0 // pred_check
    _
  $region59: #{pvse_forward.1} parent=0 // pred_check_branch
    %57 = sbr.rel (0) target = $region61
  $region60: #{pvse_forward.1} parent=0 // pred_region
    _
  $region61: #{pvse_forward.1} parent=0 // pred_fallthru
    _
  // Predicated region
  $region62: #{pvse_forward.1} parent=0 // pred_check
    _
  $region63: #{pvse_forward.1} parent=0 // pred_check_branch
    %59 = sbr.rel (0) target = $region65
  $region64: #{pvse_forward.1} parent=0 // pred_region
    _
  $region65: #{pvse_forward.1} parent=0 // pred_fallthru
    _
  // Predicated region
  $region66: #{pvse_forward.1} parent=0 // pred_check
    _
  $region67: #{pvse_forward.1} parent=0 // pred_check_branch
    %61 = sbr.rel (0) target = $region69
  $region68: #{pvse_forward.1} parent=0 // pred_region
    _
  $region69: #{pvse_forward.1} parent=0 // pred_fallthru
    _
  // Predicated region
  $region70: #{pvse_forward.1} parent=0 // pred_check
    _
  $region71: #{pvse_forward.1} parent=0 // pred_check_branch
    %63 = sbr.rel (0) target = $region73
  $region72: #{pvse_forward.1} parent=0 // pred_region
    _
  $region73: #{pvse_forward.1} parent=0 // pred_fallthru
    _
  // Predicated region
  $region74: #{pvse_forward.1} parent=0 // pred_check
    _
  $region75: #{pvse_forward.1} parent=0 // pred_check_branch
    %65 = sbr.rel (0) target = $region77
  $region76: #{pvse_forward.1} parent=0 // pred_region
    _
  $region77: #{pvse_forward.1} parent=0 // pred_fallthru
    _
  // Predicated region
  $region78: #{pvse_forward.1} parent=0 // pred_check
    _
  $region79: #{pvse_forward.1} parent=0 // pred_check_branch
    %67 = sbr.rel (0) target = $region81
  $region80: #{pvse_forward.1} parent=0 // pred_region
    _
  $region81: #{pvse_forward.1} parent=0 // pred_fallthru
    _
  // Predicated region
  $region82: #{pvse_forward.1} parent=0 // pred_check
    _
  $region83: #{pvse_forward.1} parent=0 // pred_check_branch
    %69 = sbr.rel (0) target = $region85
  $region84: #{pvse_forward.1} parent=0 // pred_region
    _
  $region85: #{pvse_forward.1} parent=0 // pred_fallthru
    _
  // Predicated region
  $region86: #{pvse_forward.1} parent=0 // pred_check
    _
  $region87: #{pvse_forward.1} parent=0 // pred_check_branch
    %71 = sbr.rel (0) target = $region89
  $region88: #{pvse_forward.1} parent=0 // pred_region
    _
  $region89: #{pvse_forward.1} parent=0 // pred_fallthru
    _
  // Predicated region
  $region90: #{pvse_forward.1} parent=0 // pred_check
    _
  $region91: #{pvse_forward.1} parent=0 // pred_check_branch
    %73 = sbr.rel (0) target = $region93
  $region92: #{pvse_forward.1} parent=0 // pred_region
    _
  $region93: #{pvse_forward.1} parent=0 // pred_fallthru
    _
  %v75 = vld [vmem:[%s0] sm:$0xff]
  %v76 = vld [vmem:[%s0 + $0x8] sm:$0xff]
  %v77 = vld [vmem:[%s0 + $0x10] sm:$0xff]
  %v78 = vld [vmem:[%s0 + $0x18] sm:$0xff]
  %v79 = vld [vmem:[%s0 + $0x20] sm:$0xff]
  %v80 = vld [vmem:[%s0 + $0x28] sm:$0xff]
  %v81 = vld [vmem:[%s0 + $0x30] sm:$0xff]
  %v82 = vld [vmem:[%s0 + $0x38] sm:$0xff]
  %v83 = vld [vmem:[%s0 + $0x40] sm:$0xff]
  %v84 = vld [vmem:[%s0 + $0x48] sm:$0xff]
  %v85 = vld [vmem:[%s0 + $0x50] sm:$0xff]
  %v86 = vld [vmem:[%s0 + $0x58] sm:$0xff]
  %v87 = vld [vmem:[%s0 + $0x60] sm:$0xff]
  %v88 = vld [vmem:[%s0 + $0x68] sm:$0xff]
  %v89 = vld [vmem:[%s3] sm:$0xff]
  %v90 = vld [vmem:[%s3 + $0x8] sm:$0xff]
  %v91 = vld [vmem:[%s3 + $0x10] sm:$0xff]
  %v92 = vld [vmem:[%s3 + $0x18] sm:$0xff]
  %v93 = vld [vmem:[%s3 + $0x20] sm:$0xff]
  %v94 = vld [vmem:[%s3 + $0x28] sm:$0xff]
  %v95 = vpack.c.bf16 %v76, %v75
  %v96 = vpack.c.bf16 %v78, %v77
  %v97 = vpack.c.bf16 %v80, %v79
  %v98 = vpack.c.bf16 %v82, %v81
  %v99 = vpack.c.bf16 %v84, %v83
  %v100 = vpack.c.bf16 %v86, %v85
  %v101 = vpack.c.bf16 %v88, %v87
  %v102 = vpack.c.bf16 %v90, %v89
  %v103 = vpack.c.bf16 %v92, %v91
  %v104 = vpack.c.bf16 %v94, %v93
  %vm105 = vcmask 392192
  %v107 = vsel %vm105, %v95, 0
  %v110 = vsel %vm105, %v96, 0
  %v113 = vsel %vm105, %v97, 0
  %v116 = vsel %vm105, %v98, 0
  %v119 = vsel %vm105, %v99, 0
  %v122 = vsel %vm105, %v100, 0
  %v125 = vsel %vm105, %v101, 0
  %127 = vmatprep.subr.bf16.mxu0 0
  %128 = vmatpush1.bf16.msra.mxu0 %v102
  %129 = vmatprep.subr.bf16.mxu0 0
  %130 = vmatpush1.bf16.msra.mxu0 %v103
  %131 = vmatprep.subr.bf16.mxu0 0
  %132 = vmatpush1.bf16.msra.mxu0 %v104
  %133 = vmatprep.subr.bf16.mxu0 0
  %134 = vmatpush1.bf16.msra.mxu0 0
  %135 = vmatprep.subr.bf16.mxu0 0
  %136 = vmatpush1.bf16.msra.mxu0 0
  %137 = vmatprep.subr.bf16.mxu0 0
  %138 = vmatpush1.bf16.msra.mxu0 0
  %139 = vmatprep.subr.bf16.mxu0 0
  %140 = vmatpush1.bf16.msra.mxu0 0
  %141 = vmatprep.subr.bf16.mxu0 0
  %142 = vmatpush1.bf16.msra.mxu0 0
  %143 = vmatprep.subr.bf16.mxu0 0
  %144 = vmatpush1.bf16.msra.mxu0 0
  %145 = vmatprep.subr.bf16.mxu0 0
  %146 = vmatpush1.bf16.msra.mxu0 0
  %147 = vmatprep.subr.bf16.mxu0 0
  %148 = vmatpush1.bf16.msra.mxu0 0
  %149 = vmatprep.subr.bf16.mxu0 0
  %150 = vmatpush1.bf16.msra.mxu0 0
  %151 = vmatprep.subr.bf16.mxu0 0
  %152 = vmatpush1.bf16.msra.mxu0 0
  %153 = vmatprep.subr.bf16.mxu0 0
  %154 = vmatpush1.bf16.msra.mxu0 0
  %155 = vmatprep.subr.bf16.mxu0 0
  %156 = vmatpush1.bf16.msra.mxu0 0
  %157 = vmatprep.subr.bf16.mxu0 0
  %158 = vmatpush1.bf16.msra.mxu0 0
  %159 = vmatprep.mubr.bf16.mxu0 0
  %160 = vmatmul.mubr.bf16.gmra.mrb[0].mxu0 %v107
  %v161 = vpop.f32.mrb[0].mxu0
  %v162 = vadd.f32 0.0, %v161
  %v163 = vpop.f32.mrb[0].mxu0
  %v164 = vpop.f32.mrb[0].mxu0
  %v165 = vadd.f32 0.0, %v164
  %v166 = vpop.f32.mrb[0].mxu0
  %167 = vmatprep.mubr.bf16.mxu0 0
  %168 = vmatmul.mubr.bf16.gmra.mrb[0].mxu0 %v110
  %v169 = vpop.f32.mrb[0].mxu0
  %v170 = vadd.f32 0.0, %v169
  %v171 = vpop.f32.mrb[0].mxu0
  %v172 = vpop.f32.mrb[0].mxu0
  %v173 = vadd.f32 0.0, %v172
  %v174 = vpop.f32.mrb[0].mxu0
  %175 = vmatprep.mubr.bf16.mxu0 0
  %176 = vmatmul.mubr.bf16.gmra.mrb[0].mxu0 %v113
  %v177 = vpop.f32.mrb[0].mxu0
  %v178 = vadd.f32 0.0, %v177
  %v179 = vpop.f32.mrb[0].mxu0
  %v180 = vpop.f32.mrb[0].mxu0
  %v181 = vadd.f32 0.0, %v180
  %v182 = vpop.f32.mrb[0].mxu0
  %183 = vmatprep.mubr.bf16.mxu0 0
  %184 = vmatmul.mubr.bf16.gmra.mrb[0].mxu0 %v116
  %v185 = vpop.f32.mrb[0].mxu0
  %v186 = vadd.f32 0.0, %v185
  %v187 = vpop.f32.mrb[0].mxu0
  %v188 = vpop.f32.mrb[0].mxu0
  %v189 = vadd.f32 0.0, %v188
  %v190 = vpop.f32.mrb[0].mxu0
  %191 = vmatprep.mubr.bf16.mxu0 0
  %192 = vmatmul.mubr.bf16.gmra.mrb[0].mxu0 %v119
  %v193 = vpop.f32.mrb[0].mxu0
  %v194 = vadd.f32 0.0, %v193
  %v195 = vpop.f32.mrb[0].mxu0
  %v196 = vpop.f32.mrb[0].mxu0
  %v197 = vadd.f32 0.0, %v196
  %v198 = vpop.f32.mrb[0].mxu0
  %199 = vmatprep.mubr.bf16.mxu0 0
  %200 = vmatmul.mubr.bf16.gmra.mrb[0].mxu0 %v122
  %v201 = vpop.f32.mrb[0].mxu0
  %v202 = vadd.f32 0.0, %v201
  %v203 = vpop.f32.mrb[0].mxu0
  %v204 = vpop.f32.mrb[0].mxu0
  %v205 = vadd.f32 0.0, %v204
  %v206 = vpop.f32.mrb[0].mxu0
  %207 = vmatprep.mubr.bf16.mxu0 0
  %208 = vmatmul.mubr.bf16.gmra.mrb[0].mxu0 %v125
  %v209 = vpop.f32.mrb[0].mxu0
  %v210 = vadd.f32 0.0, %v209
  %v211 = vpop.f32.mrb[0].mxu0
  %v212 = vpop.f32.mrb[0].mxu0
  %v213 = vadd.f32 0.0, %v212
  %v214 = vpop.f32.mrb[0].mxu0
  %215 = vdwg.mxu0
  %vm216 = vcmask 523264
  %v217 = vsel %vm216, %v162, 0.0
  %v218 = vsel %vm216, %v165, 0.0
  %v219 = vadd.f32 %v217, %v218
  %v220 = vsel %vm216, %v170, 0.0
  %v221 = vadd.f32 %v219, %v220
  %v222 = vsel %vm216, %v173, 0.0
  %v223 = vadd.f32 %v221, %v222
  %v224 = vsel %vm216, %v178, 0.0
  %v225 = vadd.f32 %v223, %v224
  %v226 = vsel %vm216, %v181, 0.0
  %v227 = vadd.f32 %v225, %v226
  %v228 = vsel %vm216, %v186, 0.0
  %v229 = vadd.f32 %v227, %v228
  %v230 = vrot.slane %v229, 4
  %v231 = vadd.f32 %v229, %v230
  %v232 = vrot.slane %v231, 2
  %v233 = vadd.f32 %v231, %v232
  %v234 = vrot.slane %v233, 1
  %v235 = vadd.f32 %v233, %v234
  %v236 = vsel %vm216, %v189, 0.0
  %v237 = vsel %vm216, %v194, 0.0
  %v238 = vadd.f32 %v236, %v237
  %v239 = vsel %vm216, %v197, 0.0
  %v240 = vadd.f32 %v238, %v239
  %v241 = vsel %vm216, %v202, 0.0
  %v242 = vadd.f32 %v240, %v241
  %v243 = vsel %vm216, %v205, 0.0
  %v244 = vadd.f32 %v242, %v243
  %v245 = vsel %vm216, %v210, 0.0
  %v246 = vadd.f32 %v244, %v245
  %v247 = vsel %vm216, %v213, 0.0
  %v248 = vadd.f32 %v246, %v247
  %v249 = vrot.slane %v248, 4
  %v250 = vadd.f32 %v248, %v249
  %v251 = vrot.slane %v250, 2
  %v252 = vadd.f32 %v250, %v251
  %v253 = vrot.slane %v252, 1
  %v254 = vadd.f32 %v252, %v253
  %v255 = vmul.f32 %v235, 0.020408163
  %v256 = vmul.f32 %v254, 0.020408163
  %v257 = vld [vmem:[%s4] sm:$0xff]
  %v258 = vld [vmem:[%s4 + $0x8] sm:$0xff]
  %v259 = vld [vmem:[%s4 + $0x10] sm:$0xff]
  %v260 = vld [vmem:[%s4 + $0x18] sm:$0xff]
  %v261 = vld [vmem:[%s4 + $0x20] sm:$0xff]
  %v262 = vld [vmem:[%s4 + $0x28] sm:$0xff]
  %v263 = vld [vmem:[%s4 + $0x30] sm:$0xff]
  %v264 = vld [vmem:[%s4 + $0x38] sm:$0xff]
  %v265 = vld [vmem:[%s5] sm:$0x1]
  %v267 = vlaneseq
  %v268 = vshrl.u32 %v267, 7
  %v269 = vsub.s32 0, %v268
  %v270 = vrot.slane %v265, %v269
  %vm274 = vcmask 1041409
  %v275 = vsel %vm274, %v256, %v255
  %v276 = vsel %vm216, %v275, 0
  %278 = vmatprep.subr.mxu0 0.0
  %279 = vmatpush1.msra.mxu0 %v257
  %280 = vmatprep.subr.mxu0 0.0
  %281 = vmatpush1.msra.mxu0 %v258
  %282 = vmatprep.subr.mxu0 0.0
  %283 = vmatpush1.msra.mxu0 %v259
  %284 = vmatprep.subr.mxu0 0.0
  %285 = vmatpush1.msra.mxu0 %v260
  %286 = vmatprep.subr.mxu0 0.0
  %287 = vmatpush1.msra.mxu0 %v261
  %288 = vmatprep.subr.mxu0 0.0
  %289 = vmatpush1.msra.mxu0 %v262
  %290 = vmatprep.subr.mxu0 0.0
  %291 = vmatpush1.msra.mxu0 %v263
  %292 = vmatprep.subr.mxu0 0.0
  %293 = vmatpush1.msra.mxu0 %v264
  %294 = vmatprep.subr.mxu0 0.0
  %295 = vmatpush1.msra.mxu0 0.0
  %296 = vmatprep.subr.mxu0 0.0
  %297 = vmatpush1.msra.mxu0 0.0
  %298 = vmatprep.subr.mxu0 0.0
  %299 = vmatpush1.msra.mxu0 0.0
  %300 = vmatprep.subr.mxu0 0.0
  %301 = vmatpush1.msra.mxu0 0.0
  %302 = vmatprep.subr.mxu0 0.0
  %303 = vmatpush1.msra.mxu0 0.0
  %304 = vmatprep.subr.mxu0 0.0
  %305 = vmatpush1.msra.mxu0 0.0
  %306 = vmatprep.subr.mxu0 0.0
  %307 = vmatpush1.msra.mxu0 0.0
  %308 = vmatprep.subr.mxu0 0.0
  %309 = vmatpush1.msra.mxu0 0.0
  %310 = vmatprep.subr.mxu0 0.0
  %311 = vmatpush1.msra.mxu0 0.0
  %312 = vmatprep.subr.mxu0 0.0
  %313 = vmatpush1.msra.mxu0 0.0
  %314 = vmatprep.subr.mxu0 0.0
  %315 = vmatpush1.msra.mxu0 0.0
  %316 = vmatprep.subr.mxu0 0.0
  %317 = vmatpush1.msra.mxu0 0.0
  %318 = vmatprep.subr.mxu0 0.0
  %319 = vmatpush1.msra.mxu0 0.0
  %320 = vmatprep.subr.mxu0 0.0
  %321 = vmatpush1.msra.mxu0 0.0
  %322 = vmatprep.subr.mxu0 0.0
  %323 = vmatpush1.msra.mxu0 0.0
  %324 = vmatprep.subr.mxu0 0.0
  %325 = vmatpush1.msra.mxu0 0.0
  %326 = vmatprep.subr.mxu0 0.0
  %327 = vmatpush1.msra.mxu0 0.0
  %328 = vmatprep.subr.mxu0 0.0
  %329 = vmatpush1.msra.mxu0 0.0
  %330 = vmatprep.subr.mxu0 0.0
  %331 = vmatpush1.msra.mxu0 0.0
  %332 = vmatprep.subr.mxu0 0.0
  %333 = vmatpush1.msra.mxu0 0.0
  %334 = vmatprep.subr.mxu0 0.0
  %335 = vmatpush1.msra.mxu0 0.0
  %336 = vmatprep.subr.mxu0 0.0
  %337 = vmatpush1.msra.mxu0 0.0
  %338 = vmatprep.subr.mxu0 0.0
  %339 = vmatpush1.msra.mxu0 0.0
  %340 = vmatprep.subr.mxu0 0.0
  %341 = vmatpush1.msra.mxu0 0.0
  %342 = vmatprep.mubr.f32.mxu0 0.0
  %343 = vmatmul.mubr.f32.gmra.mrb[0].mxu0 %v276
  %v344 = vpop.f32.mrb[0].mxu0
  %v345 = vadd.f32 %v270, %v344
  %v346 = vpop.f32.mrb[0].mxu0
  %347 = vdwg.mxu0
  %v348 = vlaneseq
  %v349 = vand.u32 %v348, 127
  %vm350 = vcmp.ge.s32.totalorder %v349, 49
  %v351 = vld [vmem:[%s6] sm:$0xff]
  %v352 = vld [vmem:[%s6 + $0x8] sm:$0xff]
  %v353 = vld [vmem:[%s6 + $0x10] sm:$0xff]
  %v354 = vld [vmem:[%s6 + $0x18] sm:$0xff]
  %v355 = vld [vmem:[%s6 + $0x20] sm:$0xff]
  %v356 = vld [vmem:[%s6 + $0x28] sm:$0xff]
  %v357 = vld [vmem:[%s6 + $0x30] sm:$0xff]
  %v358 = vld [vmem:[%s6 + $0x38] sm:$0xff]
  %v359 = vld [vmem:[%s7] sm:$0x3]
  %v360 = vld [vmem:[%s8] sm:$0xff]
  %v361 = vld [vmem:[%s8 + $0x8] sm:$0xff]
  %v362 = vld [vmem:[%s8 + $0x10] sm:$0xff]
  %v363 = vld [vmem:[%s8 + $0x18] sm:$0xff]
  %v364 = vld [vmem:[%s9] sm:$0x1]
  %v365 = vld [vmem:[%s10] sm:$0x1]
  %v366 = vld [vmem:[%s11] sm:$0x1]
  %v367 = vpack.c.bf16 %v165, %v162
  %v368 = vpack.c.bf16 %v173, %v170
  %v369 = vpack.c.bf16 %v181, %v178
  %v370 = vpack.c.bf16 %v189, %v186
  %v371 = vpack.c.bf16 %v197, %v194
  %v372 = vpack.c.bf16 %v205, %v202
  %v373 = vpack.c.bf16 %v213, %v210
  %v374 = vpack.c.bf16 %v352, %v351
  %v375 = vpack.c.bf16 %v354, %v353
  %v376 = vpack.c.bf16 %v356, %v355
  %v377 = vpack.c.bf16 %v358, %v357
  %v379 = vsel %vm216, %v367, 0
  %v382 = vsel %vm216, %v368, 0
  %v385 = vsel %vm216, %v369, 0
  %v388 = vsel %vm216, %v370, 0
  %v391 = vsel %vm216, %v371, 0
  %v394 = vsel %vm216, %v372, 0
  %v397 = vsel %vm216, %v373, 0
  %399 = vmatprep.subr.bf16.mxu0 0
  %400 = vmatpush1.bf16.msra.mxu0 %v374
  %401 = vmatprep.subr.bf16.mxu0 0
  %402 = vmatpush1.bf16.msra.mxu0 %v375
  %403 = vmatprep.subr.bf16.mxu0 0
  %404 = vmatpush1.bf16.msra.mxu0 %v376
  %405 = vmatprep.subr.bf16.mxu0 0
  %406 = vmatpush1.bf16.msra.mxu0 %v377
  %407 = vmatprep.subr.bf16.mxu0 0
  %408 = vmatpush1.bf16.msra.mxu0 0
  %409 = vmatprep.subr.bf16.mxu0 0
  %410 = vmatpush1.bf16.msra.mxu0 0
  %411 = vmatprep.subr.bf16.mxu0 0
  %412 = vmatpush1.bf16.msra.mxu0 0
  %413 = vmatprep.subr.bf16.mxu0 0
  %414 = vmatpush1.bf16.msra.mxu0 0
  %415 = vmatprep.subr.bf16.mxu0 0
  %416 = vmatpush1.bf16.msra.mxu0 0
  %417 = vmatprep.subr.bf16.mxu0 0
  %418 = vmatpush1.bf16.msra.mxu0 0
  %419 = vmatprep.subr.bf16.mxu0 0
  %420 = vmatpush1.bf16.msra.mxu0 0
  %421 = vmatprep.subr.bf16.mxu0 0
  %422 = vmatpush1.bf16.msra.mxu0 0
  %423 = vmatprep.subr.bf16.mxu0 0
  %424 = vmatpush1.bf16.msra.mxu0 0
  %425 = vmatprep.subr.bf16.mxu0 0
  %426 = vmatpush1.bf16.msra.mxu0 0
  %427 = vmatprep.subr.bf16.mxu0 0
  %428 = vmatpush1.bf16.msra.mxu0 0
  %429 = vmatprep.subr.bf16.mxu0 0
  %430 = vmatpush1.bf16.msra.mxu0 0
  %431 = vmatprep.mubr.bf16.mxu0 0
  %432 = vmatmul.mubr.bf16.gmra.mrb[0].mxu0 %v379
  %v433 = vpop.f32.mrb[0].mxu0
  %v434 = vadd.f32 0.0, %v433
  %v435 = vpop.f32.mrb[0].mxu0
  %v436 = vpop.f32.mrb[0].mxu0
  %v437 = vadd.f32 0.0, %v436
  %v438 = vpop.f32.mrb[0].mxu0
  %439 = vmatprep.mubr.bf16.mxu0 0
  %440 = vmatmul.mubr.bf16.gmra.mrb[0].mxu0 %v382
  %v441 = vpop.f32.mrb[0].mxu0
  %v442 = vadd.f32 0.0, %v441
  %v443 = vpop.f32.mrb[0].mxu0
  %v444 = vpop.f32.mrb[0].mxu0
  %v445 = vadd.f32 0.0, %v444
  %v446 = vpop.f32.mrb[0].mxu0
  %447 = vmatprep.mubr.bf16.mxu0 0
  %448 = vmatmul.mubr.bf16.gmra.mrb[0].mxu0 %v385
  %v449 = vpop.f32.mrb[0].mxu0
  %v450 = vadd.f32 0.0, %v449
  %v451 = vpop.f32.mrb[0].mxu0
  %v452 = vpop.f32.mrb[0].mxu0
  %v453 = vadd.f32 0.0, %v452
  %v454 = vpop.f32.mrb[0].mxu0
  %455 = vmatprep.mubr.bf16.mxu0 0
  %456 = vmatmul.mubr.bf16.gmra.mrb[0].mxu0 %v388
  %v457 = vpop.f32.mrb[0].mxu0
  %v458 = vadd.f32 0.0, %v457
  %v459 = vpop.f32.mrb[0].mxu0
  %v460 = vpop.f32.mrb[0].mxu0
  %v461 = vadd.f32 0.0, %v460
  %v462 = vpop.f32.mrb[0].mxu0
  %463 = vmatprep.mubr.bf16.mxu0 0
  %464 = vmatmul.mubr.bf16.gmra.mrb[0].mxu0 %v391
  %v465 = vpop.f32.mrb[0].mxu0
  %v466 = vadd.f32 0.0, %v465
  %v467 = vpop.f32.mrb[0].mxu0
  %v468 = vpop.f32.mrb[0].mxu0
  %v469 = vadd.f32 0.0, %v468
  %v470 = vpop.f32.mrb[0].mxu0
  %471 = vmatprep.mubr.bf16.mxu0 0
  %472 = vmatmul.mubr.bf16.gmra.mrb[0].mxu0 %v394
  %v473 = vpop.f32.mrb[0].mxu0
  %v474 = vadd.f32 0.0, %v473
  %v475 = vpop.f32.mrb[0].mxu0
  %v476 = vpop.f32.mrb[0].mxu0
  %v477 = vadd.f32 0.0, %v476
  %v478 = vpop.f32.mrb[0].mxu0
  %479 = vmatprep.mubr.bf16.mxu0 0
  %480 = vmatmul.mubr.bf16.gmra.mrb[0].mxu0 %v397
  %v481 = vpop.f32.mrb[0].mxu0
  %v482 = vadd.f32 0.0, %v481
  %v483 = vpop.f32.mrb[0].mxu0
  %v484 = vpop.f32.mrb[0].mxu0
  %v485 = vadd.f32 0.0, %v484
  %v486 = vpop.f32.mrb[0].mxu0
  %487 = vdwg.mxu0
  %v488 = vtanh.pop %v434
  %v489 = vtanh.pop %v437
  %v490 = vtanh.pop %v442
  %v491 = vtanh.pop %v445
  %v492 = vtanh.pop %v450
  %v493 = vtanh.pop %v453
  %v494 = vtanh.pop %v458
  %v495 = vtanh.pop %v461
  %v496 = vtanh.pop %v466
  %v497 = vtanh.pop %v469
  %v498 = vtanh.pop %v474
  %v499 = vtanh.pop %v477
  %v500 = vtanh.pop %v482
  %v501 = vtanh.pop %v485
  %vm502 = vcmask 261120
  %v504 = vsel %vm502, %v359, 0
  %v507 = vsel %vm502, %v488, 0
  %v510 = vsel %vm502, %v489, 0
  %v513 = vsel %vm502, %v490, 0
  %v516 = vsel %vm502, %v491, 0
  %v519 = vsel %vm502, %v492, 0
  %v522 = vsel %vm502, %v493, 0
  %v525 = vsel %vm502, %v494, 0
  %527 = vmatprep.subr.mxu0 0.0
  %528 = vmatpush1.xpose.msra.mxu0 %v507
  %529 = vmatprep.subr.mxu0 0.0
  %530 = vmatpush1.xpose.msra.mxu0 %v510
  %531 = vmatprep.subr.mxu0 0.0
  %532 = vmatpush1.xpose.msra.mxu0 %v513
  %533 = vmatprep.subr.mxu0 0.0
  %534 = vmatpush1.xpose.msra.mxu0 %v516
  %535 = vmatprep.subr.mxu0 0.0
  %536 = vmatpush1.xpose.msra.mxu0 %v519
  %537 = vmatprep.subr.mxu0 0.0
  %538 = vmatpush1.xpose.msra.mxu0 %v522
  %539 = vmatprep.subr.mxu0 0.0
  %540 = vmatpush1.xpose.msra.mxu0 %v525
  %541 = vmatprep.subr.mxu0 0.0
  %542 = vmatpush1.xpose.msra.mxu0 0.0
  %543 = vmatprep.subr.mxu0 0.0
  %544 = vmatpush1.xpose.msra.mxu0 0.0
  %545 = vmatprep.subr.mxu0 0.0
  %546 = vmatpush1.xpose.msra.mxu0 0.0
  %547 = vmatprep.subr.mxu0 0.0
  %548 = vmatpush1.xpose.msra.mxu0 0.0
  %549 = vmatprep.subr.mxu0 0.0
  %550 = vmatpush1.xpose.msra.mxu0 0.0
  %551 = vmatprep.subr.mxu0 0.0
  %552 = vmatpush1.xpose.msra.mxu0 0.0
  %553 = vmatprep.subr.mxu0 0.0
  %554 = vmatpush1.xpose.msra.mxu0 0.0
  %555 = vmatprep.subr.mxu0 0.0
  %556 = vmatpush1.xpose.msra.mxu0 0.0
  %557 = vmatprep.subr.mxu0 0.0
  %558 = vmatpush1.xpose.msra.mxu0 0.0
  %559 = vmatprep.subr.mxu0 0.0
  %560 = vmatpush1.xpose.msra.mxu0 0.0
  %561 = vmatprep.subr.mxu0 0.0
  %562 = vmatpush1.xpose.msra.mxu0 0.0
  %563 = vmatprep.subr.mxu0 0.0
  %564 = vmatpush1.xpose.msra.mxu0 0.0
  %565 = vmatprep.subr.mxu0 0.0
  %566 = vmatpush1.xpose.msra.mxu0 0.0
  %567 = vmatprep.subr.mxu0 0.0
  %568 = vmatpush1.xpose.msra.mxu0 0.0
  %569 = vmatprep.subr.mxu0 0.0
  %570 = vmatpush1.xpose.msra.mxu0 0.0
  %571 = vmatprep.subr.mxu0 0.0
  %572 = vmatpush1.xpose.msra.mxu0 0.0
  %573 = vmatprep.subr.mxu0 0.0
  %574 = vmatpush1.xpose.msra.mxu0 0.0
  %575 = vmatprep.subr.mxu0 0.0
  %576 = vmatpush1.xpose.msra.mxu0 0.0
  %577 = vmatprep.subr.mxu0 0.0
  %578 = vmatpush1.xpose.msra.mxu0 0.0
  %579 = vmatprep.subr.mxu0 0.0
  %580 = vmatpush1.xpose.msra.mxu0 0.0
  %581 = vmatprep.subr.mxu0 0.0
  %582 = vmatpush1.xpose.msra.mxu0 0.0
  %583 = vmatprep.subr.mxu0 0.0
  %584 = vmatpush1.xpose.msra.mxu0 0.0
  %585 = vmatprep.subr.mxu0 0.0
  %586 = vmatpush1.xpose.msra.mxu0 0.0
  %587 = vmatprep.subr.mxu0 0.0
  %588 = vmatpush1.xpose.msra.mxu0 0.0
  %589 = vmatprep.subr.mxu0 0.0
  %590 = vmatpush1.xpose.msra.mxu0 0.0
  %591 = vmatprep.mubr.f32.mxu0 0.0
  %592 = vmatmul.mubr.f32.gmra.mrb[0].mxu0 %v504
  %v593 = vpop.f32.mrb[0].mxu0
  %v594 = vadd.f32 0.0, %v593
  %v595 = vpop.f32.mrb[0].mxu0
  %596 = vdwg.mxu0
  %v598 = vsel %vm502, %v495, 0
  %v601 = vsel %vm502, %v496, 0
  %v604 = vsel %vm502, %v497, 0
  %v607 = vsel %vm502, %v498, 0
  %v610 = vsel %vm502, %v499, 0
  %v613 = vsel %vm502, %v500, 0
  %v616 = vsel %vm502, %v501, 0
  %618 = vmatprep.subr.mxu0 0.0
  %619 = vmatpush1.xpose.msra.mxu0 %v598
  %620 = vmatprep.subr.mxu0 0.0
  %621 = vmatpush1.xpose.msra.mxu0 %v601
  %622 = vmatprep.subr.mxu0 0.0
  %623 = vmatpush1.xpose.msra.mxu0 %v604
  %624 = vmatprep.subr.mxu0 0.0
  %625 = vmatpush1.xpose.msra.mxu0 %v607
  %626 = vmatprep.subr.mxu0 0.0
  %627 = vmatpush1.xpose.msra.mxu0 %v610
  %628 = vmatprep.subr.mxu0 0.0
  %629 = vmatpush1.xpose.msra.mxu0 %v613
  %630 = vmatprep.subr.mxu0 0.0
  %631 = vmatpush1.xpose.msra.mxu0 %v616
  %632 = vmatprep.subr.mxu0 0.0
  %633 = vmatpush1.xpose.msra.mxu0 0.0
  %634 = vmatprep.subr.mxu0 0.0
  %635 = vmatpush1.xpose.msra.mxu0 0.0
  %636 = vmatprep.subr.mxu0 0.0
  %637 = vmatpush1.xpose.msra.mxu0 0.0
  %638 = vmatprep.subr.mxu0 0.0
  %639 = vmatpush1.xpose.msra.mxu0 0.0
  %640 = vmatprep.subr.mxu0 0.0
  %641 = vmatpush1.xpose.msra.mxu0 0.0
  %642 = vmatprep.subr.mxu0 0.0
  %643 = vmatpush1.xpose.msra.mxu0 0.0
  %644 = vmatprep.subr.mxu0 0.0
  %645 = vmatpush1.xpose.msra.mxu0 0.0
  %646 = vmatprep.subr.mxu0 0.0
  %647 = vmatpush1.xpose.msra.mxu0 0.0
  %648 = vmatprep.subr.mxu0 0.0
  %649 = vmatpush1.xpose.msra.mxu0 0.0
  %650 = vmatprep.subr.mxu0 0.0
  %651 = vmatpush1.xpose.msra.mxu0 0.0
  %652 = vmatprep.subr.mxu0 0.0
  %653 = vmatpush1.xpose.msra.mxu0 0.0
  %654 = vmatprep.subr.mxu0 0.0
  %655 = vmatpush1.xpose.msra.mxu0 0.0
  %656 = vmatprep.subr.mxu0 0.0
  %657 = vmatpush1.xpose.msra.mxu0 0.0
  %658 = vmatprep.subr.mxu0 0.0
  %659 = vmatpush1.xpose.msra.mxu0 0.0
  %660 = vmatprep.subr.mxu0 0.0
  %661 = vmatpush1.xpose.msra.mxu0 0.0
  %662 = vmatprep.subr.mxu0 0.0
  %663 = vmatpush1.xpose.msra.mxu0 0.0
  %664 = vmatprep.subr.mxu0 0.0
  %665 = vmatpush1.xpose.msra.mxu0 0.0
  %666 = vmatprep.subr.mxu0 0.0
  %667 = vmatpush1.xpose.msra.mxu0 0.0
  %668 = vmatprep.subr.mxu0 0.0
  %669 = vmatpush1.xpose.msra.mxu0 0.0
  %670 = vmatprep.subr.mxu0 0.0
  %671 = vmatpush1.xpose.msra.mxu0 0.0
  %672 = vmatprep.subr.mxu0 0.0
  %673 = vmatpush1.xpose.msra.mxu0 0.0
  %674 = vmatprep.subr.mxu0 0.0
  %675 = vmatpush1.xpose.msra.mxu0 0.0
  %676 = vmatprep.subr.mxu0 0.0
  %677 = vmatpush1.xpose.msra.mxu0 0.0
  %678 = vmatprep.subr.mxu0 0.0
  %679 = vmatpush1.xpose.msra.mxu0 0.0
  %680 = vmatprep.subr.mxu0 0.0
  %681 = vmatpush1.xpose.msra.mxu0 0.0
  %682 = vmatprep.mubr.f32.mxu0 0.0
  %683 = vmatmul.mubr.f32.gmra.mrb[0].mxu0 %v504
  %v684 = vpop.f32.mrb[0].mxu0
  %v685 = vadd.f32 0.0, %v684
  %v686 = vpop.f32.mrb[0].mxu0
  %687 = vdwg.mxu0
  %v688 = vsel %vm350, 1, 0
  %vm689 = vcmp.eq.s32.totalorder %v688, 1
  %v690 = vsel %vm689, -1e+30, %v594
  %v691 = vsel %vm689, -1e+30, %v685
  %vm692 = vcmask 451584
  %v693 = vsel %vm692, %v690, -inf
  %694 = vmax.xlane.f32.xlu0 %v693
  %v695 = vpop.xlane.xlu0 %694
  %v696 = vsel %vm692, %v691, -inf
  %697 = vmax.xlane.f32.xlu0 %v696
  %v698 = vpop.xlane.xlu0 %697
  %v699 = vsub.f32 %v690, %v695
  %v700 = vsub.f32 %v691, %v698
  %v701 = vmul.f32 %v699, 1.442695
  %v702 = vpow.pop %v701
  %v703 = vmul.f32 %v700, 1.442695
  %v704 = vpow.pop %v703
  %v705 = vsel %vm692, %v702, 0.0
  %706 = vadd.xlane.f32.xlu0 %v705
  %v707 = vpop.xlane.xlu0 %706
  %v708 = vsel %vm692, %v704, 0.0
  %709 = vadd.xlane.f32.xlu0 %v708
  %v710 = vpop.xlane.xlu0 %709
  %v711 = vrcp.pop %v707
  %v712 = vrcp.pop %v710
  %v713 = vmul.f32 %v702, %v711
  %v714 = vmul.f32 %v704, %v712
  %vm715 = vcmask 457728
  %v717 = vsel %vm715, %v713, 0
  %719 = vmatprep.subr.mxu0 0.0
  %720 = vmatpush1.msra.mxu0 %v162
  %721 = vmatprep.subr.mxu0 0.0
  %722 = vmatpush1.msra.mxu0 %v165
  %723 = vmatprep.subr.mxu0 0.0
  %724 = vmatpush1.msra.mxu0 %v170
  %725 = vmatprep.subr.mxu0 0.0
  %726 = vmatpush1.msra.mxu0 %v173
  %727 = vmatprep.subr.mxu0 0.0
  %728 = vmatpush1.msra.mxu0 %v178
  %729 = vmatprep.subr.mxu0 0.0
  %730 = vmatpush1.msra.mxu0 %v181
  %731 = vmatprep.subr.mxu0 0.0
  %732 = vmatpush1.msra.mxu0 %v186
  %733 = vmatprep.subr.mxu0 0.0
  %734 = vmatpush1.msra.mxu0 0.0
  %735 = vmatprep.subr.mxu0 0.0
  %736 = vmatpush1.msra.mxu0 0.0
  %737 = vmatprep.subr.mxu0 0.0
  %738 = vmatpush1.msra.mxu0 0.0
  %739 = vmatprep.subr.mxu0 0.0
  %740 = vmatpush1.msra.mxu0 0.0
  %741 = vmatprep.subr.mxu0 0.0
  %742 = vmatpush1.msra.mxu0 0.0
  %743 = vmatprep.subr.mxu0 0.0
  %744 = vmatpush1.msra.mxu0 0.0
  %745 = vmatprep.subr.mxu0 0.0
  %746 = vmatpush1.msra.mxu0 0.0
  %747 = vmatprep.subr.mxu0 0.0
  %748 = vmatpush1.msra.mxu0 0.0
  %749 = vmatprep.subr.mxu0 0.0
  %750 = vmatpush1.msra.mxu0 0.0
  %751 = vmatprep.subr.mxu0 0.0
  %752 = vmatpush1.msra.mxu0 0.0
  %753 = vmatprep.subr.mxu0 0.0
  %754 = vmatpush1.msra.mxu0 0.0
  %755 = vmatprep.subr.mxu0 0.0
  %756 = vmatpush1.msra.mxu0 0.0
  %757 = vmatprep.subr.mxu0 0.0
  %758 = vmatpush1.msra.mxu0 0.0
  %759 = vmatprep.subr.mxu0 0.0
  %760 = vmatpush1.msra.mxu0 0.0
  %761 = vmatprep.subr.mxu0 0.0
  %762 = vmatpush1.msra.mxu0 0.0
  %763 = vmatprep.subr.mxu0 0.0
  %764 = vmatpush1.msra.mxu0 0.0
  %765 = vmatprep.subr.mxu0 0.0
  %766 = vmatpush1.msra.mxu0 0.0
  %767 = vmatprep.subr.mxu0 0.0
  %768 = vmatpush1.msra.mxu0 0.0
  %769 = vmatprep.subr.mxu0 0.0
  %770 = vmatpush1.msra.mxu0 0.0
  %771 = vmatprep.subr.mxu0 0.0
  %772 = vmatpush1.msra.mxu0 0.0
  %773 = vmatprep.subr.mxu0 0.0
  %774 = vmatpush1.msra.mxu0 0.0
  %775 = vmatprep.subr.mxu0 0.0
  %776 = vmatpush1.msra.mxu0 0.0
  %777 = vmatprep.subr.mxu0 0.0
  %778 = vmatpush1.msra.mxu0 0.0
  %779 = vmatprep.subr.mxu0 0.0
  %780 = vmatpush1.msra.mxu0 0.0
  %781 = vmatprep.subr.mxu0 0.0
  %782 = vmatpush1.msra.mxu0 0.0
  %783 = vmatprep.mubr.f32.mxu0 0.0
  %784 = vmatmul.mubr.f32.gmra.mrb[0].mxu0 %v717
  %v785 = vpop.f32.mrb[0].mxu0
  %v786 = vadd.f32 0.0, %v785
  %v787 = vpop.f32.mrb[0].mxu0
  %788 = vdwg.mxu0
  %v790 = vsel %vm715, %v714, 0
  %792 = vmatprep.subr.mxu0 0.0
  %793 = vmatpush1.msra.mxu0 %v189
  %794 = vmatprep.subr.mxu0 0.0
  %795 = vmatpush1.msra.mxu0 %v194
  %796 = vmatprep.subr.mxu0 0.0
  %797 = vmatpush1.msra.mxu0 %v197
  %798 = vmatprep.subr.mxu0 0.0
  %799 = vmatpush1.msra.mxu0 %v202
  %800 = vmatprep.subr.mxu0 0.0
  %801 = vmatpush1.msra.mxu0 %v205
  %802 = vmatprep.subr.mxu0 0.0
  %803 = vmatpush1.msra.mxu0 %v210
  %804 = vmatprep.subr.mxu0 0.0
  %805 = vmatpush1.msra.mxu0 %v213
  %806 = vmatprep.subr.mxu0 0.0
  %807 = vmatpush1.msra.mxu0 0.0
  %808 = vmatprep.subr.mxu0 0.0
  %809 = vmatpush1.msra.mxu0 0.0
  %810 = vmatprep.subr.mxu0 0.0
  %811 = vmatpush1.msra.mxu0 0.0
  %812 = vmatprep.subr.mxu0 0.0
  %813 = vmatpush1.msra.mxu0 0.0
  %814 = vmatprep.subr.mxu0 0.0
  %815 = vmatpush1.msra.mxu0 0.0
  %816 = vmatprep.subr.mxu0 0.0
  %817 = vmatpush1.msra.mxu0 0.0
  %818 = vmatprep.subr.mxu0 0.0
  %819 = vmatpush1.msra.mxu0 0.0
  %820 = vmatprep.subr.mxu0 0.0
  %821 = vmatpush1.msra.mxu0 0.0
  %822 = vmatprep.subr.mxu0 0.0
  %823 = vmatpush1.msra.mxu0 0.0
  %824 = vmatprep.subr.mxu0 0.0
  %825 = vmatpush1.msra.mxu0 0.0
  %826 = vmatprep.subr.mxu0 0.0
  %827 = vmatpush1.msra.mxu0 0.0
  %828 = vmatprep.subr.mxu0 0.0
  %829 = vmatpush1.msra.mxu0 0.0
  %830 = vmatprep.subr.mxu0 0.0
  %831 = vmatpush1.msra.mxu0 0.0
  %832 = vmatprep.subr.mxu0 0.0
  %833 = vmatpush1.msra.mxu0 0.0
  %834 = vmatprep.subr.mxu0 0.0
  %835 = vmatpush1.msra.mxu0 0.0
  %836 = vmatprep.subr.mxu0 0.0
  %837 = vmatpush1.msra.mxu0 0.0
  %838 = vmatprep.subr.mxu0 0.0
  %839 = vmatpush1.msra.mxu0 0.0
  %840 = vmatprep.subr.mxu0 0.0
  %841 = vmatpush1.msra.mxu0 0.0
  %842 = vmatprep.subr.mxu0 0.0
  %843 = vmatpush1.msra.mxu0 0.0
  %844 = vmatprep.subr.mxu0 0.0
  %845 = vmatpush1.msra.mxu0 0.0
  %846 = vmatprep.subr.mxu0 0.0
  %847 = vmatpush1.msra.mxu0 0.0
  %848 = vmatprep.subr.mxu0 0.0
  %849 = vmatpush1.msra.mxu0 0.0
  %850 = vmatprep.subr.mxu0 0.0
  %851 = vmatpush1.msra.mxu0 0.0
  %852 = vmatprep.subr.mxu0 0.0
  %853 = vmatpush1.msra.mxu0 0.0
  %854 = vmatprep.subr.mxu0 0.0
  %855 = vmatpush1.msra.mxu0 0.0
  %856 = vmatprep.mubr.f32.mxu0 0.0
  %857 = vmatmul.mubr.f32.gmra.mrb[0].mxu0 %v790
  %v858 = vpop.f32.mrb[0].mxu0
  %v859 = vadd.f32 0.0, %v858
  %v860 = vpop.f32.mrb[0].mxu0
  %861 = vdwg.mxu0
  %v863 = vlaneseq
  %v864 = vshrl.u32 %v863, 7
  %v865 = vsub.s32 0, %v864
  %v866 = vrot.slane %v364, %v865
  %v869 = vcombine.low %v786, %v859
  %v871 = vunpack.c.l.s4 1983009808
  %v872 = vunpack.c.0.s8 %v871
  %v873 = vlaneseq
  %v874 = vshrl.u32 %v873, 7
  %v875 = vsub.s32 %v872, %v874
  %v876 = vrot.slane %v869, %v875
  %v877 = vcombine.low %v866, %v866
  %v879 = vunpack.c.l.s4 1983009808
  %v880 = vunpack.c.0.s8 %v879
  %v881 = vlaneseq
  %v882 = vshrl.u32 %v881, 7
  %v883 = vsub.s32 %v880, %v882
  %v884 = vrot.slane %v877, %v883
  %v886 = vsel %vm216, %v876, 0
  %v889 = vsel %vm216, %v360, 0
  %v892 = vsel %vm216, %v361, 0
  %v895 = vsel %vm216, %v362, 0
  %v898 = vsel %vm216, %v363, 0
  %900 = vmatprep.subr.mxu0 0.0
  %901 = vmatpush1.xpose.msra.mxu0 %v889
  %902 = vmatprep.subr.mxu0 0.0
  %903 = vmatpush1.xpose.msra.mxu0 %v892
  %904 = vmatprep.subr.mxu0 0.0
  %905 = vmatpush1.xpose.msra.mxu0 %v895
  %906 = vmatprep.subr.mxu0 0.0
  %907 = vmatpush1.xpose.msra.mxu0 %v898
  %908 = vmatprep.subr.mxu0 0.0
  %909 = vmatpush1.xpose.msra.mxu0 0.0
  %910 = vmatprep.subr.mxu0 0.0
  %911 = vmatpush1.xpose.msra.mxu0 0.0
  %912 = vmatprep.subr.mxu0 0.0
  %913 = vmatpush1.xpose.msra.mxu0 0.0
  %914 = vmatprep.subr.mxu0 0.0
  %915 = vmatpush1.xpose.msra.mxu0 0.0
  %916 = vmatprep.subr.mxu0 0.0
  %917 = vmatpush1.xpose.msra.mxu0 0.0
  %918 = vmatprep.subr.mxu0 0.0
  %919 = vmatpush1.xpose.msra.mxu0 0.0
  %920 = vmatprep.subr.mxu0 0.0
  %921 = vmatpush1.xpose.msra.mxu0 0.0
  %922 = vmatprep.subr.mxu0 0.0
  %923 = vmatpush1.xpose.msra.mxu0 0.0
  %924 = vmatprep.subr.mxu0 0.0
  %925 = vmatpush1.xpose.msra.mxu0 0.0
  %926 = vmatprep.subr.mxu0 0.0
  %927 = vmatpush1.xpose.msra.mxu0 0.0
  %928 = vmatprep.subr.mxu0 0.0
  %929 = vmatpush1.xpose.msra.mxu0 0.0
  %930 = vmatprep.subr.mxu0 0.0
  %931 = vmatpush1.xpose.msra.mxu0 0.0
  %932 = vmatprep.subr.mxu0 0.0
  %933 = vmatpush1.xpose.msra.mxu0 0.0
  %934 = vmatprep.subr.mxu0 0.0
  %935 = vmatpush1.xpose.msra.mxu0 0.0
  %936 = vmatprep.subr.mxu0 0.0
  %937 = vmatpush1.xpose.msra.mxu0 0.0
  %938 = vmatprep.subr.mxu0 0.0
  %939 = vmatpush1.xpose.msra.mxu0 0.0
  %940 = vmatprep.subr.mxu0 0.0
  %941 = vmatpush1.xpose.msra.mxu0 0.0
  %942 = vmatprep.subr.mxu0 0.0
  %943 = vmatpush1.xpose.msra.mxu0 0.0
  %944 = vmatprep.subr.mxu0 0.0
  %945 = vmatpush1.xpose.msra.mxu0 0.0
  %946 = vmatprep.subr.mxu0 0.0
  %947 = vmatpush1.xpose.msra.mxu0 0.0
  %948 = vmatprep.subr.mxu0 0.0
  %949 = vmatpush1.xpose.msra.mxu0 0.0
  %950 = vmatprep.subr.mxu0 0.0
  %951 = vmatpush1.xpose.msra.mxu0 0.0
  %952 = vmatprep.subr.mxu0 0.0
  %953 = vmatpush1.xpose.msra.mxu0 0.0
  %954 = vmatprep.subr.mxu0 0.0
  %955 = vmatpush1.xpose.msra.mxu0 0.0
  %956 = vmatprep.subr.mxu0 0.0
  %957 = vmatpush1.xpose.msra.mxu0 0.0
  %958 = vmatprep.subr.mxu0 0.0
  %959 = vmatpush1.xpose.msra.mxu0 0.0
  %960 = vmatprep.subr.mxu0 0.0
  %961 = vmatpush1.xpose.msra.mxu0 0.0
  %962 = vmatprep.subr.mxu0 0.0
  %963 = vmatpush1.xpose.msra.mxu0 0.0
  %964 = vmatprep.mubr.f32.mxu0 0.0
  %965 = vmatmul.mubr.f32.gmra.mrb[0].mxu0 %v886
  %v966 = vpop.f32.mrb[0].mxu0
  %v967 = vadd.f32 %v884, %v966
  %v968 = vpop.f32.mrb[0].mxu0
  %969 = vdwg.mxu0
  %v972 = vunpack.c.l.s4 1983009808
  %v973 = vunpack.c.0.s8 %v972
  %v974 = vlaneseq
  %v975 = vshrl.u32 %v974, 7
  %v976 = vsub.s32 %v973, %v975
  %v977 = vrot.slane %v967, %v976
  %v978 = vcombine.high %v977, %v977
  %v981 = vxor.u32 %v977, 2147483648
  %v982 = vxor.u32 %v978, 2147483648
  %v983 = vmul.f32 %v981, 1.442695
  %v984 = vpow.pop %v983
  %v985 = vmul.f32 %v982, 1.442695
  %v986 = vpow.pop %v985
  %v987 = vadd.f32 %v984, 1.0
  %v988 = vadd.f32 %v986, 1.0
  %v989 = vrcp.pop %v987
  %v990 = vmul.f32 1.0, %v989
  %v991 = vrcp.pop %v988
  %v992 = vmul.f32 1.0, %v991
  %v995 = vunpack.c.l.s4 1966171168
  %v996 = vunpack.c.0.s8 %v995
  %v997 = vlaneseq
  %v998 = vshrl.u32 %v997, 7
  %v999 = vsub.s32 %v996, %v998
  %v1000 = vrot.slane %v345, %v999
  %v1001 = vcombine.high %v1000, %v1000
  %v1003 = vunpack.c.l.s4 1966171168
  %v1004 = vunpack.c.0.s8 %v1003
  %v1005 = vlaneseq
  %v1006 = vshrl.u32 %v1005, 7
  %v1007 = vsub.s32 %v1004, %v1006
  %v1008 = vrot.slane %v1000, %v1007
  %v1010 = vunpack.c.l.s4 1966171168
  %v1011 = vunpack.c.0.s8 %v1010
  %v1012 = vlaneseq
  %v1013 = vshrl.u32 %v1012, 7
  %v1014 = vsub.s32 %v1011, %v1013
  %v1015 = vrot.slane %v1001, %v1014
  %v1016 = vlaneseq
  %v1017 = vshrl.u32 %v1016, 7
  %v1018 = vsub.s32 0, %v1017
  %v1019 = vrot.slane %v1008, %v1018
  %v1020 = vlaneseq
  %v1021 = vshrl.u32 %v1020, 7
  %v1022 = vsub.s32 0, %v1021
  %v1023 = vrot.slane %v1015, %v1022
  %v1026 = vadd.f32 %v1019, %v990
  %v1027 = vadd.f32 %v1023, %v992
  %vm1028 = vcmask 254976
  %v1029 = vsel %vm1028, %v1026, 0.0
  %1030 = vadd.xlane.f32.xlu0 %v1029
  %v1031 = vpop.xlane.xlu0 %1030
  %v1032 = vsel %vm1028, %v1027, 0.0
  %1033 = vadd.xlane.f32.xlu0 %v1032
  %v1034 = vpop.xlane.xlu0 %1033
  %v1035 = vrcp.pop 32.0
  %v1036 = vmul.f32 %v1031, %v1035
  %v1037 = vmul.f32 %v1034, %v1035
  %v1038 = vsub.f32 %v1026, %v1036
  %v1039 = vsub.f32 %v1027, %v1037
  %v1040 = vmul.f32 %v1038, %v1038
  %v1041 = vmul.f32 %v1039, %v1039
  %v1042 = vsel %vm1028, %v1040, 0.0
  %1043 = vadd.xlane.f32.xlu0 %v1042
  %v1044 = vpop.xlane.xlu0 %1043
  %v1045 = vsel %vm1028, %v1041, 0.0
  %1046 = vadd.xlane.f32.xlu0 %v1045
  %v1047 = vpop.xlane.xlu0 %1046
  %v1048 = vmul.f32 %v1044, %v1035
  %v1049 = vmul.f32 %v1047, %v1035
  %v1050 = vadd.f32 %v1048, 1e-05
  %v1051 = vadd.f32 %v1049, 1e-05
  %v1052 = vrsqrt.pop %v1050
  %v1053 = vrsqrt.pop %v1051
  %v1054 = vmul.f32 %v1038, %v1052
  %v1055 = vmul.f32 %v1039, %v1053
  %v1057 = vlaneseq
  %v1058 = vshrl.u32 %v1057, 7
  %v1059 = vsub.s32 0, %v1058
  %v1060 = vrot.slane %v365, %v1059
  %v1062 = vmul.f32 %v1054, %v1060
  %v1063 = vmul.f32 %v1055, %v1060
  %v1065 = vlaneseq
  %v1066 = vshrl.u32 %v1065, 7
  %v1067 = vsub.s32 0, %v1066
  %v1068 = vrot.slane %v366, %v1067
  %v1070 = vadd.f32 %v1062, %v1068
  %v1071 = vadd.f32 %v1063, %v1068
  %v1072 = vmul.f32 %v1070, %v1070
  %v1073 = vmul.f32 %v1071, %v1071
  %v1074 = vsel %vm1028, %v1072, 0.0
  %1075 = vadd.xlane.f32.xlu0 %v1074
  %v1076 = vpop.xlane.xlu0 %1075
  %v1077 = vsel %vm1028, %v1073, 0.0
  %1078 = vadd.xlane.f32.xlu0 %v1077
  %v1079 = vpop.xlane.xlu0 %1078
  %v1080 = vadd.f32 %v1076, 1e-12
  %v1081 = vadd.f32 %v1079, 1e-12
  %v1082 = vrsqrt.pop %v1080
  %v1083 = vrsqrt.pop %v1081
  %v1084 = vmul.f32 %v1070, %v1082
  %v1085 = vmul.f32 %v1071, %v1083
  %v1086 = vld [vmem:[%s1] sm:$0xff]
  %v1087 = vld [vmem:[%s1 + $0x8] sm:$0xff]
  %v1088 = vld [vmem:[%s1 + $0x10] sm:$0xff]
  %v1089 = vld [vmem:[%s1 + $0x18] sm:$0xff]
  %1090 = vset.pattern.permute.xlu0 0
  %1091 = vperm.xlu0 %1090, %v1086
  %v1092 = vpop.permute.xlu0 %1091
  %1093 = vset.pattern.permute.xlu0 0
  %1094 = vperm.xlu0 %1093, %v1087
  %v1095 = vpop.permute.xlu0 %1094
  %1096 = vset.pattern.permute.xlu0 0
  %1097 = vperm.xlu0 %1096, %v1088
  %v1098 = vpop.permute.xlu0 %1097
  %1099 = vset.pattern.permute.xlu0 0
  %1100 = vperm.xlu0 %1099, %v1089
  %v1101 = vpop.permute.xlu0 %1100
  %vm1102 = vcmp.eq.s32.totalorder %v349, %v1092
  %vm1103 = vcmp.eq.s32.totalorder %v349, %v1095
  %vm1104 = vcmp.eq.s32.totalorder %v349, %v1098
  %vm1105 = vcmp.eq.s32.totalorder %v349, %v1101
  %v1106 = vsel %vm1102, 1, 0
  %v1107 = vsel %vm1103, 1, 0
  %v1108 = vsel %vm1104, 1, 0
  %v1109 = vsel %vm1105, 1, 0
  %v1110 = vcvt.s32.f32 %v1106
  %v1111 = vcvt.s32.f32 %v1107
  %v1112 = vcvt.s32.f32 %v1108
  %v1113 = vcvt.s32.f32 %v1109
  %v1114 = vld [vmem:[%s12] sm:$0xff]
  %v1115 = vld [vmem:[%s12 + $0x8] sm:$0xff]
  %v1116 = vld [vmem:[%s12 + $0x10] sm:$0xff]
  %v1117 = vld [vmem:[%s12 + $0x18] sm:$0xff]
  %v1118 = vld [vmem:[%s12 + $0x20] sm:$0xff]
  %v1119 = vld [vmem:[%s12 + $0x28] sm:$0xff]
  %v1120 = vld [vmem:[%s12 + $0x30] sm:$0x3]
  %vm1121 = vcmask 408576
  %v1123 = vsel %vm1121, %v1110, 0
  %v1126 = vsel %vm1121, %v1111, 0
  %v1129 = vsel %vm1121, %v1112, 0
  %v1132 = vsel %vm1121, %v1113, 0
  %vm1134 = vcmask 1041408
  %v1136 = vsel %vm1134, %v1120, 0
  %1138 = vmatprep.subr.mxu0 0.0
  %1139 = vmatpush1.msra.mxu0 %v1114
  %1140 = vmatprep.subr.mxu0 0.0
  %1141 = vmatpush1.msra.mxu0 %v1115
  %1142 = vmatprep.subr.mxu0 0.0
  %1143 = vmatpush1.msra.mxu0 %v1116
  %1144 = vmatprep.subr.mxu0 0.0
  %1145 = vmatpush1.msra.mxu0 %v1117
  %1146 = vmatprep.subr.mxu0 0.0
  %1147 = vmatpush1.msra.mxu0 %v1118
  %1148 = vmatprep.subr.mxu0 0.0
  %1149 = vmatpush1.msra.mxu0 %v1119
  %1150 = vmatprep.subr.mxu0 0.0
  %1151 = vmatpush1.msra.mxu0 %v1136
  %1152 = vmatprep.subr.mxu0 0.0
  %1153 = vmatpush1.msra.mxu0 0.0
  %1154 = vmatprep.subr.mxu0 0.0
  %1155 = vmatpush1.msra.mxu0 0.0
  %1156 = vmatprep.subr.mxu0 0.0
  %1157 = vmatpush1.msra.mxu0 0.0
  %1158 = vmatprep.subr.mxu0 0.0
  %1159 = vmatpush1.msra.mxu0 0.0
  %1160 = vmatprep.subr.mxu0 0.0
  %1161 = vmatpush1.msra.mxu0 0.0
  %1162 = vmatprep.subr.mxu0 0.0
  %1163 = vmatpush1.msra.mxu0 0.0
  %1164 = vmatprep.subr.mxu0 0.0
  %1165 = vmatpush1.msra.mxu0 0.0
  %1166 = vmatprep.subr.mxu0 0.0
  %1167 = vmatpush1.msra.mxu0 0.0
  %1168 = vmatprep.subr.mxu0 0.0
  %1169 = vmatpush1.msra.mxu0 0.0
  %1170 = vmatprep.subr.mxu0 0.0
  %1171 = vmatpush1.msra.mxu0 0.0
  %1172 = vmatprep.subr.mxu0 0.0
  %1173 = vmatpush1.msra.mxu0 0.0
  %1174 = vmatprep.subr.mxu0 0.0
  %1175 = vmatpush1.msra.mxu0 0.0
  %1176 = vmatprep.subr.mxu0 0.0
  %1177 = vmatpush1.msra.mxu0 0.0
  %1178 = vmatprep.subr.mxu0 0.0
  %1179 = vmatpush1.msra.mxu0 0.0
  %1180 = vmatprep.subr.mxu0 0.0
  %1181 = vmatpush1.msra.mxu0 0.0
  %1182 = vmatprep.subr.mxu0 0.0
  %1183 = vmatpush1.msra.mxu0 0.0
  %1184 = vmatprep.subr.mxu0 0.0
  %1185 = vmatpush1.msra.mxu0 0.0
  %1186 = vmatprep.subr.mxu0 0.0
  %1187 = vmatpush1.msra.mxu0 0.0
  %1188 = vmatprep.subr.mxu0 0.0
  %1189 = vmatpush1.msra.mxu0 0.0
  %1190 = vmatprep.subr.mxu0 0.0
  %1191 = vmatpush1.msra.mxu0 0.0
  %1192 = vmatprep.subr.mxu0 0.0
  %1193 = vmatpush1.msra.mxu0 0.0
  %1194 = vmatprep.subr.mxu0 0.0
  %1195 = vmatpush1.msra.mxu0 0.0
  %1196 = vmatprep.subr.mxu0 0.0
  %1197 = vmatpush1.msra.mxu0 0.0
  %1198 = vmatprep.subr.mxu0 0.0
  %1199 = vmatpush1.msra.mxu0 0.0
  %1200 = vmatprep.subr.mxu0 0.0
  %1201 = vmatpush1.msra.mxu0 0.0
  %1202 = vmatprep.mubr.f32.mxu0 0.0
  %1203 = vmatmul.mubr.f32.gmra.mrb[0].mxu0 %v1123
  %v1204 = vpop.f32.mrb[0].mxu0
  %v1205 = vadd.f32 0.0, %v1204
  %v1206 = vpop.f32.mrb[0].mxu0
  %1207 = vmatprep.mubr.f32.mxu0 0.0
  %1208 = vmatmul.mubr.f32.gmra.mrb[0].mxu0 %v1126
  %v1209 = vpop.f32.mrb[0].mxu0
  %v1210 = vadd.f32 0.0, %v1209
  %v1211 = vpop.f32.mrb[0].mxu0
  %1212 = vmatprep.mubr.f32.mxu0 0.0
  %1213 = vmatmul.mubr.f32.gmra.mrb[0].mxu0 %v1129
  %v1214 = vpop.f32.mrb[0].mxu0
  %v1215 = vadd.f32 0.0, %v1214
  %v1216 = vpop.f32.mrb[0].mxu0
  %1217 = vmatprep.mubr.f32.mxu0 0.0
  %1218 = vmatmul.mubr.f32.gmra.mrb[0].mxu0 %v1132
  %v1219 = vpop.f32.mrb[0].mxu0
  %v1220 = vadd.f32 0.0, %v1219
  %v1221 = vpop.f32.mrb[0].mxu0
  %1222 = vdwg.mxu0
  %1225 = vrot.lane.b32.xlu0 %v1215, 32
  %v1226 = vpop.permute.xlu0 %1225
  %1227 = vrot.lane.b32.xlu0 %v1220, 32
  %v1228 = vpop.permute.xlu0 %1227
  %v1231 = vsel %vm502, %v1205, %v1226
  %v1232 = vsel %vm502, %v1210, %v1228
  %v1233 = vld [vmem:[%s13] sm:$0xff]
  %v1234 = vld [vmem:[%s13 + $0x8] sm:$0xff]
  %v1235 = vld [vmem:[%s13 + $0x10] sm:$0xff]
  %v1236 = vld [vmem:[%s13 + $0x18] sm:$0xff]
  %v1237 = vld [vmem:[%s13 + $0x20] sm:$0xff]
  %v1238 = vld [vmem:[%s13 + $0x28] sm:$0xff]
  %v1239 = vld [vmem:[%s13 + $0x30] sm:$0xff]
  %v1240 = vld [vmem:[%s13 + $0x38] sm:$0xff]
  %v1241 = vld [vmem:[%s14] sm:$0x1]
  %v1243 = vlaneseq
  %v1244 = vshrl.u32 %v1243, 7
  %v1245 = vsub.s32 0, %v1244
  %v1246 = vrot.slane %v1241, %v1245
  %v1249 = vsel %vm216, %v1231, 0
  %v1252 = vsel %vm216, %v1232, 0
  %1254 = vmatprep.subr.mxu0 0.0
  %1255 = vmatpush1.msra.mxu0 %v1233
  %1256 = vmatprep.subr.mxu0 0.0
  %1257 = vmatpush1.msra.mxu0 %v1234
  %1258 = vmatprep.subr.mxu0 0.0
  %1259 = vmatpush1.msra.mxu0 %v1235
  %1260 = vmatprep.subr.mxu0 0.0
  %1261 = vmatpush1.msra.mxu0 %v1236
  %1262 = vmatprep.subr.mxu0 0.0
  %1263 = vmatpush1.msra.mxu0 %v1237
  %1264 = vmatprep.subr.mxu0 0.0
  %1265 = vmatpush1.msra.mxu0 %v1238
  %1266 = vmatprep.subr.mxu0 0.0
  %1267 = vmatpush1.msra.mxu0 %v1239
  %1268 = vmatprep.subr.mxu0 0.0
  %1269 = vmatpush1.msra.mxu0 %v1240
  %1270 = vmatprep.subr.mxu0 0.0
  %1271 = vmatpush1.msra.mxu0 0.0
  %1272 = vmatprep.subr.mxu0 0.0
  %1273 = vmatpush1.msra.mxu0 0.0
  %1274 = vmatprep.subr.mxu0 0.0
  %1275 = vmatpush1.msra.mxu0 0.0
  %1276 = vmatprep.subr.mxu0 0.0
  %1277 = vmatpush1.msra.mxu0 0.0
  %1278 = vmatprep.subr.mxu0 0.0
  %1279 = vmatpush1.msra.mxu0 0.0
  %1280 = vmatprep.subr.mxu0 0.0
  %1281 = vmatpush1.msra.mxu0 0.0
  %1282 = vmatprep.subr.mxu0 0.0
  %1283 = vmatpush1.msra.mxu0 0.0
  %1284 = vmatprep.subr.mxu0 0.0
  %1285 = vmatpush1.msra.mxu0 0.0
  %1286 = vmatprep.subr.mxu0 0.0
  %1287 = vmatpush1.msra.mxu0 0.0
  %1288 = vmatprep.subr.mxu0 0.0
  %1289 = vmatpush1.msra.mxu0 0.0
  %1290 = vmatprep.subr.mxu0 0.0
  %1291 = vmatpush1.msra.mxu0 0.0
  %1292 = vmatprep.subr.mxu0 0.0
  %1293 = vmatpush1.msra.mxu0 0.0
  %1294 = vmatprep.subr.mxu0 0.0
  %1295 = vmatpush1.msra.mxu0 0.0
  %1296 = vmatprep.subr.mxu0 0.0
  %1297 = vmatpush1.msra.mxu0 0.0
  %1298 = vmatprep.subr.mxu0 0.0
  %1299 = vmatpush1.msra.mxu0 0.0
  %1300 = vmatprep.subr.mxu0 0.0
  %1301 = vmatpush1.msra.mxu0 0.0
  %1302 = vmatprep.subr.mxu0 0.0
  %1303 = vmatpush1.msra.mxu0 0.0
  %1304 = vmatprep.subr.mxu0 0.0
  %1305 = vmatpush1.msra.mxu0 0.0
  %1306 = vmatprep.subr.mxu0 0.0
  %1307 = vmatpush1.msra.mxu0 0.0
  %1308 = vmatprep.subr.mxu0 0.0
  %1309 = vmatpush1.msra.mxu0 0.0
  %1310 = vmatprep.subr.mxu0 0.0
  %1311 = vmatpush1.msra.mxu0 0.0
  %1312 = vmatprep.subr.mxu0 0.0
  %1313 = vmatpush1.msra.mxu0 0.0
  %1314 = vmatprep.subr.mxu0 0.0
  %1315 = vmatpush1.msra.mxu0 0.0
  %1316 = vmatprep.subr.mxu0 0.0
  %1317 = vmatpush1.msra.mxu0 0.0
  %1318 = vmatprep.mubr.f32.mxu0 0.0
  %1319 = vmatmul.mubr.f32.gmra.mrb[0].mxu0 %v1249
  %v1320 = vpop.f32.mrb[0].mxu0
  %v1321 = vadd.f32 %v1246, %v1320
  %v1322 = vpop.f32.mrb[0].mxu0
  %1323 = vmatprep.mubr.f32.mxu0 0.0
  %1324 = vmatmul.mubr.f32.gmra.mrb[0].mxu0 %v1252
  %v1325 = vpop.f32.mrb[0].mxu0
  %v1326 = vadd.f32 %v1246, %v1325
  %v1327 = vpop.f32.mrb[0].mxu0
  %1328 = vdwg.mxu0
  %v1329 = vld [vmem:[%s2] sm:$0x3]
  %v1330 = vlaneseq
  %v1331 = vshrl.u32 %v1330, 7
  %vm1332 = vcmp.lt.s32.totalorder %v349, 16
  %v1333 = vsub.s32 7, %v1331
  %v1334 = vsel %vm1332, %v1331, %v1333
  %v1336 = vunpack.c.l.s4 1966171168
  %v1337 = vunpack.c.0.s8 %v1336
  %v1338 = vlaneseq
  %v1339 = vshrl.u32 %v1338, 7
  %v1340 = vsub.s32 %v1337, %v1339
  %v1341 = vrot.slane %v1329, %v1340
  %v1342 = vcombine.high %v1341, %v1341
  %v1344 = vunpack.c.l.s4 1966171168
  %v1345 = vunpack.c.0.s8 %v1344
  %v1346 = vlaneseq
  %v1347 = vshrl.u32 %v1346, 7
  %v1348 = vsub.s32 %v1345, %v1347
  %v1349 = vrot.slane %v1341, %v1348
  %v1351 = vunpack.c.l.s4 1966171168
  %v1352 = vunpack.c.0.s8 %v1351
  %v1353 = vlaneseq
  %v1354 = vshrl.u32 %v1353, 7
  %v1355 = vsub.s32 %v1352, %v1354
  %v1356 = vrot.slane %v1342, %v1355
  %v1357 = vlaneseq
  %v1358 = vshrl.u32 %v1357, 7
  %v1359 = vsub.s32 0, %v1358
  %v1360 = vrot.slane %v1349, %v1359
  %v1361 = vlaneseq
  %v1362 = vshrl.u32 %v1361, 7
  %v1363 = vsub.s32 0, %v1362
  %v1364 = vrot.slane %v1356, %v1363
  %1365 = vset.pattern.permute.xlu0 0
  %1366 = vperm.xlu0 %1365, %v1360
  %v1367 = vpop.permute.xlu0 %1366
  %1368 = vset.pattern.permute.xlu0 0
  %1369 = vperm.xlu0 %1368, %v1364
  %v1370 = vpop.permute.xlu0 %1369
  %vm1371 = vcmp.lt.s32.totalorder %v1334, %v1367
  %vm1372 = vcmp.lt.s32.totalorder %v1334, %v1370
  %v1373 = vld [vmem:[%s15] sm:$0xff]
  %v1374 = vld [vmem:[%s15 + $0x8] sm:$0xff]
  %v1375 = vld [vmem:[%s15 + $0x10] sm:$0xff]
  %v1376 = vld [vmem:[%s15 + $0x18] sm:$0xff]
  %v1377 = vld [vmem:[%s16] sm:$0x1]
  %v1379 = vlaneseq
  %v1380 = vshrl.u32 %v1379, 7
  %v1381 = vsub.s32 0, %v1380
  %v1382 = vrot.slane %v1377, %v1381
  %v1385 = vsel %vm502, 0.0, 0
  %1387 = vmatprep.subr.mxu0 0.0
  %1388 = vmatpush1.msra.mxu0 %v1373
  %1389 = vmatprep.subr.mxu0 0.0
  %1390 = vmatpush1.msra.mxu0 %v1374
  %1391 = vmatprep.subr.mxu0 0.0
  %1392 = vmatpush1.msra.mxu0 %v1375
  %1393 = vmatprep.subr.mxu0 0.0
  %1394 = vmatpush1.msra.mxu0 %v1376
  %1395 = vmatprep.subr.mxu0 0.0
  %1396 = vmatpush1.msra.mxu0 0.0
  %1397 = vmatprep.subr.mxu0 0.0
  %1398 = vmatpush1.msra.mxu0 0.0
  %1399 = vmatprep.subr.mxu0 0.0
  %1400 = vmatpush1.msra.mxu0 0.0
  %1401 = vmatprep.subr.mxu0 0.0
  %1402 = vmatpush1.msra.mxu0 0.0
  %1403 = vmatprep.subr.mxu0 0.0
  %1404 = vmatpush1.msra.mxu0 0.0
  %1405 = vmatprep.subr.mxu0 0.0
  %1406 = vmatpush1.msra.mxu0 0.0
  %1407 = vmatprep.subr.mxu0 0.0
  %1408 = vmatpush1.msra.mxu0 0.0
  %1409 = vmatprep.subr.mxu0 0.0
  %1410 = vmatpush1.msra.mxu0 0.0
  %1411 = vmatprep.subr.mxu0 0.0
  %1412 = vmatpush1.msra.mxu0 0.0
  %1413 = vmatprep.subr.mxu0 0.0
  %1414 = vmatpush1.msra.mxu0 0.0
  %1415 = vmatprep.subr.mxu0 0.0
  %1416 = vmatpush1.msra.mxu0 0.0
  %1417 = vmatprep.subr.mxu0 0.0
  %1418 = vmatpush1.msra.mxu0 0.0
  %1419 = vmatprep.subr.mxu0 0.0
  %1420 = vmatpush1.msra.mxu0 0.0
  %1421 = vmatprep.subr.mxu0 0.0
  %1422 = vmatpush1.msra.mxu0 0.0
  %1423 = vmatprep.subr.mxu0 0.0
  %1424 = vmatpush1.msra.mxu0 0.0
  %1425 = vmatprep.subr.mxu0 0.0
  %1426 = vmatpush1.msra.mxu0 0.0
  %1427 = vmatprep.subr.mxu0 0.0
  %1428 = vmatpush1.msra.mxu0 0.0
  %1429 = vmatprep.subr.mxu0 0.0
  %1430 = vmatpush1.msra.mxu0 0.0
  %1431 = vmatprep.subr.mxu0 0.0
  %1432 = vmatpush1.msra.mxu0 0.0
  %1433 = vmatprep.subr.mxu0 0.0
  %1434 = vmatpush1.msra.mxu0 0.0
  %1435 = vmatprep.subr.mxu0 0.0
  %1436 = vmatpush1.msra.mxu0 0.0
  %1437 = vmatprep.subr.mxu0 0.0
  %1438 = vmatpush1.msra.mxu0 0.0
  %1439 = vmatprep.subr.mxu0 0.0
  %1440 = vmatpush1.msra.mxu0 0.0
  %1441 = vmatprep.subr.mxu0 0.0
  %1442 = vmatpush1.msra.mxu0 0.0
  %1443 = vmatprep.subr.mxu0 0.0
  %1444 = vmatpush1.msra.mxu0 0.0
  %1445 = vmatprep.subr.mxu0 0.0
  %1446 = vmatpush1.msra.mxu0 0.0
  %1447 = vmatprep.subr.mxu0 0.0
  %1448 = vmatpush1.msra.mxu0 0.0
  %1449 = vmatprep.subr.mxu0 0.0
  %1450 = vmatpush1.msra.mxu0 0.0
  %1451 = vmatprep.mubr.f32.mxu0 0.0
  %1452 = vmatmul.mubr.f32.gmra.mrb[0].mxu0 %v1385
  %v1453 = vpop.f32.mrb[0].mxu0
  %v1454 = vadd.f32 %v1382, %v1453
  %v1455 = vpop.f32.mrb[0].mxu0
  %1456 = vdwg.mxu0
  %v1458 = vrot.slane %v1454, 1
  %v1461 = vadd.f32 %v1321, %v1454
  %v1462 = vadd.f32 %v1326, %v1458
  %v1463 = vxor.u32 %v1461, 2147483648
  %v1464 = vxor.u32 %v1462, 2147483648
  %v1465 = vmul.f32 %v1463, 1.442695
  %v1466 = vpow.pop %v1465
  %v1467 = vmul.f32 %v1464, 1.442695
  %v1468 = vpow.pop %v1467
  %v1469 = vadd.f32 %v1466, 1.0
  %v1470 = vadd.f32 %v1468, 1.0
  %v1471 = vrcp.pop %v1469
  %v1472 = vmul.f32 1.0, %v1471
  %v1473 = vrcp.pop %v1470
  %v1474 = vmul.f32 1.0, %v1473
  %1475 = vrot.lane.b32.xlu0 %v1454, 64
  %v1476 = vpop.permute.xlu0 %1475
  %1477 = vrot.lane.b32.xlu0 %v1458, 64
  %v1478 = vpop.permute.xlu0 %1477
  %v1481 = vmul.f32 %v1472, %v1476
  %v1482 = vmul.f32 %v1474, %v1478
  %1485 = vrot.lane.b32.xlu0 %v1481, 64
  %v1486 = vpop.permute.xlu0 %1485
  %1487 = vrot.lane.b32.xlu0 %v1482, 64
  %v1488 = vpop.permute.xlu0 %1487
  %v1491 = vadd.f32 %v1321, %v1486
  %v1492 = vadd.f32 %v1326, %v1488
  %v1493 = vtanh.pop %v1491
  %v1494 = vtanh.pop %v1492
  %v1495 = vsub.f32 1.0, %v1472
  %v1496 = vsub.f32 1.0, %v1474
  %1499 = vrot.lane.b32.xlu0 %v1493, 96
  %v1500 = vpop.permute.xlu0 %1499
  %1501 = vrot.lane.b32.xlu0 %v1494, 96
  %v1502 = vpop.permute.xlu0 %1501
  %v1505 = vmul.f32 %v1495, %v1500
  %v1506 = vmul.f32 %v1496, %v1502
  %v1507 = vmul.f32 %v1472, 0.0
  %v1508 = vmul.f32 %v1474, 0.0
  %v1509 = vadd.f32 %v1505, %v1507
  %v1510 = vadd.f32 %v1506, %v1508
  %1513 = vrot.lane.b32.xlu0 %v1509, 96
  %v1514 = vpop.permute.xlu0 %1513
  %1515 = vrot.lane.b32.xlu0 %v1510, 96
  %v1516 = vpop.permute.xlu0 %1515
  %v1519 = vsel %vm1371, %v1514, 0.0
  %v1520 = vsel %vm1372, %v1516, 0.0
  %v1523 = vrot.slane %v1520, 7
  %v1524 = vsel %vm274, %v1523, %v1519
  %v1525 = vsel %vm502, %v1524, 0
  %1527 = vmatprep.subr.mxu0 0.0
  %1528 = vmatpush1.msra.mxu0 %v1373
  %1529 = vmatprep.subr.mxu0 0.0
  %1530 = vmatpush1.msra.mxu0 %v1374
  %1531 = vmatprep.subr.mxu0 0.0
  %1532 = vmatpush1.msra.mxu0 %v1375
  %1533 = vmatprep.subr.mxu0 0.0
  %1534 = vmatpush1.msra.mxu0 %v1376
  %1535 = vmatprep.subr.mxu0 0.0
  %1536 = vmatpush1.msra.mxu0 0.0
  %1537 = vmatprep.subr.mxu0 0.0
  %1538 = vmatpush1.msra.mxu0 0.0
  %1539 = vmatprep.subr.mxu0 0.0
  %1540 = vmatpush1.msra.mxu0 0.0
  %1541 = vmatprep.subr.mxu0 0.0
  %1542 = vmatpush1.msra.mxu0 0.0
  %1543 = vmatprep.subr.mxu0 0.0
  %1544 = vmatpush1.msra.mxu0 0.0
  %1545 = vmatprep.subr.mxu0 0.0
  %1546 = vmatpush1.msra.mxu0 0.0
  %1547 = vmatprep.subr.mxu0 0.0
  %1548 = vmatpush1.msra.mxu0 0.0
  %1549 = vmatprep.subr.mxu0 0.0
  %1550 = vmatpush1.msra.mxu0 0.0
  %1551 = vmatprep.subr.mxu0 0.0
  %1552 = vmatpush1.msra.mxu0 0.0
  %1553 = vmatprep.subr.mxu0 0.0
  %1554 = vmatpush1.msra.mxu0 0.0
  %1555 = vmatprep.subr.mxu0 0.0
  %1556 = vmatpush1.msra.mxu0 0.0
  %1557 = vmatprep.subr.mxu0 0.0
  %1558 = vmatpush1.msra.mxu0 0.0
  %1559 = vmatprep.subr.mxu0 0.0
  %1560 = vmatpush1.msra.mxu0 0.0
  %1561 = vmatprep.subr.mxu0 0.0
  %1562 = vmatpush1.msra.mxu0 0.0
  %1563 = vmatprep.subr.mxu0 0.0
  %1564 = vmatpush1.msra.mxu0 0.0
  %1565 = vmatprep.subr.mxu0 0.0
  %1566 = vmatpush1.msra.mxu0 0.0
  %1567 = vmatprep.subr.mxu0 0.0
  %1568 = vmatpush1.msra.mxu0 0.0
  %1569 = vmatprep.subr.mxu0 0.0
  %1570 = vmatpush1.msra.mxu0 0.0
  %1571 = vmatprep.subr.mxu0 0.0
  %1572 = vmatpush1.msra.mxu0 0.0
  %1573 = vmatprep.subr.mxu0 0.0
  %1574 = vmatpush1.msra.mxu0 0.0
  %1575 = vmatprep.subr.mxu0 0.0
  %1576 = vmatpush1.msra.mxu0 0.0
  %1577 = vmatprep.subr.mxu0 0.0
  %1578 = vmatpush1.msra.mxu0 0.0
  %1579 = vmatprep.subr.mxu0 0.0
  %1580 = vmatpush1.msra.mxu0 0.0
  %1581 = vmatprep.subr.mxu0 0.0
  %1582 = vmatpush1.msra.mxu0 0.0
  %1583 = vmatprep.subr.mxu0 0.0
  %1584 = vmatpush1.msra.mxu0 0.0
  %1585 = vmatprep.subr.mxu0 0.0
  %1586 = vmatpush1.msra.mxu0 0.0
  %1587 = vmatprep.subr.mxu0 0.0
  %1588 = vmatpush1.msra.mxu0 0.0
  %1589 = vmatprep.subr.mxu0 0.0
  %1590 = vmatpush1.msra.mxu0 0.0
  %1591 = vmatprep.mubr.f32.mxu0 0.0
  %1592 = vmatmul.mubr.f32.gmra.mrb[0].mxu0 %v1525
  %v1593 = vpop.f32.mrb[0].mxu0
  %v1594 = vadd.f32 %v1382, %v1593
  %v1595 = vpop.f32.mrb[0].mxu0
  %1596 = vdwg.mxu0
  %v1598 = vrot.slane %v1594, 7
  %v1601 = vadd.f32 %v1321, %v1598
  %v1602 = vadd.f32 %v1326, %v1594
  %v1603 = vxor.u32 %v1601, 2147483648
  %v1604 = vxor.u32 %v1602, 2147483648
  %v1605 = vmul.f32 %v1603, 1.442695
  %v1606 = vpow.pop %v1605
  %v1607 = vmul.f32 %v1604, 1.442695
  %v1608 = vpow.pop %v1607
  %v1609 = vadd.f32 %v1606, 1.0
  %v1610 = vadd.f32 %v1608, 1.0
  %v1611 = vrcp.pop %v1609
  %v1612 = vmul.f32 1.0, %v1611
  %v1613 = vrcp.pop %v1610
  %v1614 = vmul.f32 1.0, %v1613
  %1615 = vrot.lane.b32.xlu0 %v1598, 64
  %v1616 = vpop.permute.xlu0 %1615
  %1617 = vrot.lane.b32.xlu0 %v1594, 64
  %v1618 = vpop.permute.xlu0 %1617
  %v1621 = vmul.f32 %v1612, %v1616
  %v1622 = vmul.f32 %v1614, %v1618
  %1625 = vrot.lane.b32.xlu0 %v1621, 64
  %v1626 = vpop.permute.xlu0 %1625
  %1627 = vrot.lane.b32.xlu0 %v1622, 64
  %v1628 = vpop.permute.xlu0 %1627
  %v1631 = vadd.f32 %v1321, %v1626
  %v1632 = vadd.f32 %v1326, %v1628
  %v1633 = vtanh.pop %v1631
  %v1634 = vtanh.pop %v1632
  %v1635 = vsub.f32 1.0, %v1612
  %v1636 = vsub.f32 1.0, %v1614
  %1639 = vrot.lane.b32.xlu0 %v1633, 96
  %v1640 = vpop.permute.xlu0 %1639
  %1641 = vrot.lane.b32.xlu0 %v1634, 96
  %v1642 = vpop.permute.xlu0 %1641
  %v1645 = vmul.f32 %v1635, %v1640
  %v1646 = vmul.f32 %v1636, %v1642
  %v1647 = vrot.slane %v1519, 7
  %1648 = vrot.lane.b32.xlu0 %v1647, 32
  %v1649 = vpop.permute.xlu0 %1648
  %1650 = vrot.lane.b32.xlu0 %v1523, 32
  %v1651 = vpop.permute.xlu0 %1650
  %v1654 = vmul.f32 %v1612, %v1649
  %v1655 = vmul.f32 %v1614, %v1651
  %v1656 = vadd.f32 %v1645, %v1654
  %v1657 = vadd.f32 %v1646, %v1655
  %1660 = vrot.lane.b32.xlu0 %v1656, 96
  %v1661 = vpop.permute.xlu0 %1660
  %1662 = vrot.lane.b32.xlu0 %v1657, 96
  %v1663 = vpop.permute.xlu0 %1662
  %v1668 = vsel %vm1371, %v1661, %v1647
  %v1669 = vsel %vm1372, %v1663, %v1523
  %v1672 = vrot.slane %v1668, 1
  %v1673 = vsel %vm274, %v1669, %v1672
  %v1674 = vsel %vm502, %v1673, 0
  %1676 = vmatprep.subr.mxu0 0.0
  %1677 = vmatpush1.msra.mxu0 %v1373
  %1678 = vmatprep.subr.mxu0 0.0
  %1679 = vmatpush1.msra.mxu0 %v1374
  %1680 = vmatprep.subr.mxu0 0.0
  %1681 = vmatpush1.msra.mxu0 %v1375
  %1682 = vmatprep.subr.mxu0 0.0
  %1683 = vmatpush1.msra.mxu0 %v1376
  %1684 = vmatprep.subr.mxu0 0.0
  %1685 = vmatpush1.msra.mxu0 0.0
  %1686 = vmatprep.subr.mxu0 0.0
  %1687 = vmatpush1.msra.mxu0 0.0
  %1688 = vmatprep.subr.mxu0 0.0
  %1689 = vmatpush1.msra.mxu0 0.0
  %1690 = vmatprep.subr.mxu0 0.0
  %1691 = vmatpush1.msra.mxu0 0.0
  %1692 = vmatprep.subr.mxu0 0.0
  %1693 = vmatpush1.msra.mxu0 0.0
  %1694 = vmatprep.subr.mxu0 0.0
  %1695 = vmatpush1.msra.mxu0 0.0
  %1696 = vmatprep.subr.mxu0 0.0
  %1697 = vmatpush1.msra.mxu0 0.0
  %1698 = vmatprep.subr.mxu0 0.0
  %1699 = vmatpush1.msra.mxu0 0.0
  %1700 = vmatprep.subr.mxu0 0.0
  %1701 = vmatpush1.msra.mxu0 0.0
  %1702 = vmatprep.subr.mxu0 0.0
  %1703 = vmatpush1.msra.mxu0 0.0
  %1704 = vmatprep.subr.mxu0 0.0
  %1705 = vmatpush1.msra.mxu0 0.0
  %1706 = vmatprep.subr.mxu0 0.0
  %1707 = vmatpush1.msra.mxu0 0.0
  %1708 = vmatprep.subr.mxu0 0.0
  %1709 = vmatpush1.msra.mxu0 0.0
  %1710 = vmatprep.subr.mxu0 0.0
  %1711 = vmatpush1.msra.mxu0 0.0
  %1712 = vmatprep.subr.mxu0 0.0
  %1713 = vmatpush1.msra.mxu0 0.0
  %1714 = vmatprep.subr.mxu0 0.0
  %1715 = vmatpush1.msra.mxu0 0.0
  %1716 = vmatprep.subr.mxu0 0.0
  %1717 = vmatpush1.msra.mxu0 0.0
  %1718 = vmatprep.subr.mxu0 0.0
  %1719 = vmatpush1.msra.mxu0 0.0
  %1720 = vmatprep.subr.mxu0 0.0
  %1721 = vmatpush1.msra.mxu0 0.0
  %1722 = vmatprep.subr.mxu0 0.0
  %1723 = vmatpush1.msra.mxu0 0.0
  %1724 = vmatprep.subr.mxu0 0.0
  %1725 = vmatpush1.msra.mxu0 0.0
  %1726 = vmatprep.subr.mxu0 0.0
  %1727 = vmatpush1.msra.mxu0 0.0
  %1728 = vmatprep.subr.mxu0 0.0
  %1729 = vmatpush1.msra.mxu0 0.0
  %1730 = vmatprep.subr.mxu0 0.0
  %1731 = vmatpush1.msra.mxu0 0.0
  %1732 = vmatprep.subr.mxu0 0.0
  %1733 = vmatpush1.msra.mxu0 0.0
  %1734 = vmatprep.subr.mxu0 0.0
  %1735 = vmatpush1.msra.mxu0 0.0
  %1736 = vmatprep.subr.mxu0 0.0
  %1737 = vmatpush1.msra.mxu0 0.0
  %1738 = vmatprep.subr.mxu0 0.0
  %1739 = vmatpush1.msra.mxu0 0.0
  %1740 = vmatprep.mubr.f32.mxu0 0.0
  %1741 = vmatmul.mubr.f32.gmra.mrb[0].mxu0 %v1674
  %v1742 = vpop.f32.mrb[0].mxu0
  %v1743 = vadd.f32 %v1382, %v1742
  %v1744 = vpop.f32.mrb[0].mxu0
  %1745 = vdwg.mxu0
  %v1747 = vrot.slane %v1743, 6
  %v1748 = vrot.slane %v1743, 7
  %v1751 = vadd.f32 %v1321, %v1747
  %v1752 = vadd.f32 %v1326, %v1748
  %v1753 = vxor.u32 %v1751, 2147483648
  %v1754 = vxor.u32 %v1752, 2147483648
  %v1755 = vmul.f32 %v1753, 1.442695
  %v1756 = vpow.pop %v1755
  %v1757 = vmul.f32 %v1754, 1.442695
  %v1758 = vpow.pop %v1757
  %v1759 = vadd.f32 %v1756, 1.0
  %v1760 = vadd.f32 %v1758, 1.0
  %v1761 = vrcp.pop %v1759
  %v1762 = vmul.f32 1.0, %v1761
  %v1763 = vrcp.pop %v1760
  %v1764 = vmul.f32 1.0, %v1763
  %1765 = vrot.lane.b32.xlu0 %v1747, 64
  %v1766 = vpop.permute.xlu0 %1765
  %1767 = vrot.lane.b32.xlu0 %v1748, 64
  %v1768 = vpop.permute.xlu0 %1767
  %v1771 = vmul.f32 %v1762, %v1766
  %v1772 = vmul.f32 %v1764, %v1768
  %1775 = vrot.lane.b32.xlu0 %v1771, 64
  %v1776 = vpop.permute.xlu0 %1775
  %1777 = vrot.lane.b32.xlu0 %v1772, 64
  %v1778 = vpop.permute.xlu0 %1777
  %v1781 = vadd.f32 %v1321, %v1776
  %v1782 = vadd.f32 %v1326, %v1778
  %v1783 = vtanh.pop %v1781
  %v1784 = vtanh.pop %v1782
  %v1785 = vsub.f32 1.0, %v1762
  %v1786 = vsub.f32 1.0, %v1764
  %1789 = vrot.lane.b32.xlu0 %v1783, 96
  %v1790 = vpop.permute.xlu0 %1789
  %1791 = vrot.lane.b32.xlu0 %v1784, 96
  %v1792 = vpop.permute.xlu0 %1791
  %v1795 = vmul.f32 %v1785, %v1790
  %v1796 = vmul.f32 %v1786, %v1792
  %v1797 = vrot.slane %v1668, 7
  %v1798 = vrot.slane %v1669, 7
  %1799 = vrot.lane.b32.xlu0 %v1797, 32
  %v1800 = vpop.permute.xlu0 %1799
  %1801 = vrot.lane.b32.xlu0 %v1798, 32
  %v1802 = vpop.permute.xlu0 %1801
  %v1805 = vmul.f32 %v1762, %v1800
  %v1806 = vmul.f32 %v1764, %v1802
  %v1807 = vadd.f32 %v1795, %v1805
  %v1808 = vadd.f32 %v1796, %v1806
  %1811 = vrot.lane.b32.xlu0 %v1807, 96
  %v1812 = vpop.permute.xlu0 %1811
  %1813 = vrot.lane.b32.xlu0 %v1808, 96
  %v1814 = vpop.permute.xlu0 %1813
  %v1819 = vsel %vm1371, %v1812, %v1797
  %v1820 = vsel %vm1372, %v1814, %v1798
  %v1823 = vrot.slane %v1819, 2
  %v1824 = vrot.slane %v1820, 1
  %v1825 = vsel %vm274, %v1824, %v1823
  %v1826 = vsel %vm502, %v1825, 0
  %1828 = vmatprep.subr.mxu0 0.0
  %1829 = vmatpush1.msra.mxu0 %v1373
  %1830 = vmatprep.subr.mxu0 0.0
  %1831 = vmatpush1.msra.mxu0 %v1374
  %1832 = vmatprep.subr.mxu0 0.0
  %1833 = vmatpush1.msra.mxu0 %v1375
  %1834 = vmatprep.subr.mxu0 0.0
  %1835 = vmatpush1.msra.mxu0 %v1376
  %1836 = vmatprep.subr.mxu0 0.0
  %1837 = vmatpush1.msra.mxu0 0.0
  %1838 = vmatprep.subr.mxu0 0.0
  %1839 = vmatpush1.msra.mxu0 0.0
  %1840 = vmatprep.subr.mxu0 0.0
  %1841 = vmatpush1.msra.mxu0 0.0
  %1842 = vmatprep.subr.mxu0 0.0
  %1843 = vmatpush1.msra.mxu0 0.0
  %1844 = vmatprep.subr.mxu0 0.0
  %1845 = vmatpush1.msra.mxu0 0.0
  %1846 = vmatprep.subr.mxu0 0.0
  %1847 = vmatpush1.msra.mxu0 0.0
  %1848 = vmatprep.subr.mxu0 0.0
  %1849 = vmatpush1.msra.mxu0 0.0
  %1850 = vmatprep.subr.mxu0 0.0
  %1851 = vmatpush1.msra.mxu0 0.0
  %1852 = vmatprep.subr.mxu0 0.0
  %1853 = vmatpush1.msra.mxu0 0.0
  %1854 = vmatprep.subr.mxu0 0.0
  %1855 = vmatpush1.msra.mxu0 0.0
  %1856 = vmatprep.subr.mxu0 0.0
  %1857 = vmatpush1.msra.mxu0 0.0
  %1858 = vmatprep.subr.mxu0 0.0
  %1859 = vmatpush1.msra.mxu0 0.0
  %1860 = vmatprep.subr.mxu0 0.0
  %1861 = vmatpush1.msra.mxu0 0.0
  %1862 = vmatprep.subr.mxu0 0.0
  %1863 = vmatpush1.msra.mxu0 0.0
  %1864 = vmatprep.subr.mxu0 0.0
  %1865 = vmatpush1.msra.mxu0 0.0
  %1866 = vmatprep.subr.mxu0 0.0
  %1867 = vmatpush1.msra.mxu0 0.0
  %1868 = vmatprep.subr.mxu0 0.0
  %1869 = vmatpush1.msra.mxu0 0.0
  %1870 = vmatprep.subr.mxu0 0.0
  %1871 = vmatpush1.msra.mxu0 0.0
  %1872 = vmatprep.subr.mxu0 0.0
  %1873 = vmatpush1.msra.mxu0 0.0
  %1874 = vmatprep.subr.mxu0 0.0
  %1875 = vmatpush1.msra.mxu0 0.0
  %1876 = vmatprep.subr.mxu0 0.0
  %1877 = vmatpush1.msra.mxu0 0.0
  %1878 = vmatprep.subr.mxu0 0.0
  %1879 = vmatpush1.msra.mxu0 0.0
  %1880 = vmatprep.subr.mxu0 0.0
  %1881 = vmatpush1.msra.mxu0 0.0
  %1882 = vmatprep.subr.mxu0 0.0
  %1883 = vmatpush1.msra.mxu0 0.0
  %1884 = vmatprep.subr.mxu0 0.0
  %1885 = vmatpush1.msra.mxu0 0.0
  %1886 = vmatprep.subr.mxu0 0.0
  %1887 = vmatpush1.msra.mxu0 0.0
  %1888 = vmatprep.subr.mxu0 0.0
  %1889 = vmatpush1.msra.mxu0 0.0
  %1890 = vmatprep.subr.mxu0 0.0
  %1891 = vmatpush1.msra.mxu0 0.0
  %1892 = vmatprep.mubr.f32.mxu0 0.0
  %1893 = vmatmul.mubr.f32.gmra.mrb[0].mxu0 %v1826
  %v1894 = vpop.f32.mrb[0].mxu0
  %v1895 = vadd.f32 %v1382, %v1894
  %v1896 = vpop.f32.mrb[0].mxu0
  %1897 = vdwg.mxu0
  %v1899 = vrot.slane %v1895, 5
  %v1900 = vrot.slane %v1895, 6
  %v1903 = vadd.f32 %v1321, %v1899
  %v1904 = vadd.f32 %v1326, %v1900
  %v1905 = vxor.u32 %v1903, 2147483648
  %v1906 = vxor.u32 %v1904, 2147483648
  %v1907 = vmul.f32 %v1905, 1.442695
  %v1908 = vpow.pop %v1907
  %v1909 = vmul.f32 %v1906, 1.442695
  %v1910 = vpow.pop %v1909
  %v1911 = vadd.f32 %v1908, 1.0
  %v1912 = vadd.f32 %v1910, 1.0
  %v1913 = vrcp.pop %v1911
  %v1914 = vmul.f32 1.0, %v1913
  %v1915 = vrcp.pop %v1912
  %v1916 = vmul.f32 1.0, %v1915
  %1917 = vrot.lane.b32.xlu0 %v1899, 64
  %v1918 = vpop.permute.xlu0 %1917
  %1919 = vrot.lane.b32.xlu0 %v1900, 64
  %v1920 = vpop.permute.xlu0 %1919
  %v1923 = vmul.f32 %v1914, %v1918
  %v1924 = vmul.f32 %v1916, %v1920
  %1927 = vrot.lane.b32.xlu0 %v1923, 64
  %v1928 = vpop.permute.xlu0 %1927
  %1929 = vrot.lane.b32.xlu0 %v1924, 64
  %v1930 = vpop.permute.xlu0 %1929
  %v1933 = vadd.f32 %v1321, %v1928
  %v1934 = vadd.f32 %v1326, %v1930
  %v1935 = vtanh.pop %v1933
  %v1936 = vtanh.pop %v1934
  %v1937 = vsub.f32 1.0, %v1914
  %v1938 = vsub.f32 1.0, %v1916
  %1941 = vrot.lane.b32.xlu0 %v1935, 96
  %v1942 = vpop.permute.xlu0 %1941
  %1943 = vrot.lane.b32.xlu0 %v1936, 96
  %v1944 = vpop.permute.xlu0 %1943
  %v1947 = vmul.f32 %v1937, %v1942
  %v1948 = vmul.f32 %v1938, %v1944
  %v1949 = vrot.slane %v1819, 7
  %v1950 = vrot.slane %v1820, 7
  %1951 = vrot.lane.b32.xlu0 %v1949, 32
  %v1952 = vpop.permute.xlu0 %1951
  %1953 = vrot.lane.b32.xlu0 %v1950, 32
  %v1954 = vpop.permute.xlu0 %1953
  %v1957 = vmul.f32 %v1914, %v1952
  %v1958 = vmul.f32 %v1916, %v1954
  %v1959 = vadd.f32 %v1947, %v1957
  %v1960 = vadd.f32 %v1948, %v1958
  %1963 = vrot.lane.b32.xlu0 %v1959, 96
  %v1964 = vpop.permute.xlu0 %1963
  %1965 = vrot.lane.b32.xlu0 %v1960, 96
  %v1966 = vpop.permute.xlu0 %1965
  %v1971 = vsel %vm1371, %v1964, %v1949
  %v1972 = vsel %vm1372, %v1966, %v1950
  %v1975 = vrot.slane %v1971, 3
  %v1976 = vrot.slane %v1972, 2
  %v1977 = vsel %vm274, %v1976, %v1975
  %v1978 = vsel %vm502, %v1977, 0
  %1980 = vmatprep.subr.mxu0 0.0
  %1981 = vmatpush1.msra.mxu0 %v1373
  %1982 = vmatprep.subr.mxu0 0.0
  %1983 = vmatpush1.msra.mxu0 %v1374
  %1984 = vmatprep.subr.mxu0 0.0
  %1985 = vmatpush1.msra.mxu0 %v1375
  %1986 = vmatprep.subr.mxu0 0.0
  %1987 = vmatpush1.msra.mxu0 %v1376
  %1988 = vmatprep.subr.mxu0 0.0
  %1989 = vmatpush1.msra.mxu0 0.0
  %1990 = vmatprep.subr.mxu0 0.0
  %1991 = vmatpush1.msra.mxu0 0.0
  %1992 = vmatprep.subr.mxu0 0.0
  %1993 = vmatpush1.msra.mxu0 0.0
  %1994 = vmatprep.subr.mxu0 0.0
  %1995 = vmatpush1.msra.mxu0 0.0
  %1996 = vmatprep.subr.mxu0 0.0
  %1997 = vmatpush1.msra.mxu0 0.0
  %1998 = vmatprep.subr.mxu0 0.0
  %1999 = vmatpush1.msra.mxu0 0.0
  %2000 = vmatprep.subr.mxu0 0.0
  %2001 = vmatpush1.msra.mxu0 0.0
  %2002 = vmatprep.subr.mxu0 0.0
  %2003 = vmatpush1.msra.mxu0 0.0
  %2004 = vmatprep.subr.mxu0 0.0
  %2005 = vmatpush1.msra.mxu0 0.0
  %2006 = vmatprep.subr.mxu0 0.0
  %2007 = vmatpush1.msra.mxu0 0.0
  %2008 = vmatprep.subr.mxu0 0.0
  %2009 = vmatpush1.msra.mxu0 0.0
  %2010 = vmatprep.subr.mxu0 0.0
  %2011 = vmatpush1.msra.mxu0 0.0
  %2012 = vmatprep.subr.mxu0 0.0
  %2013 = vmatpush1.msra.mxu0 0.0
  %2014 = vmatprep.subr.mxu0 0.0
  %2015 = vmatpush1.msra.mxu0 0.0
  %2016 = vmatprep.subr.mxu0 0.0
  %2017 = vmatpush1.msra.mxu0 0.0
  %2018 = vmatprep.subr.mxu0 0.0
  %2019 = vmatpush1.msra.mxu0 0.0
  %2020 = vmatprep.subr.mxu0 0.0
  %2021 = vmatpush1.msra.mxu0 0.0
  %2022 = vmatprep.subr.mxu0 0.0
  %2023 = vmatpush1.msra.mxu0 0.0
  %2024 = vmatprep.subr.mxu0 0.0
  %2025 = vmatpush1.msra.mxu0 0.0
  %2026 = vmatprep.subr.mxu0 0.0
  %2027 = vmatpush1.msra.mxu0 0.0
  %2028 = vmatprep.subr.mxu0 0.0
  %2029 = vmatpush1.msra.mxu0 0.0
  %2030 = vmatprep.subr.mxu0 0.0
  %2031 = vmatpush1.msra.mxu0 0.0
  %2032 = vmatprep.subr.mxu0 0.0
  %2033 = vmatpush1.msra.mxu0 0.0
  %2034 = vmatprep.subr.mxu0 0.0
  %2035 = vmatpush1.msra.mxu0 0.0
  %2036 = vmatprep.subr.mxu0 0.0
  %2037 = vmatpush1.msra.mxu0 0.0
  %2038 = vmatprep.subr.mxu0 0.0
  %2039 = vmatpush1.msra.mxu0 0.0
  %2040 = vmatprep.subr.mxu0 0.0
  %2041 = vmatpush1.msra.mxu0 0.0
  %2042 = vmatprep.subr.mxu0 0.0
  %2043 = vmatpush1.msra.mxu0 0.0
  %2044 = vmatprep.mubr.f32.mxu0 0.0
  %2045 = vmatmul.mubr.f32.gmra.mrb[0].mxu0 %v1978
  %v2046 = vpop.f32.mrb[0].mxu0
  %v2047 = vadd.f32 %v1382, %v2046
  %v2048 = vpop.f32.mrb[0].mxu0
  %2049 = vdwg.mxu0
  %v2051 = vrot.slane %v2047, 4
  %v2052 = vrot.slane %v2047, 5
  %v2055 = vadd.f32 %v1321, %v2051
  %v2056 = vadd.f32 %v1326, %v2052
  %v2057 = vxor.u32 %v2055, 2147483648
  %v2058 = vxor.u32 %v2056, 2147483648
  %v2059 = vmul.f32 %v2057, 1.442695
  %v2060 = vpow.pop %v2059
  %v2061 = vmul.f32 %v2058, 1.442695
  %v2062 = vpow.pop %v2061
  %v2063 = vadd.f32 %v2060, 1.0
  %v2064 = vadd.f32 %v2062, 1.0
  %v2065 = vrcp.pop %v2063
  %v2066 = vmul.f32 1.0, %v2065
  %v2067 = vrcp.pop %v2064
  %v2068 = vmul.f32 1.0, %v2067
  %2069 = vrot.lane.b32.xlu0 %v2051, 64
  %v2070 = vpop.permute.xlu0 %2069
  %2071 = vrot.lane.b32.xlu0 %v2052, 64
  %v2072 = vpop.permute.xlu0 %2071
  %v2075 = vmul.f32 %v2066, %v2070
  %v2076 = vmul.f32 %v2068, %v2072
  %2079 = vrot.lane.b32.xlu0 %v2075, 64
  %v2080 = vpop.permute.xlu0 %2079
  %2081 = vrot.lane.b32.xlu0 %v2076, 64
  %v2082 = vpop.permute.xlu0 %2081
  %v2085 = vadd.f32 %v1321, %v2080
  %v2086 = vadd.f32 %v1326, %v2082
  %v2087 = vtanh.pop %v2085
  %v2088 = vtanh.pop %v2086
  %v2089 = vsub.f32 1.0, %v2066
  %v2090 = vsub.f32 1.0, %v2068
  %2093 = vrot.lane.b32.xlu0 %v2087, 96
  %v2094 = vpop.permute.xlu0 %2093
  %2095 = vrot.lane.b32.xlu0 %v2088, 96
  %v2096 = vpop.permute.xlu0 %2095
  %v2099 = vmul.f32 %v2089, %v2094
  %v2100 = vmul.f32 %v2090, %v2096
  %v2101 = vrot.slane %v1971, 7
  %v2102 = vrot.slane %v1972, 7
  %2103 = vrot.lane.b32.xlu0 %v2101, 32
  %v2104 = vpop.permute.xlu0 %2103
  %2105 = vrot.lane.b32.xlu0 %v2102, 32
  %v2106 = vpop.permute.xlu0 %2105
  %v2109 = vmul.f32 %v2066, %v2104
  %v2110 = vmul.f32 %v2068, %v2106
  %v2111 = vadd.f32 %v2099, %v2109
  %v2112 = vadd.f32 %v2100, %v2110
  %2115 = vrot.lane.b32.xlu0 %v2111, 96
  %v2116 = vpop.permute.xlu0 %2115
  %2117 = vrot.lane.b32.xlu0 %v2112, 96
  %v2118 = vpop.permute.xlu0 %2117
  %v2123 = vsel %vm1371, %v2116, %v2101
  %v2124 = vsel %vm1372, %v2118, %v2102
  %v2127 = vrot.slane %v2123, 4
  %v2128 = vrot.slane %v2124, 3
  %v2129 = vsel %vm274, %v2128, %v2127
  %v2130 = vsel %vm502, %v2129, 0
  %2132 = vmatprep.subr.mxu0 0.0
  %2133 = vmatpush1.msra.mxu0 %v1373
  %2134 = vmatprep.subr.mxu0 0.0
  %2135 = vmatpush1.msra.mxu0 %v1374
  %2136 = vmatprep.subr.mxu0 0.0
  %2137 = vmatpush1.msra.mxu0 %v1375
  %2138 = vmatprep.subr.mxu0 0.0
  %2139 = vmatpush1.msra.mxu0 %v1376
  %2140 = vmatprep.subr.mxu0 0.0
  %2141 = vmatpush1.msra.mxu0 0.0
  %2142 = vmatprep.subr.mxu0 0.0
  %2143 = vmatpush1.msra.mxu0 0.0
  %2144 = vmatprep.subr.mxu0 0.0
  %2145 = vmatpush1.msra.mxu0 0.0
  %2146 = vmatprep.subr.mxu0 0.0
  %2147 = vmatpush1.msra.mxu0 0.0
  %2148 = vmatprep.subr.mxu0 0.0
  %2149 = vmatpush1.msra.mxu0 0.0
  %2150 = vmatprep.subr.mxu0 0.0
  %2151 = vmatpush1.msra.mxu0 0.0
  %2152 = vmatprep.subr.mxu0 0.0
  %2153 = vmatpush1.msra.mxu0 0.0
  %2154 = vmatprep.subr.mxu0 0.0
  %2155 = vmatpush1.msra.mxu0 0.0
  %2156 = vmatprep.subr.mxu0 0.0
  %2157 = vmatpush1.msra.mxu0 0.0
  %2158 = vmatprep.subr.mxu0 0.0
  %2159 = vmatpush1.msra.mxu0 0.0
  %2160 = vmatprep.subr.mxu0 0.0
  %2161 = vmatpush1.msra.mxu0 0.0
  %2162 = vmatprep.subr.mxu0 0.0
  %2163 = vmatpush1.msra.mxu0 0.0
  %2164 = vmatprep.subr.mxu0 0.0
  %2165 = vmatpush1.msra.mxu0 0.0
  %2166 = vmatprep.subr.mxu0 0.0
  %2167 = vmatpush1.msra.mxu0 0.0
  %2168 = vmatprep.subr.mxu0 0.0
  %2169 = vmatpush1.msra.mxu0 0.0
  %2170 = vmatprep.subr.mxu0 0.0
  %2171 = vmatpush1.msra.mxu0 0.0
  %2172 = vmatprep.subr.mxu0 0.0
  %2173 = vmatpush1.msra.mxu0 0.0
  %2174 = vmatprep.subr.mxu0 0.0
  %2175 = vmatpush1.msra.mxu0 0.0
  %2176 = vmatprep.subr.mxu0 0.0
  %2177 = vmatpush1.msra.mxu0 0.0
  %2178 = vmatprep.subr.mxu0 0.0
  %2179 = vmatpush1.msra.mxu0 0.0
  %2180 = vmatprep.subr.mxu0 0.0
  %2181 = vmatpush1.msra.mxu0 0.0
  %2182 = vmatprep.subr.mxu0 0.0
  %2183 = vmatpush1.msra.mxu0 0.0
  %2184 = vmatprep.subr.mxu0 0.0
  %2185 = vmatpush1.msra.mxu0 0.0
  %2186 = vmatprep.subr.mxu0 0.0
  %2187 = vmatpush1.msra.mxu0 0.0
  %2188 = vmatprep.subr.mxu0 0.0
  %2189 = vmatpush1.msra.mxu0 0.0
  %2190 = vmatprep.subr.mxu0 0.0
  %2191 = vmatpush1.msra.mxu0 0.0
  %2192 = vmatprep.subr.mxu0 0.0
  %2193 = vmatpush1.msra.mxu0 0.0
  %2194 = vmatprep.subr.mxu0 0.0
  %2195 = vmatpush1.msra.mxu0 0.0
  %2196 = vmatprep.mubr.f32.mxu0 0.0
  %2197 = vmatmul.mubr.f32.gmra.mrb[0].mxu0 %v2130
  %v2198 = vpop.f32.mrb[0].mxu0
  %v2199 = vadd.f32 %v1382, %v2198
  %v2200 = vpop.f32.mrb[0].mxu0
  %2201 = vdwg.mxu0
  %v2203 = vrot.slane %v2199, 3
  %v2204 = vrot.slane %v2199, 4
  %v2207 = vadd.f32 %v1321, %v2203
  %v2208 = vadd.f32 %v1326, %v2204
  %v2209 = vxor.u32 %v2207, 2147483648
  %v2210 = vxor.u32 %v2208, 2147483648
  %v2211 = vmul.f32 %v2209, 1.442695
  %v2212 = vpow.pop %v2211
  %v2213 = vmul.f32 %v2210, 1.442695
  %v2214 = vpow.pop %v2213
  %v2215 = vadd.f32 %v2212, 1.0
  %v2216 = vadd.f32 %v2214, 1.0
  %v2217 = vrcp.pop %v2215
  %v2218 = vmul.f32 1.0, %v2217
  %v2219 = vrcp.pop %v2216
  %v2220 = vmul.f32 1.0, %v2219
  %2221 = vrot.lane.b32.xlu0 %v2203, 64
  %v2222 = vpop.permute.xlu0 %2221
  %2223 = vrot.lane.b32.xlu0 %v2204, 64
  %v2224 = vpop.permute.xlu0 %2223
  %v2227 = vmul.f32 %v2218, %v2222
  %v2228 = vmul.f32 %v2220, %v2224
  %2231 = vrot.lane.b32.xlu0 %v2227, 64
  %v2232 = vpop.permute.xlu0 %2231
  %2233 = vrot.lane.b32.xlu0 %v2228, 64
  %v2234 = vpop.permute.xlu0 %2233
  %v2237 = vadd.f32 %v1321, %v2232
  %v2238 = vadd.f32 %v1326, %v2234
  %v2239 = vtanh.pop %v2237
  %v2240 = vtanh.pop %v2238
  %v2241 = vsub.f32 1.0, %v2218
  %v2242 = vsub.f32 1.0, %v2220
  %2245 = vrot.lane.b32.xlu0 %v2239, 96
  %v2246 = vpop.permute.xlu0 %2245
  %2247 = vrot.lane.b32.xlu0 %v2240, 96
  %v2248 = vpop.permute.xlu0 %2247
  %v2251 = vmul.f32 %v2241, %v2246
  %v2252 = vmul.f32 %v2242, %v2248
  %v2253 = vrot.slane %v2123, 7
  %v2254 = vrot.slane %v2124, 7
  %2255 = vrot.lane.b32.xlu0 %v2253, 32
  %v2256 = vpop.permute.xlu0 %2255
  %2257 = vrot.lane.b32.xlu0 %v2254, 32
  %v2258 = vpop.permute.xlu0 %2257
  %v2261 = vmul.f32 %v2218, %v2256
  %v2262 = vmul.f32 %v2220, %v2258
  %v2263 = vadd.f32 %v2251, %v2261
  %v2264 = vadd.f32 %v2252, %v2262
  %2267 = vrot.lane.b32.xlu0 %v2263, 96
  %v2268 = vpop.permute.xlu0 %2267
  %2269 = vrot.lane.b32.xlu0 %v2264, 96
  %v2270 = vpop.permute.xlu0 %2269
  %v2275 = vsel %vm1371, %v2268, %v2253
  %v2276 = vsel %vm1372, %v2270, %v2254
  %v2279 = vrot.slane %v2275, 5
  %v2280 = vrot.slane %v2276, 4
  %v2281 = vsel %vm274, %v2280, %v2279
  %v2282 = vsel %vm502, %v2281, 0
  %2284 = vmatprep.subr.mxu0 0.0
  %2285 = vmatpush1.msra.mxu0 %v1373
  %2286 = vmatprep.subr.mxu0 0.0
  %2287 = vmatpush1.msra.mxu0 %v1374
  %2288 = vmatprep.subr.mxu0 0.0
  %2289 = vmatpush1.msra.mxu0 %v1375
  %2290 = vmatprep.subr.mxu0 0.0
  %2291 = vmatpush1.msra.mxu0 %v1376
  %2292 = vmatprep.subr.mxu0 0.0
  %2293 = vmatpush1.msra.mxu0 0.0
  %2294 = vmatprep.subr.mxu0 0.0
  %2295 = vmatpush1.msra.mxu0 0.0
  %2296 = vmatprep.subr.mxu0 0.0
  %2297 = vmatpush1.msra.mxu0 0.0
  %2298 = vmatprep.subr.mxu0 0.0
  %2299 = vmatpush1.msra.mxu0 0.0
  %2300 = vmatprep.subr.mxu0 0.0
  %2301 = vmatpush1.msra.mxu0 0.0
  %2302 = vmatprep.subr.mxu0 0.0
  %2303 = vmatpush1.msra.mxu0 0.0
  %2304 = vmatprep.subr.mxu0 0.0
  %2305 = vmatpush1.msra.mxu0 0.0
  %2306 = vmatprep.subr.mxu0 0.0
  %2307 = vmatpush1.msra.mxu0 0.0
  %2308 = vmatprep.subr.mxu0 0.0
  %2309 = vmatpush1.msra.mxu0 0.0
  %2310 = vmatprep.subr.mxu0 0.0
  %2311 = vmatpush1.msra.mxu0 0.0
  %2312 = vmatprep.subr.mxu0 0.0
  %2313 = vmatpush1.msra.mxu0 0.0
  %2314 = vmatprep.subr.mxu0 0.0
  %2315 = vmatpush1.msra.mxu0 0.0
  %2316 = vmatprep.subr.mxu0 0.0
  %2317 = vmatpush1.msra.mxu0 0.0
  %2318 = vmatprep.subr.mxu0 0.0
  %2319 = vmatpush1.msra.mxu0 0.0
  %2320 = vmatprep.subr.mxu0 0.0
  %2321 = vmatpush1.msra.mxu0 0.0
  %2322 = vmatprep.subr.mxu0 0.0
  %2323 = vmatpush1.msra.mxu0 0.0
  %2324 = vmatprep.subr.mxu0 0.0
  %2325 = vmatpush1.msra.mxu0 0.0
  %2326 = vmatprep.subr.mxu0 0.0
  %2327 = vmatpush1.msra.mxu0 0.0
  %2328 = vmatprep.subr.mxu0 0.0
  %2329 = vmatpush1.msra.mxu0 0.0
  %2330 = vmatprep.subr.mxu0 0.0
  %2331 = vmatpush1.msra.mxu0 0.0
  %2332 = vmatprep.subr.mxu0 0.0
  %2333 = vmatpush1.msra.mxu0 0.0
  %2334 = vmatprep.subr.mxu0 0.0
  %2335 = vmatpush1.msra.mxu0 0.0
  %2336 = vmatprep.subr.mxu0 0.0
  %2337 = vmatpush1.msra.mxu0 0.0
  %2338 = vmatprep.subr.mxu0 0.0
  %2339 = vmatpush1.msra.mxu0 0.0
  %2340 = vmatprep.subr.mxu0 0.0
  %2341 = vmatpush1.msra.mxu0 0.0
  %2342 = vmatprep.subr.mxu0 0.0
  %2343 = vmatpush1.msra.mxu0 0.0
  %2344 = vmatprep.subr.mxu0 0.0
  %2345 = vmatpush1.msra.mxu0 0.0
  %2346 = vmatprep.subr.mxu0 0.0
  %2347 = vmatpush1.msra.mxu0 0.0
  %2348 = vmatprep.mubr.f32.mxu0 0.0
  %2349 = vmatmul.mubr.f32.gmra.mrb[0].mxu0 %v2282
  %v2350 = vpop.f32.mrb[0].mxu0
  %v2351 = vadd.f32 %v1382, %v2350
  %v2352 = vpop.f32.mrb[0].mxu0
  %2353 = vdwg.mxu0
  %v2355 = vrot.slane %v2351, 2
  %v2356 = vrot.slane %v2351, 3
  %v2359 = vadd.f32 %v1321, %v2355
  %v2360 = vadd.f32 %v1326, %v2356
  %v2361 = vxor.u32 %v2359, 2147483648
  %v2362 = vxor.u32 %v2360, 2147483648
  %v2363 = vmul.f32 %v2361, 1.442695
  %v2364 = vpow.pop %v2363
  %v2365 = vmul.f32 %v2362, 1.442695
  %v2366 = vpow.pop %v2365
  %v2367 = vadd.f32 %v2364, 1.0
  %v2368 = vadd.f32 %v2366, 1.0
  %v2369 = vrcp.pop %v2367
  %v2370 = vmul.f32 1.0, %v2369
  %v2371 = vrcp.pop %v2368
  %v2372 = vmul.f32 1.0, %v2371
  %2373 = vrot.lane.b32.xlu0 %v2355, 64
  %v2374 = vpop.permute.xlu0 %2373
  %2375 = vrot.lane.b32.xlu0 %v2356, 64
  %v2376 = vpop.permute.xlu0 %2375
  %v2379 = vmul.f32 %v2370, %v2374
  %v2380 = vmul.f32 %v2372, %v2376
  %2383 = vrot.lane.b32.xlu0 %v2379, 64
  %v2384 = vpop.permute.xlu0 %2383
  %2385 = vrot.lane.b32.xlu0 %v2380, 64
  %v2386 = vpop.permute.xlu0 %2385
  %v2389 = vadd.f32 %v1321, %v2384
  %v2390 = vadd.f32 %v1326, %v2386
  %v2391 = vtanh.pop %v2389
  %v2392 = vtanh.pop %v2390
  %v2393 = vsub.f32 1.0, %v2370
  %v2394 = vsub.f32 1.0, %v2372
  %2397 = vrot.lane.b32.xlu0 %v2391, 96
  %v2398 = vpop.permute.xlu0 %2397
  %2399 = vrot.lane.b32.xlu0 %v2392, 96
  %v2400 = vpop.permute.xlu0 %2399
  %v2403 = vmul.f32 %v2393, %v2398
  %v2404 = vmul.f32 %v2394, %v2400
  %v2405 = vrot.slane %v2275, 7
  %v2406 = vrot.slane %v2276, 7
  %2407 = vrot.lane.b32.xlu0 %v2405, 32
  %v2408 = vpop.permute.xlu0 %2407
  %2409 = vrot.lane.b32.xlu0 %v2406, 32
  %v2410 = vpop.permute.xlu0 %2409
  %v2413 = vmul.f32 %v2370, %v2408
  %v2414 = vmul.f32 %v2372, %v2410
  %v2415 = vadd.f32 %v2403, %v2413
  %v2416 = vadd.f32 %v2404, %v2414
  %2419 = vrot.lane.b32.xlu0 %v2415, 96
  %v2420 = vpop.permute.xlu0 %2419
  %2421 = vrot.lane.b32.xlu0 %v2416, 96
  %v2422 = vpop.permute.xlu0 %2421
  %v2427 = vsel %vm1371, %v2420, %v2405
  %v2428 = vsel %vm1372, %v2422, %v2406
  %v2431 = vrot.slane %v2427, 6
  %v2432 = vrot.slane %v2428, 5
  %v2433 = vsel %vm274, %v2432, %v2431
  %v2434 = vsel %vm502, %v2433, 0
  %2436 = vmatprep.subr.mxu0 0.0
  %2437 = vmatpush1.msra.mxu0 %v1373
  %2438 = vmatprep.subr.mxu0 0.0
  %2439 = vmatpush1.msra.mxu0 %v1374
  %2440 = vmatprep.subr.mxu0 0.0
  %2441 = vmatpush1.msra.mxu0 %v1375
  %2442 = vmatprep.subr.mxu0 0.0
  %2443 = vmatpush1.msra.mxu0 %v1376
  %2444 = vmatprep.subr.mxu0 0.0
  %2445 = vmatpush1.msra.mxu0 0.0
  %2446 = vmatprep.subr.mxu0 0.0
  %2447 = vmatpush1.msra.mxu0 0.0
  %2448 = vmatprep.subr.mxu0 0.0
  %2449 = vmatpush1.msra.mxu0 0.0
  %2450 = vmatprep.subr.mxu0 0.0
  %2451 = vmatpush1.msra.mxu0 0.0
  %2452 = vmatprep.subr.mxu0 0.0
  %2453 = vmatpush1.msra.mxu0 0.0
  %2454 = vmatprep.subr.mxu0 0.0
  %2455 = vmatpush1.msra.mxu0 0.0
  %2456 = vmatprep.subr.mxu0 0.0
  %2457 = vmatpush1.msra.mxu0 0.0
  %2458 = vmatprep.subr.mxu0 0.0
  %2459 = vmatpush1.msra.mxu0 0.0
  %2460 = vmatprep.subr.mxu0 0.0
  %2461 = vmatpush1.msra.mxu0 0.0
  %2462 = vmatprep.subr.mxu0 0.0
  %2463 = vmatpush1.msra.mxu0 0.0
  %2464 = vmatprep.subr.mxu0 0.0
  %2465 = vmatpush1.msra.mxu0 0.0
  %2466 = vmatprep.subr.mxu0 0.0
  %2467 = vmatpush1.msra.mxu0 0.0
  %2468 = vmatprep.subr.mxu0 0.0
  %2469 = vmatpush1.msra.mxu0 0.0
  %2470 = vmatprep.subr.mxu0 0.0
  %2471 = vmatpush1.msra.mxu0 0.0
  %2472 = vmatprep.subr.mxu0 0.0
  %2473 = vmatpush1.msra.mxu0 0.0
  %2474 = vmatprep.subr.mxu0 0.0
  %2475 = vmatpush1.msra.mxu0 0.0
  %2476 = vmatprep.subr.mxu0 0.0
  %2477 = vmatpush1.msra.mxu0 0.0
  %2478 = vmatprep.subr.mxu0 0.0
  %2479 = vmatpush1.msra.mxu0 0.0
  %2480 = vmatprep.subr.mxu0 0.0
  %2481 = vmatpush1.msra.mxu0 0.0
  %2482 = vmatprep.subr.mxu0 0.0
  %2483 = vmatpush1.msra.mxu0 0.0
  %2484 = vmatprep.subr.mxu0 0.0
  %2485 = vmatpush1.msra.mxu0 0.0
  %2486 = vmatprep.subr.mxu0 0.0
  %2487 = vmatpush1.msra.mxu0 0.0
  %2488 = vmatprep.subr.mxu0 0.0
  %2489 = vmatpush1.msra.mxu0 0.0
  %2490 = vmatprep.subr.mxu0 0.0
  %2491 = vmatpush1.msra.mxu0 0.0
  %2492 = vmatprep.subr.mxu0 0.0
  %2493 = vmatpush1.msra.mxu0 0.0
  %2494 = vmatprep.subr.mxu0 0.0
  %2495 = vmatpush1.msra.mxu0 0.0
  %2496 = vmatprep.subr.mxu0 0.0
  %2497 = vmatpush1.msra.mxu0 0.0
  %2498 = vmatprep.subr.mxu0 0.0
  %2499 = vmatpush1.msra.mxu0 0.0
  %2500 = vmatprep.mubr.f32.mxu0 0.0
  %2501 = vmatmul.mubr.f32.gmra.mrb[0].mxu0 %v2434
  %v2502 = vpop.f32.mrb[0].mxu0
  %v2503 = vadd.f32 %v1382, %v2502
  %v2504 = vpop.f32.mrb[0].mxu0
  %2505 = vdwg.mxu0
  %v2507 = vrot.slane %v2503, 1
  %v2508 = vrot.slane %v2503, 2
  %v2511 = vadd.f32 %v1321, %v2507
  %v2512 = vadd.f32 %v1326, %v2508
  %v2513 = vxor.u32 %v2511, 2147483648
  %v2514 = vxor.u32 %v2512, 2147483648
  %v2515 = vmul.f32 %v2513, 1.442695
  %v2516 = vpow.pop %v2515
  %v2517 = vmul.f32 %v2514, 1.442695
  %v2518 = vpow.pop %v2517
  %v2519 = vadd.f32 %v2516, 1.0
  %v2520 = vadd.f32 %v2518, 1.0
  %v2521 = vrcp.pop %v2519
  %v2522 = vmul.f32 1.0, %v2521
  %v2523 = vrcp.pop %v2520
  %v2524 = vmul.f32 1.0, %v2523
  %2525 = vrot.lane.b32.xlu0 %v2507, 64
  %v2526 = vpop.permute.xlu0 %2525
  %2527 = vrot.lane.b32.xlu0 %v2508, 64
  %v2528 = vpop.permute.xlu0 %2527
  %v2531 = vmul.f32 %v2522, %v2526
  %v2532 = vmul.f32 %v2524, %v2528
  %2535 = vrot.lane.b32.xlu0 %v2531, 64
  %v2536 = vpop.permute.xlu0 %2535
  %2537 = vrot.lane.b32.xlu0 %v2532, 64
  %v2538 = vpop.permute.xlu0 %2537
  %v2541 = vadd.f32 %v1321, %v2536
  %v2542 = vadd.f32 %v1326, %v2538
  %v2543 = vtanh.pop %v2541
  %v2544 = vtanh.pop %v2542
  %v2545 = vsub.f32 1.0, %v2522
  %v2546 = vsub.f32 1.0, %v2524
  %2549 = vrot.lane.b32.xlu0 %v2543, 96
  %v2550 = vpop.permute.xlu0 %2549
  %2551 = vrot.lane.b32.xlu0 %v2544, 96
  %v2552 = vpop.permute.xlu0 %2551
  %v2555 = vmul.f32 %v2545, %v2550
  %v2556 = vmul.f32 %v2546, %v2552
  %v2557 = vrot.slane %v2427, 7
  %v2558 = vrot.slane %v2428, 7
  %2559 = vrot.lane.b32.xlu0 %v2557, 32
  %v2560 = vpop.permute.xlu0 %2559
  %2561 = vrot.lane.b32.xlu0 %v2558, 32
  %v2562 = vpop.permute.xlu0 %2561
  %v2565 = vmul.f32 %v2522, %v2560
  %v2566 = vmul.f32 %v2524, %v2562
  %v2567 = vadd.f32 %v2555, %v2565
  %v2568 = vadd.f32 %v2556, %v2566
  %2571 = vrot.lane.b32.xlu0 %v2567, 96
  %v2572 = vpop.permute.xlu0 %2571
  %2573 = vrot.lane.b32.xlu0 %v2568, 96
  %v2574 = vpop.permute.xlu0 %2573
  %v2579 = vsel %vm1371, %v2572, %v2557
  %v2580 = vsel %vm1372, %v2574, %v2558
  %2581 = vset.pattern.permute.xlu0 0
  %2582 = vperm.xlu0 %2581, %v1349
  %v2583 = vpop.permute.xlu0 %2582
  %v2584 = vlaneseq
  %v2585 = vshrl.u32 %v2584, 7
  %v2586 = vsub.s32 0, %v2585
  %v2587 = vrot.slane %v2583, %v2586
  %2588 = vset.pattern.permute.xlu0 0
  %2589 = vperm.xlu0 %2588, %v1356
  %v2590 = vpop.permute.xlu0 %2589
  %v2591 = vlaneseq
  %v2592 = vshrl.u32 %v2591, 7
  %v2593 = vsub.s32 0, %v2592
  %v2594 = vrot.slane %v2590, %v2593
  %vm2595 = vcmp.ge.s32.totalorder %v349, %v2587
  %vm2596 = vcmp.ge.s32.totalorder %v349, %v2594
  %v2597 = vld [vmem:[%s17] sm:$0xff]
  %v2598 = vld [vmem:[%s17 + $0x8] sm:$0xff]
  %v2599 = vld [vmem:[%s17 + $0x10] sm:$0xff]
  %v2600 = vld [vmem:[%s17 + $0x18] sm:$0xff]
  %v2601 = vld [vmem:[%s18] sm:$0x3]
  %v2602 = vld [vmem:[%s19] sm:$0xff]
  %v2603 = vld [vmem:[%s19 + $0x8] sm:$0xff]
  %v2604 = vld [vmem:[%s19 + $0x10] sm:$0xff]
  %v2605 = vld [vmem:[%s19 + $0x18] sm:$0xff]
  %v2606 = vld [vmem:[%s20] sm:$0x1]
  %v2607 = vld [vmem:[%s21] sm:$0x1]
  %v2608 = vld [vmem:[%s22] sm:$0x1]
  %v2609 = vpack.c.bf16 %v1210, %v1205
  %v2610 = vpack.c.bf16 %v2598, %v2597
  %v2611 = vpack.c.bf16 %v2600, %v2599
  %v2613 = vsel %vm502, %v2609, 0
  %2615 = vmatprep.subr.bf16.mxu0 0
  %2616 = vmatpush1.bf16.msra.mxu0 %v2610
  %2617 = vmatprep.subr.bf16.mxu0 0
  %2618 = vmatpush1.bf16.msra.mxu0 %v2611
  %2619 = vmatprep.subr.bf16.mxu0 0
  %2620 = vmatpush1.bf16.msra.mxu0 0
  %2621 = vmatprep.subr.bf16.mxu0 0
  %2622 = vmatpush1.bf16.msra.mxu0 0
  %2623 = vmatprep.subr.bf16.mxu0 0
  %2624 = vmatpush1.bf16.msra.mxu0 0
  %2625 = vmatprep.subr.bf16.mxu0 0
  %2626 = vmatpush1.bf16.msra.mxu0 0
  %2627 = vmatprep.subr.bf16.mxu0 0
  %2628 = vmatpush1.bf16.msra.mxu0 0
  %2629 = vmatprep.subr.bf16.mxu0 0
  %2630 = vmatpush1.bf16.msra.mxu0 0
  %2631 = vmatprep.subr.bf16.mxu0 0
  %2632 = vmatpush1.bf16.msra.mxu0 0
  %2633 = vmatprep.subr.bf16.mxu0 0
  %2634 = vmatpush1.bf16.msra.mxu0 0
  %2635 = vmatprep.subr.bf16.mxu0 0
  %2636 = vmatpush1.bf16.msra.mxu0 0
  %2637 = vmatprep.subr.bf16.mxu0 0
  %2638 = vmatpush1.bf16.msra.mxu0 0
  %2639 = vmatprep.subr.bf16.mxu0 0
  %2640 = vmatpush1.bf16.msra.mxu0 0
  %2641 = vmatprep.subr.bf16.mxu0 0
  %2642 = vmatpush1.bf16.msra.mxu0 0
  %2643 = vmatprep.subr.bf16.mxu0 0
  %2644 = vmatpush1.bf16.msra.mxu0 0
  %2645 = vmatprep.subr.bf16.mxu0 0
  %2646 = vmatpush1.bf16.msra.mxu0 0
  %2647 = vmatprep.mubr.bf16.mxu0 0
  %2648 = vmatmul.mubr.bf16.gmra.mrb[0].mxu0 %v2613
  %v2649 = vpop.f32.mrb[0].mxu0
  %v2650 = vadd.f32 0.0, %v2649
  %v2651 = vpop.f32.mrb[0].mxu0
  %v2652 = vpop.f32.mrb[0].mxu0
  %v2653 = vadd.f32 0.0, %v2652
  %v2654 = vpop.f32.mrb[0].mxu0
  %2655 = vdwg.mxu0
  %v2656 = vtanh.pop %v2650
  %v2657 = vtanh.pop %v2653
  %vm2658 = vcmask 130048
  %v2660 = vsel %vm2658, %v2601, 0
  %v2663 = vsel %vm2658, %v2656, 0
  %2665 = vmatprep.subr.mxu0 0.0
  %2666 = vmatpush1.xpose.msra.mxu0 %v2663
  %2667 = vmatprep.subr.mxu0 0.0
  %2668 = vmatpush1.xpose.msra.mxu0 0.0
  %2669 = vmatprep.subr.mxu0 0.0
  %2670 = vmatpush1.xpose.msra.mxu0 0.0
  %2671 = vmatprep.subr.mxu0 0.0
  %2672 = vmatpush1.xpose.msra.mxu0 0.0
  %2673 = vmatprep.subr.mxu0 0.0
  %2674 = vmatpush1.xpose.msra.mxu0 0.0
  %2675 = vmatprep.subr.mxu0 0.0
  %2676 = vmatpush1.xpose.msra.mxu0 0.0
  %2677 = vmatprep.subr.mxu0 0.0
  %2678 = vmatpush1.xpose.msra.mxu0 0.0
  %2679 = vmatprep.subr.mxu0 0.0
  %2680 = vmatpush1.xpose.msra.mxu0 0.0
  %2681 = vmatprep.subr.mxu0 0.0
  %2682 = vmatpush1.xpose.msra.mxu0 0.0
  %2683 = vmatprep.subr.mxu0 0.0
  %2684 = vmatpush1.xpose.msra.mxu0 0.0
  %2685 = vmatprep.subr.mxu0 0.0
  %2686 = vmatpush1.xpose.msra.mxu0 0.0
  %2687 = vmatprep.subr.mxu0 0.0
  %2688 = vmatpush1.xpose.msra.mxu0 0.0
  %2689 = vmatprep.subr.mxu0 0.0
  %2690 = vmatpush1.xpose.msra.mxu0 0.0
  %2691 = vmatprep.subr.mxu0 0.0
  %2692 = vmatpush1.xpose.msra.mxu0 0.0
  %2693 = vmatprep.subr.mxu0 0.0
  %2694 = vmatpush1.xpose.msra.mxu0 0.0
  %2695 = vmatprep.subr.mxu0 0.0
  %2696 = vmatpush1.xpose.msra.mxu0 0.0
  %2697 = vmatprep.subr.mxu0 0.0
  %2698 = vmatpush1.xpose.msra.mxu0 0.0
  %2699 = vmatprep.subr.mxu0 0.0
  %2700 = vmatpush1.xpose.msra.mxu0 0.0
  %2701 = vmatprep.subr.mxu0 0.0
  %2702 = vmatpush1.xpose.msra.mxu0 0.0
  %2703 = vmatprep.subr.mxu0 0.0
  %2704 = vmatpush1.xpose.msra.mxu0 0.0
  %2705 = vmatprep.subr.mxu0 0.0
  %2706 = vmatpush1.xpose.msra.mxu0 0.0
  %2707 = vmatprep.subr.mxu0 0.0
  %2708 = vmatpush1.xpose.msra.mxu0 0.0
  %2709 = vmatprep.subr.mxu0 0.0
  %2710 = vmatpush1.xpose.msra.mxu0 0.0
  %2711 = vmatprep.subr.mxu0 0.0
  %2712 = vmatpush1.xpose.msra.mxu0 0.0
  %2713 = vmatprep.subr.mxu0 0.0
  %2714 = vmatpush1.xpose.msra.mxu0 0.0
  %2715 = vmatprep.subr.mxu0 0.0
  %2716 = vmatpush1.xpose.msra.mxu0 0.0
  %2717 = vmatprep.subr.mxu0 0.0
  %2718 = vmatpush1.xpose.msra.mxu0 0.0
  %2719 = vmatprep.subr.mxu0 0.0
  %2720 = vmatpush1.xpose.msra.mxu0 0.0
  %2721 = vmatprep.subr.mxu0 0.0
  %2722 = vmatpush1.xpose.msra.mxu0 0.0
  %2723 = vmatprep.subr.mxu0 0.0
  %2724 = vmatpush1.xpose.msra.mxu0 0.0
  %2725 = vmatprep.subr.mxu0 0.0
  %2726 = vmatpush1.xpose.msra.mxu0 0.0
  %2727 = vmatprep.subr.mxu0 0.0
  %2728 = vmatpush1.xpose.msra.mxu0 0.0
  %2729 = vmatprep.mubr.f32.mxu0 0.0
  %2730 = vmatmul.mubr.f32.gmra.mrb[0].mxu0 %v2660
  %v2731 = vpop.f32.mrb[0].mxu0
  %v2732 = vadd.f32 0.0, %v2731
  %v2733 = vpop.f32.mrb[0].mxu0
  %2734 = vdwg.mxu0
  %v2736 = vsel %vm2658, %v2657, 0
  %2738 = vmatprep.subr.mxu0 0.0
  %2739 = vmatpush1.xpose.msra.mxu0 %v2736
  %2740 = vmatprep.subr.mxu0 0.0
  %2741 = vmatpush1.xpose.msra.mxu0 0.0
  %2742 = vmatprep.subr.mxu0 0.0
  %2743 = vmatpush1.xpose.msra.mxu0 0.0
  %2744 = vmatprep.subr.mxu0 0.0
  %2745 = vmatpush1.xpose.msra.mxu0 0.0
  %2746 = vmatprep.subr.mxu0 0.0
  %2747 = vmatpush1.xpose.msra.mxu0 0.0
  %2748 = vmatprep.subr.mxu0 0.0
  %2749 = vmatpush1.xpose.msra.mxu0 0.0
  %2750 = vmatprep.subr.mxu0 0.0
  %2751 = vmatpush1.xpose.msra.mxu0 0.0
  %2752 = vmatprep.subr.mxu0 0.0
  %2753 = vmatpush1.xpose.msra.mxu0 0.0
  %2754 = vmatprep.subr.mxu0 0.0
  %2755 = vmatpush1.xpose.msra.mxu0 0.0
  %2756 = vmatprep.subr.mxu0 0.0
  %2757 = vmatpush1.xpose.msra.mxu0 0.0
  %2758 = vmatprep.subr.mxu0 0.0
  %2759 = vmatpush1.xpose.msra.mxu0 0.0
  %2760 = vmatprep.subr.mxu0 0.0
  %2761 = vmatpush1.xpose.msra.mxu0 0.0
  %2762 = vmatprep.subr.mxu0 0.0
  %2763 = vmatpush1.xpose.msra.mxu0 0.0
  %2764 = vmatprep.subr.mxu0 0.0
  %2765 = vmatpush1.xpose.msra.mxu0 0.0
  %2766 = vmatprep.subr.mxu0 0.0
  %2767 = vmatpush1.xpose.msra.mxu0 0.0
  %2768 = vmatprep.subr.mxu0 0.0
  %2769 = vmatpush1.xpose.msra.mxu0 0.0
  %2770 = vmatprep.subr.mxu0 0.0
  %2771 = vmatpush1.xpose.msra.mxu0 0.0
  %2772 = vmatprep.subr.mxu0 0.0
  %2773 = vmatpush1.xpose.msra.mxu0 0.0
  %2774 = vmatprep.subr.mxu0 0.0
  %2775 = vmatpush1.xpose.msra.mxu0 0.0
  %2776 = vmatprep.subr.mxu0 0.0
  %2777 = vmatpush1.xpose.msra.mxu0 0.0
  %2778 = vmatprep.subr.mxu0 0.0
  %2779 = vmatpush1.xpose.msra.mxu0 0.0
  %2780 = vmatprep.subr.mxu0 0.0
  %2781 = vmatpush1.xpose.msra.mxu0 0.0
  %2782 = vmatprep.subr.mxu0 0.0
  %2783 = vmatpush1.xpose.msra.mxu0 0.0
  %2784 = vmatprep.subr.mxu0 0.0
  %2785 = vmatpush1.xpose.msra.mxu0 0.0
  %2786 = vmatprep.subr.mxu0 0.0
  %2787 = vmatpush1.xpose.msra.mxu0 0.0
  %2788 = vmatprep.subr.mxu0 0.0
  %2789 = vmatpush1.xpose.msra.mxu0 0.0
  %2790 = vmatprep.subr.mxu0 0.0
  %2791 = vmatpush1.xpose.msra.mxu0 0.0
  %2792 = vmatprep.subr.mxu0 0.0
  %2793 = vmatpush1.xpose.msra.mxu0 0.0
  %2794 = vmatprep.subr.mxu0 0.0
  %2795 = vmatpush1.xpose.msra.mxu0 0.0
  %2796 = vmatprep.subr.mxu0 0.0
  %2797 = vmatpush1.xpose.msra.mxu0 0.0
  %2798 = vmatprep.subr.mxu0 0.0
  %2799 = vmatpush1.xpose.msra.mxu0 0.0
  %2800 = vmatprep.subr.mxu0 0.0
  %2801 = vmatpush1.xpose.msra.mxu0 0.0
  %2802 = vmatprep.mubr.f32.mxu0 0.0
  %2803 = vmatmul.mubr.f32.gmra.mrb[0].mxu0 %v2660
  %v2804 = vpop.f32.mrb[0].mxu0
  %v2805 = vadd.f32 0.0, %v2804
  %v2806 = vpop.f32.mrb[0].mxu0
  %2807 = vdwg.mxu0
  %v2808 = vsel %vm2595, 1, 0
  %v2809 = vsel %vm2596, 1, 0
  %vm2810 = vcmp.eq.s32.totalorder %v2808, 1
  %vm2811 = vcmp.eq.s32.totalorder %v2809, 1
  %v2812 = vsel %vm2810, -1e+30, %v2732
  %v2813 = vsel %vm2811, -1e+30, %v2805
  %vm2814 = vcmask 58368
  %v2815 = vsel %vm2814, %v2812, -inf
  %2816 = vmax.xlane.f32.xlu0 %v2815
  %v2817 = vpop.xlane.xlu0 %2816
  %v2818 = vsel %vm2814, %v2813, -inf
  %2819 = vmax.xlane.f32.xlu0 %v2818
  %v2820 = vpop.xlane.xlu0 %2819
  %v2821 = vsub.f32 %v2812, %v2817
  %v2822 = vsub.f32 %v2813, %v2820
  %v2823 = vmul.f32 %v2821, 1.442695
  %v2824 = vpow.pop %v2823
  %v2825 = vmul.f32 %v2822, 1.442695
  %v2826 = vpow.pop %v2825
  %v2827 = vsel %vm2814, %v2824, 0.0
  %2828 = vadd.xlane.f32.xlu0 %v2827
  %v2829 = vpop.xlane.xlu0 %2828
  %v2830 = vsel %vm2814, %v2826, 0.0
  %2831 = vadd.xlane.f32.xlu0 %v2830
  %v2832 = vpop.xlane.xlu0 %2831
  %v2833 = vrcp.pop %v2829
  %v2834 = vrcp.pop %v2832
  %v2835 = vmul.f32 %v2824, %v2833
  %v2836 = vmul.f32 %v2826, %v2834
  %vm2837 = vcmask 64512
  %v2839 = vsel %vm2837, %v2835, 0
  %2841 = vmatprep.subr.mxu0 0.0
  %2842 = vmatpush1.msra.mxu0 %v1205
  %2843 = vmatprep.subr.mxu0 0.0
  %2844 = vmatpush1.msra.mxu0 0.0
  %2845 = vmatprep.subr.mxu0 0.0
  %2846 = vmatpush1.msra.mxu0 0.0
  %2847 = vmatprep.subr.mxu0 0.0
  %2848 = vmatpush1.msra.mxu0 0.0
  %2849 = vmatprep.subr.mxu0 0.0
  %2850 = vmatpush1.msra.mxu0 0.0
  %2851 = vmatprep.subr.mxu0 0.0
  %2852 = vmatpush1.msra.mxu0 0.0
  %2853 = vmatprep.subr.mxu0 0.0
  %2854 = vmatpush1.msra.mxu0 0.0
  %2855 = vmatprep.subr.mxu0 0.0
  %2856 = vmatpush1.msra.mxu0 0.0
  %2857 = vmatprep.subr.mxu0 0.0
  %2858 = vmatpush1.msra.mxu0 0.0
  %2859 = vmatprep.subr.mxu0 0.0
  %2860 = vmatpush1.msra.mxu0 0.0
  %2861 = vmatprep.subr.mxu0 0.0
  %2862 = vmatpush1.msra.mxu0 0.0
  %2863 = vmatprep.subr.mxu0 0.0
  %2864 = vmatpush1.msra.mxu0 0.0
  %2865 = vmatprep.subr.mxu0 0.0
  %2866 = vmatpush1.msra.mxu0 0.0
  %2867 = vmatprep.subr.mxu0 0.0
  %2868 = vmatpush1.msra.mxu0 0.0
  %2869 = vmatprep.subr.mxu0 0.0
  %2870 = vmatpush1.msra.mxu0 0.0
  %2871 = vmatprep.subr.mxu0 0.0
  %2872 = vmatpush1.msra.mxu0 0.0
  %2873 = vmatprep.subr.mxu0 0.0
  %2874 = vmatpush1.msra.mxu0 0.0
  %2875 = vmatprep.subr.mxu0 0.0
  %2876 = vmatpush1.msra.mxu0 0.0
  %2877 = vmatprep.subr.mxu0 0.0
  %2878 = vmatpush1.msra.mxu0 0.0
  %2879 = vmatprep.subr.mxu0 0.0
  %2880 = vmatpush1.msra.mxu0 0.0
  %2881 = vmatprep.subr.mxu0 0.0
  %2882 = vmatpush1.msra.mxu0 0.0
  %2883 = vmatprep.subr.mxu0 0.0
  %2884 = vmatpush1.msra.mxu0 0.0
  %2885 = vmatprep.subr.mxu0 0.0
  %2886 = vmatpush1.msra.mxu0 0.0
  %2887 = vmatprep.subr.mxu0 0.0
  %2888 = vmatpush1.msra.mxu0 0.0
  %2889 = vmatprep.subr.mxu0 0.0
  %2890 = vmatpush1.msra.mxu0 0.0
  %2891 = vmatprep.subr.mxu0 0.0
  %2892 = vmatpush1.msra.mxu0 0.0
  %2893 = vmatprep.subr.mxu0 0.0
  %2894 = vmatpush1.msra.mxu0 0.0
  %2895 = vmatprep.subr.mxu0 0.0
  %2896 = vmatpush1.msra.mxu0 0.0
  %2897 = vmatprep.subr.mxu0 0.0
  %2898 = vmatpush1.msra.mxu0 0.0
  %2899 = vmatprep.subr.mxu0 0.0
  %2900 = vmatpush1.msra.mxu0 0.0
  %2901 = vmatprep.subr.mxu0 0.0
  %2902 = vmatpush1.msra.mxu0 0.0
  %2903 = vmatprep.subr.mxu0 0.0
  %2904 = vmatpush1.msra.mxu0 0.0
  %2905 = vmatprep.mubr.f32.mxu0 0.0
  %2906 = vmatmul.mubr.f32.gmra.mrb[0].mxu0 %v2839
  %v2907 = vpop.f32.mrb[0].mxu0
  %v2908 = vadd.f32 0.0, %v2907
  %v2909 = vpop.f32.mrb[0].mxu0
  %2910 = vdwg.mxu0
  %v2912 = vsel %vm2837, %v2836, 0
  %2914 = vmatprep.subr.mxu0 0.0
  %2915 = vmatpush1.msra.mxu0 %v1210
  %2916 = vmatprep.subr.mxu0 0.0
  %2917 = vmatpush1.msra.mxu0 0.0
  %2918 = vmatprep.subr.mxu0 0.0
  %2919 = vmatpush1.msra.mxu0 0.0
  %2920 = vmatprep.subr.mxu0 0.0
  %2921 = vmatpush1.msra.mxu0 0.0
  %2922 = vmatprep.subr.mxu0 0.0
  %2923 = vmatpush1.msra.mxu0 0.0
  %2924 = vmatprep.subr.mxu0 0.0
  %2925 = vmatpush1.msra.mxu0 0.0
  %2926 = vmatprep.subr.mxu0 0.0
  %2927 = vmatpush1.msra.mxu0 0.0
  %2928 = vmatprep.subr.mxu0 0.0
  %2929 = vmatpush1.msra.mxu0 0.0
  %2930 = vmatprep.subr.mxu0 0.0
  %2931 = vmatpush1.msra.mxu0 0.0
  %2932 = vmatprep.subr.mxu0 0.0
  %2933 = vmatpush1.msra.mxu0 0.0
  %2934 = vmatprep.subr.mxu0 0.0
  %2935 = vmatpush1.msra.mxu0 0.0
  %2936 = vmatprep.subr.mxu0 0.0
  %2937 = vmatpush1.msra.mxu0 0.0
  %2938 = vmatprep.subr.mxu0 0.0
  %2939 = vmatpush1.msra.mxu0 0.0
  %2940 = vmatprep.subr.mxu0 0.0
  %2941 = vmatpush1.msra.mxu0 0.0
  %2942 = vmatprep.subr.mxu0 0.0
  %2943 = vmatpush1.msra.mxu0 0.0
  %2944 = vmatprep.subr.mxu0 0.0
  %2945 = vmatpush1.msra.mxu0 0.0
  %2946 = vmatprep.subr.mxu0 0.0
  %2947 = vmatpush1.msra.mxu0 0.0
  %2948 = vmatprep.subr.mxu0 0.0
  %2949 = vmatpush1.msra.mxu0 0.0
  %2950 = vmatprep.subr.mxu0 0.0
  %2951 = vmatpush1.msra.mxu0 0.0
  %2952 = vmatprep.subr.mxu0 0.0
  %2953 = vmatpush1.msra.mxu0 0.0
  %2954 = vmatprep.subr.mxu0 0.0
  %2955 = vmatpush1.msra.mxu0 0.0
  %2956 = vmatprep.subr.mxu0 0.0
  %2957 = vmatpush1.msra.mxu0 0.0
  %2958 = vmatprep.subr.mxu0 0.0
  %2959 = vmatpush1.msra.mxu0 0.0
  %2960 = vmatprep.subr.mxu0 0.0
  %2961 = vmatpush1.msra.mxu0 0.0
  %2962 = vmatprep.subr.mxu0 0.0
  %2963 = vmatpush1.msra.mxu0 0.0
  %2964 = vmatprep.subr.mxu0 0.0
  %2965 = vmatpush1.msra.mxu0 0.0
  %2966 = vmatprep.subr.mxu0 0.0
  %2967 = vmatpush1.msra.mxu0 0.0
  %2968 = vmatprep.subr.mxu0 0.0
  %2969 = vmatpush1.msra.mxu0 0.0
  %2970 = vmatprep.subr.mxu0 0.0
  %2971 = vmatpush1.msra.mxu0 0.0
  %2972 = vmatprep.subr.mxu0 0.0
  %2973 = vmatpush1.msra.mxu0 0.0
  %2974 = vmatprep.subr.mxu0 0.0
  %2975 = vmatpush1.msra.mxu0 0.0
  %2976 = vmatprep.subr.mxu0 0.0
  %2977 = vmatpush1.msra.mxu0 0.0
  %2978 = vmatprep.mubr.f32.mxu0 0.0
  %2979 = vmatmul.mubr.f32.gmra.mrb[0].mxu0 %v2912
  %v2980 = vpop.f32.mrb[0].mxu0
  %v2981 = vadd.f32 0.0, %v2980
  %v2982 = vpop.f32.mrb[0].mxu0
  %2983 = vdwg.mxu0
  %v2985 = vlaneseq
  %v2986 = vshrl.u32 %v2985, 7
  %v2987 = vsub.s32 0, %v2986
  %v2988 = vrot.slane %v2606, %v2987
  %v2991 = vcombine.low %v2908, %v2981
  %v2993 = vunpack.c.l.s4 1983009808
  %v2994 = vunpack.c.0.s8 %v2993
  %v2995 = vlaneseq
  %v2996 = vshrl.u32 %v2995, 7
  %v2997 = vsub.s32 %v2994, %v2996
  %v2998 = vrot.slane %v2991, %v2997
  %v2999 = vcombine.low %v2988, %v2988
  %v3001 = vunpack.c.l.s4 1983009808
  %v3002 = vunpack.c.0.s8 %v3001
  %v3003 = vlaneseq
  %v3004 = vshrl.u32 %v3003, 7
  %v3005 = vsub.s32 %v3002, %v3004
  %v3006 = vrot.slane %v2999, %v3005
  %v3008 = vsel %vm502, %v2998, 0
  %v3011 = vsel %vm502, %v2602, 0
  %v3014 = vsel %vm502, %v2603, 0
  %v3017 = vsel %vm502, %v2604, 0
  %v3020 = vsel %vm502, %v2605, 0
  %3022 = vmatprep.subr.mxu0 0.0
  %3023 = vmatpush1.xpose.msra.mxu0 %v3011
  %3024 = vmatprep.subr.mxu0 0.0
  %3025 = vmatpush1.xpose.msra.mxu0 %v3014
  %3026 = vmatprep.subr.mxu0 0.0
  %3027 = vmatpush1.xpose.msra.mxu0 %v3017
  %3028 = vmatprep.subr.mxu0 0.0
  %3029 = vmatpush1.xpose.msra.mxu0 %v3020
  %3030 = vmatprep.subr.mxu0 0.0
  %3031 = vmatpush1.xpose.msra.mxu0 0.0
  %3032 = vmatprep.subr.mxu0 0.0
  %3033 = vmatpush1.xpose.msra.mxu0 0.0
  %3034 = vmatprep.subr.mxu0 0.0
  %3035 = vmatpush1.xpose.msra.mxu0 0.0
  %3036 = vmatprep.subr.mxu0 0.0
  %3037 = vmatpush1.xpose.msra.mxu0 0.0
  %3038 = vmatprep.subr.mxu0 0.0
  %3039 = vmatpush1.xpose.msra.mxu0 0.0
  %3040 = vmatprep.subr.mxu0 0.0
  %3041 = vmatpush1.xpose.msra.mxu0 0.0
  %3042 = vmatprep.subr.mxu0 0.0
  %3043 = vmatpush1.xpose.msra.mxu0 0.0
  %3044 = vmatprep.subr.mxu0 0.0
  %3045 = vmatpush1.xpose.msra.mxu0 0.0
  %3046 = vmatprep.subr.mxu0 0.0
  %3047 = vmatpush1.xpose.msra.mxu0 0.0
  %3048 = vmatprep.subr.mxu0 0.0
  %3049 = vmatpush1.xpose.msra.mxu0 0.0
  %3050 = vmatprep.subr.mxu0 0.0
  %3051 = vmatpush1.xpose.msra.mxu0 0.0
  %3052 = vmatprep.subr.mxu0 0.0
  %3053 = vmatpush1.xpose.msra.mxu0 0.0
  %3054 = vmatprep.subr.mxu0 0.0
  %3055 = vmatpush1.xpose.msra.mxu0 0.0
  %3056 = vmatprep.subr.mxu0 0.0
  %3057 = vmatpush1.xpose.msra.mxu0 0.0
  %3058 = vmatprep.subr.mxu0 0.0
  %3059 = vmatpush1.xpose.msra.mxu0 0.0
  %3060 = vmatprep.subr.mxu0 0.0
  %3061 = vmatpush1.xpose.msra.mxu0 0.0
  %3062 = vmatprep.subr.mxu0 0.0
  %3063 = vmatpush1.xpose.msra.mxu0 0.0
  %3064 = vmatprep.subr.mxu0 0.0
  %3065 = vmatpush1.xpose.msra.mxu0 0.0
  %3066 = vmatprep.subr.mxu0 0.0
  %3067 = vmatpush1.xpose.msra.mxu0 0.0
  %3068 = vmatprep.subr.mxu0 0.0
  %3069 = vmatpush1.xpose.msra.mxu0 0.0
  %3070 = vmatprep.subr.mxu0 0.0
  %3071 = vmatpush1.xpose.msra.mxu0 0.0
  %3072 = vmatprep.subr.mxu0 0.0
  %3073 = vmatpush1.xpose.msra.mxu0 0.0
  %3074 = vmatprep.subr.mxu0 0.0
  %3075 = vmatpush1.xpose.msra.mxu0 0.0
  %3076 = vmatprep.subr.mxu0 0.0
  %3077 = vmatpush1.xpose.msra.mxu0 0.0
  %3078 = vmatprep.subr.mxu0 0.0
  %3079 = vmatpush1.xpose.msra.mxu0 0.0
  %3080 = vmatprep.subr.mxu0 0.0
  %3081 = vmatpush1.xpose.msra.mxu0 0.0
  %3082 = vmatprep.subr.mxu0 0.0
  %3083 = vmatpush1.xpose.msra.mxu0 0.0
  %3084 = vmatprep.subr.mxu0 0.0
  %3085 = vmatpush1.xpose.msra.mxu0 0.0
  %3086 = vmatprep.mubr.f32.mxu0 0.0
  %3087 = vmatmul.mubr.f32.gmra.mrb[0].mxu0 %v3008
  %v3088 = vpop.f32.mrb[0].mxu0
  %v3089 = vadd.f32 %v3006, %v3088
  %v3090 = vpop.f32.mrb[0].mxu0
  %3091 = vdwg.mxu0
  %v3094 = vunpack.c.l.s4 1983009808
  %v3095 = vunpack.c.0.s8 %v3094
  %v3096 = vlaneseq
  %v3097 = vshrl.u32 %v3096, 7
  %v3098 = vsub.s32 %v3095, %v3097
  %v3099 = vrot.slane %v3089, %v3098
  %v3100 = vcombine.high %v3099, %v3099
  %v3103 = vxor.u32 %v3099, 2147483648
  %v3104 = vxor.u32 %v3100, 2147483648
  %v3105 = vmul.f32 %v3103, 1.442695
  %v3106 = vpow.pop %v3105
  %v3107 = vmul.f32 %v3104, 1.442695
  %v3108 = vpow.pop %v3107
  %v3109 = vadd.f32 %v3106, 1.0
  %v3110 = vadd.f32 %v3108, 1.0
  %v3111 = vrcp.pop %v3109
  %v3112 = vmul.f32 1.0, %v3111
  %v3113 = vrcp.pop %v3110
  %v3114 = vmul.f32 1.0, %v3113
  %v3115 = vlaneseq
  %v3116 = vshrl.u32 %v3115, 7
  %v3117 = vsub.s32 7, %v3116
  %v3118 = vrot.slane %v2579, %v3117
  %v3119 = vlaneseq
  %v3120 = vshrl.u32 %v3119, 7
  %v3121 = vsub.s32 7, %v3120
  %v3122 = vrot.slane %v2580, %v3121
  %v3123 = vadd.f32 %v3118, %v3112
  %v3124 = vadd.f32 %v3122, %v3114
  %v3125 = vsel %vm1028, %v3123, 0.0
  %3126 = vadd.xlane.f32.xlu0 %v3125
  %v3127 = vpop.xlane.xlu0 %3126
  %v3128 = vsel %vm1028, %v3124, 0.0
  %3129 = vadd.xlane.f32.xlu0 %v3128
  %v3130 = vpop.xlane.xlu0 %3129
  %v3131 = vmul.f32 %v3127, %v1035
  %v3132 = vmul.f32 %v3130, %v1035
  %v3133 = vsub.f32 %v3123, %v3131
  %v3134 = vsub.f32 %v3124, %v3132
  %v3135 = vmul.f32 %v3133, %v3133
  %v3136 = vmul.f32 %v3134, %v3134
  %v3137 = vsel %vm1028, %v3135, 0.0
  %3138 = vadd.xlane.f32.xlu0 %v3137
  %v3139 = vpop.xlane.xlu0 %3138
  %v3140 = vsel %vm1028, %v3136, 0.0
  %3141 = vadd.xlane.f32.xlu0 %v3140
  %v3142 = vpop.xlane.xlu0 %3141
  %v3143 = vmul.f32 %v3139, %v1035
  %v3144 = vmul.f32 %v3142, %v1035
  %v3145 = vadd.f32 %v3143, 1e-05
  %v3146 = vadd.f32 %v3144, 1e-05
  %v3147 = vrsqrt.pop %v3145
  %v3148 = vrsqrt.pop %v3146
  %v3149 = vmul.f32 %v3133, %v3147
  %v3150 = vmul.f32 %v3134, %v3148
  %v3152 = vlaneseq
  %v3153 = vshrl.u32 %v3152, 7
  %v3154 = vsub.s32 0, %v3153
  %v3155 = vrot.slane %v2607, %v3154
  %v3157 = vmul.f32 %v3149, %v3155
  %v3158 = vmul.f32 %v3150, %v3155
  %v3160 = vlaneseq
  %v3161 = vshrl.u32 %v3160, 7
  %v3162 = vsub.s32 0, %v3161
  %v3163 = vrot.slane %v2608, %v3162
  %v3165 = vadd.f32 %v3157, %v3163
  %v3166 = vadd.f32 %v3158, %v3163
  %v3167 = vmul.f32 %v3165, %v3165
  %v3168 = vmul.f32 %v3166, %v3166
  %v3169 = vsel %vm1028, %v3167, 0.0
  %3170 = vadd.xlane.f32.xlu0 %v3169
  %v3171 = vpop.xlane.xlu0 %3170
  %v3172 = vsel %vm1028, %v3168, 0.0
  %3173 = vadd.xlane.f32.xlu0 %v3172
  %v3174 = vpop.xlane.xlu0 %3173
  %v3175 = vadd.f32 %v3171, 1e-12
  %v3176 = vadd.f32 %v3174, 1e-12
  %v3177 = vrsqrt.pop %v3175
  %v3178 = vrsqrt.pop %v3176
  %v3179 = vmul.f32 %v3165, %v3177
  %v3180 = vmul.f32 %v3166, %v3178
  %v3184 = vunpack.c.l.s4 1983009808
  %v3185 = vunpack.c.0.s8 %v3184
  %v3186 = vlaneseq
  %v3187 = vshrl.u32 %v3186, 7
  %v3188 = vsub.s32 %v3185, %v3187
  %v3189 = vrot.slane %v990, %v3188
  %v3191 = vunpack.c.l.s4 1983009808
  %v3192 = vunpack.c.0.s8 %v3191
  %v3193 = vlaneseq
  %v3194 = vshrl.u32 %v3193, 7
  %v3195 = vsub.s32 %v3192, %v3194
  %v3196 = vrot.slane %v992, %v3195
  %3197 = vrot.lane.b32.xlu0 %v3189, 32
  %v3198 = vpop.permute.xlu0 %3197
  %3199 = vrot.lane.b32.xlu0 %v3196, 32
  %v3200 = vpop.permute.xlu0 %3199
  %3203 = vrot.lane.b32.xlu0 %v713, 64
  %v3204 = vpop.permute.xlu0 %3203
  %3205 = vrot.lane.b32.xlu0 %v714, 64
  %v3206 = vpop.permute.xlu0 %3205
  %v3209 = vsel %vm502, %v1084, %v3198
  %v3210 = vsel %vm502, %v1085, %v3200
  %v3211 = vsel %vm216, %v3209, %v3204
  %v3212 = vsel %vm216, %v3210, %v3206
  %vm3213 = vcmask 982016
  %v3214 = vsel %vm3213, %v3211, 0.0
  %v3215 = vsel %vm3213, %v3212, 0.0
  %v3219 = vunpack.c.l.s4 1983009808
  %v3220 = vunpack.c.0.s8 %v3219
  %v3221 = vlaneseq
  %v3222 = vshrl.u32 %v3221, 7
  %v3223 = vsub.s32 %v3220, %v3222
  %v3224 = vrot.slane %v3112, %v3223
  %v3226 = vunpack.c.l.s4 1983009808
  %v3227 = vunpack.c.0.s8 %v3226
  %v3228 = vlaneseq
  %v3229 = vshrl.u32 %v3228, 7
  %v3230 = vsub.s32 %v3227, %v3229
  %v3231 = vrot.slane %v3114, %v3230
  %3232 = vrot.lane.b32.xlu0 %v3224, 32
  %v3233 = vpop.permute.xlu0 %3232
  %3234 = vrot.lane.b32.xlu0 %v3231, 32
  %v3235 = vpop.permute.xlu0 %3234
  %3238 = vrot.lane.b32.xlu0 %v2835, 64
  %v3239 = vpop.permute.xlu0 %3238
  %3240 = vrot.lane.b32.xlu0 %v2836, 64
  %v3241 = vpop.permute.xlu0 %3240
  %v3244 = vsel %vm502, %v3179, %v3233
  %v3245 = vsel %vm502, %v3180, %v3235
  %v3246 = vsel %vm216, %v3244, %v3239
  %v3247 = vsel %vm216, %v3245, %v3241
  %vm3248 = vcmask 588800
  %v3249 = vsel %vm3248, %v3246, 0.0
  %v3250 = vsel %vm3248, %v3247, 0.0
  %3251 = vst [vmem:[%s23] sm:$0x3] %v3214
  %3252 = vst [vmem:[%s23 + $0x2] sm:$0x3] %v3215
  %s3253 = scalar_lea.vmem %s23, 4
  %3254 = vst [vmem:[%s3253] sm:$0x3] %v3249
  %3255 = vst [vmem:[%s3253 + $0x2] sm:$0x3] %v3250
  // Predicated region
  $region94: #{pvse_forward.1} parent=0 // pred_check
    _
  $region95: #{pvse_forward.1} parent=0 // pred_check_branch
    %3257 = sbr.rel (0) target = $region97
  $region96: #{pvse_forward.1} parent=0 // pred_region
    _
  $region97: #{pvse_forward.1} parent=0 // pred_fallthru
    _
  // Predicated region
  $region98: #{pvse_forward.1} parent=0 // pred_check
    _
  $region99: #{pvse_forward.1} parent=0 // pred_check_branch
    %3259 = sbr.rel (0) target = $region101
  $region100: #{pvse_forward.1} parent=0 // pred_region
    _
  $region101: #{pvse_forward.1} parent=0 // pred_fallthru
    _

</llo_original>
